<compile_context>
chip_gen: v7x
topology: tpu7x:2x2x1
jax: 0.10.0
libtpu: 0.0.40
codegen_flags: <defaults>
</compile_context>

<pallas_src>
import functools
import math

import jax
import jax.numpy as jnp
from jax.experimental import pallas as pl
from jax.experimental.pallas import tpu as pltpu


# ----------------------------------------------------------------------------
# Hardware-aware tiling config
# ----------------------------------------------------------------------------

def _detect_vmem_bytes():
    try:
        info = pltpu.get_tpu_info()
        v = getattr(info, "vmem_capacity_bytes", None)
        if v:
            return int(v)
    except Exception:
        pass
    return 64 * 1024 * 1024          # conservative default (v7x per-TC VMEM)


_VMEM_BYTES = _detect_vmem_bytes()
if _VMEM_BYTES >= 100 * 1024 * 1024:      # v5e / v6e: 128 MiB physical VMEM
    _MM_CFG = dict(tm=512, tn=512, tk=1024, vmem_limit=96 * 1024 * 1024)
else:                                      # v7x: 64 MiB per TensorCore
    _MM_CFG = dict(tm=256, tn=256, tk=512, vmem_limit=44 * 1024 * 1024)


def _pick_tile(dim, target, align=128, prefer=256):
    """Largest tile <= target dividing dim; prefer `prefer`-aligned (MXU 2x256^2),
    fall back to `align`-aligned, else the full dim (small/awkward shapes)."""
    if dim <= target:
        return dim
    for step in (prefer, align):
        if step <= 0:
            continue
        t = (target // step) * step
        while t >= step:
            if dim % t == 0:
                return t
            t -= step
    return dim   # fallback: whole dim (only hit for non-128-divisible dims)


# ----------------------------------------------------------------------------
# Generic fused matmul kernel: [opt pre-LN] -> matmul -> +bias -> [opt GELU]
#                              -> [opt +residual]
# ----------------------------------------------------------------------------

def _gelu_f32(x):
    # tanh-approx GELU
    # TODO(synk): exact-erf GELU would be needed to bit-match a real checkpoint.
    return 0.5 * x * (1.0 + jnp.tanh(0.7978845608028654 * (x + 0.044715 * x * x * x)))


def _build_matmul_kernel(has_ln, has_residual, activation, k_tiles, tk, ln_eps=1e-5):
    def kernel(*refs):
        idx = 0
        x_ref = refs[idx]; idx += 1
        g_ref = bln_ref = None
        if has_ln:
            g_ref, bln_ref = refs[idx], refs[idx + 1]; idx += 2
        w_ref = refs[idx]; idx += 1
        b_ref = refs[idx]; idx += 1
        r_ref = None
        if has_residual:
            r_ref = refs[idx]; idx += 1
        o_ref = refs[idx]; idx += 1
        acc_ref = refs[idx]; idx += 1
        xn_ref = refs[idx] if has_ln else None

        j = pl.program_id(1)
        k_idx = pl.program_id(2)

        @pl.when(k_idx == 0)
        def _():
            acc_ref[...] = jnp.zeros_like(acc_ref)

        if has_ln:
            # LayerNorm of the row block computed ONCE (at j==0, k==0) into a
            # VMEM scratch; reused for every N tile and K tile of this row.
            @pl.when(jnp.logical_and(j == 0, k_idx == 0))
            def _():
                xf = x_ref[...].astype(jnp.float32)
                mu = jnp.mean(xf, axis=-1, keepdims=True)
                var = jnp.mean((xf - mu) ** 2, axis=-1, keepdims=True)
                xn = (xf - mu) * jax.lax.rsqrt(var + ln_eps) * g_ref[...] + bln_ref[...]
                xn_ref[...] = xn.astype(xn_ref.dtype)
            if k_tiles == 1:
                x = xn_ref[...]
            else:
                col = pl.multiple_of(k_idx * tk, 128)
                x = xn_ref[:, pl.ds(col, tk)]
        else:
            x = x_ref[...]

        acc_ref[...] += jnp.dot(x, w_ref[...], preferred_element_type=jnp.float32)

        @pl.when(k_idx == pl.num_programs(2) - 1)
        def _():
            out = acc_ref[...] + b_ref[...]
            if activation == "gelu":
                out = _gelu_f32(out)
            if has_residual:
                out = out + r_ref[...].astype(jnp.float32)
            o_ref[...] = out.astype(o_ref.dtype)

    return kernel


def pallas_linear(x, w, b=None, *, ln=None, activation=None, residual=None,
                  out_dtype=jnp.bfloat16):
    """Fused (LN ->) x @ w + b (-> GELU) (-> + residual).

    x: [M, K] bf16, w: [K, N] bf16, b: [N] f32 or None,
    ln: optional (gamma, beta) over K (pre-LayerNorm fused in),
    residual: optional [M, N] added after bias/activation.
    Tiled (M//tm, N//tn, K//tk) grid, f32 VMEM accumulator.
    """
    M, K = x.shape
    K2, N = w.shape
    assert K == K2
    has_ln = ln is not None
    has_res = residual is not None

    cfg = _MM_CFG
    tm = _pick_tile(M, cfg["tm"], align=8)
    tn = _pick_tile(N, cfg["tn"], align=128)
    tk = _pick_tile(K, cfg["tk"], align=128)
    grid = (M // tm, N // tn, K // tk)
    k_tiles = grid[2]

    if b is None:
        b = jnp.zeros((N,), jnp.float32)
    b2 = b.reshape(1, N).astype(jnp.float32)

    inputs, in_specs = [], []
    if has_ln:
        # full-K row block so LayerNorm sees the whole row (cached in scratch)
        in_specs.append(pl.BlockSpec((tm, K), lambda i, j, k: (i, 0)))
    else:
        in_specs.append(pl.BlockSpec((tm, tk), lambda i, j, k: (i, k)))
    inputs.append(x)
    if has_ln:
        g, be = ln
        in_specs += [pl.BlockSpec((1, K), lambda i, j, k: (0, 0)),
                     pl.BlockSpec((1, K), lambda i, j, k: (0, 0))]
        inputs += [g.reshape(1, K).astype(jnp.float32),
                   be.reshape(1, K).astype(jnp.float32)]
    in_specs += [pl.BlockSpec((tk, tn), lambda i, j, k: (k, j)),
                 pl.BlockSpec((1, tn), lambda i, j, k: (0, j))]
    inputs += [w, b2]
    if has_res:
        in_specs.append(pl.BlockSpec((tm, tn), lambda i, j, k: (i, j)))
        inputs.append(residual)

    scratch = [pltpu.VMEM((tm, tn), jnp.float32)]
    if has_ln:
        scratch.append(pltpu.VMEM((tm, K), jnp.bfloat16))

    # When the LN scratch is cached across N tiles, only the row axis may be
    # sharded across cores (j==0 must run first per row on each core).
    dims = (("parallel", "arbitrary", "arbitrary") if has_ln
            else ("parallel", "parallel", "arbitrary"))

    kernel = _build_matmul_kernel(has_ln, has_res, activation, k_tiles, tk)
    return pl.pallas_call(
        kernel,
        out_shape=jax.ShapeDtypeStruct((M, N), out_dtype),
        grid=grid,
        in_specs=in_specs,
        out_specs=pl.BlockSpec((tm, tn), lambda i, j, k: (i, j)),
        scratch_shapes=scratch,
        compiler_params=pltpu.CompilerParams(
            dimension_semantics=dims,
            vmem_limit_bytes=cfg["vmem_limit"]),
    )(*inputs)


# ----------------------------------------------------------------------------
# Attention: q-tiled grid (B, T//tq); bf16 MXU matmuls; fused QKV input;
#            per-head contexts written into a VMEM f32 slab, one dense store.
# ----------------------------------------------------------------------------

def _attention_kernel(q_ref, k_ref, v_ref, o_ref, ctx_ref, *, n_heads, scale):
    # q block: [1, tq, D]; k/v blocks: [1, T, D]  (all bf16, views of fused qkv)
    q = q_ref[0] * scale            # scale folded into q (cheap bf16 multiply)
    k = k_ref[0]
    v = v_ref[0]
    dh = q.shape[-1] // n_heads
    # TODO(synk): flash-style KV tiling (online softmax) for long sequences.
    for h in range(n_heads):
        sl = slice(h * dh, (h + 1) * dh)
        s = jnp.dot(q[:, sl], k[:, sl].T, preferred_element_type=jnp.float32)
        s = s - jnp.max(s, axis=-1, keepdims=True)
        p = jnp.exp(s)
        p = p * pl.reciprocal(jnp.sum(p, axis=-1, keepdims=True), approx=True)
        ctx_ref[:, sl] = jnp.dot(p.astype(v.dtype), v[:, sl],
                                 preferred_element_type=jnp.float32)
    # single lane-dense store of all heads
    o_ref[0] = ctx_ref[...].astype(o_ref.dtype)


def pallas_attention_qkv(qkv, n_heads):
    """qkv: [B, T, 3D] bf16 (fused projection) -> context [B, T, D] bf16."""
    B, T, D3 = qkv.shape
    D = D3 // 3
    dh = D // n_heads
    scale = 1.0 / math.sqrt(dh)
    tq = _pick_tile(T, 256, align=8)
    grid = (B, T // tq)
    q_spec = pl.BlockSpec((1, tq, D), lambda b, qi: (b, qi, 0))
    k_spec = pl.BlockSpec((1, T, D), lambda b, qi: (b, 0, 1))
    v_spec = pl.BlockSpec((1, T, D), lambda b, qi: (b, 0, 2))
    return pl.pallas_call(
        functools.partial(_attention_kernel, n_heads=n_heads, scale=scale),
        out_shape=jax.ShapeDtypeStruct((B, T, D), qkv.dtype),
        grid=grid,
        in_specs=[q_spec, k_spec, v_spec],
        out_specs=pl.BlockSpec((1, tq, D), lambda b, qi: (b, qi, 0)),
        scratch_shapes=[pltpu.VMEM((tq, D), jnp.float32)],
        compiler_params=pltpu.CompilerParams(
            dimension_semantics=("parallel", "parallel"),
            vmem_limit_bytes=_MM_CFG["vmem_limit"]),
    )(qkv, qkv, qkv)


# ----------------------------------------------------------------------------
# Spin tail: L2 normalize(dim=1 over time) -> codebook linear
#            -> temperature softmax(dim=1)   (tiled over codebook columns)
# ----------------------------------------------------------------------------

def _spin_tail_kernel(h_ref, cw_ref, c_ref, s_ref, *, inv_temp, eps):
    # h block: [1, T, S] (spin.head output); cw block: [S, tc]
    h = h_ref[0].astype(jnp.float32)                               # [T, S]
    # F.normalize(x, p=2, dim=1): dim=1 of [B,T,S] is the TIME axis -> axis 0
    # TODO(synk): some Spin variants flatten to [B*T, S] (feature-dim norm);
    # this follows the reference forward literally (3D tensor, dim=1).
    norm = jnp.sqrt(jnp.sum(h * h, axis=0, keepdims=True))
    hn = h / jnp.maximum(norm, eps)                                # exact divide
    c = jnp.dot(hn.astype(cw_ref.dtype), cw_ref[...],
                preferred_element_type=jnp.float32)
    c_ref[0] = c.astype(c_ref.dtype)
    # F.softmax(x / temperature, dim=1)  (time axis), exact divide
    s = c * inv_temp
    s = s - jnp.max(s, axis=0, keepdims=True)
    p = jnp.exp(s)
    s_ref[0] = (p / jnp.sum(p, axis=0, keepdims=True)).astype(s_ref.dtype)


def pallas_spin_codebook(head_out, code_w, temperature, eps=1e-12):
    """head_out: [B, T, S] -> (codebook logits [B,T,C] bf16, softmax [B,T,C] f32)."""
    B, T, S = head_out.shape
    S2, C = code_w.shape
    assert S == S2
    tc = _pick_tile(C, 256, align=128)
    grid = (B, C // tc)
    return pl.pallas_call(
        functools.partial(_spin_tail_kernel, inv_temp=1.0 / temperature, eps=eps),
        out_shape=(jax.ShapeDtypeStruct((B, T, C), jnp.bfloat16),
                   jax.ShapeDtypeStruct((B, T, C), jnp.float32)),
        grid=grid,
        in_specs=[pl.BlockSpec((1, T, S), lambda b, cj: (b, 0, 0)),
                  pl.BlockSpec((S, tc), lambda b, cj: (0, cj))],
        out_specs=(pl.BlockSpec((1, T, tc), lambda b, cj: (b, 0, cj)),
                   pl.BlockSpec((1, T, tc), lambda b, cj: (b, 0, cj))),
        compiler_params=pltpu.CompilerParams(
            dimension_semantics=("parallel", "parallel"),
            vmem_limit_bytes=_MM_CFG["vmem_limit"]),
    )(head_out, code_w)


# ----------------------------------------------------------------------------
# Glue: surrogate backbone + Spin head built from the Pallas kernels above
# ----------------------------------------------------------------------------

def _unfold_time(x, k, s):
    """x: [B, T, C] -> patches [B, n, k*C]; free reshape when kernel==stride."""
    B, T, C = x.shape
    n = (T - k) // s + 1
    if k == s and T % k == 0:
        return x.reshape(B, n, k * C)
    # TODO(synk): overlapping conv unfold still materializes patches via gather.
    idx = jnp.arange(n)[:, None] * s + jnp.arange(k)[None, :]
    return x[:, idx, :].reshape(B, n, k * C)


def init_params(key, cfg):
    def lin(k, fan_in, fan_out, bias=True):
        kw, kb = jax.random.split(k)
        w = (jax.random.normal(kw, (fan_in, fan_out), jnp.float32)
             / math.sqrt(fan_in)).astype(jnp.bfloat16)
        b = (jax.random.normal(kb, (fan_out,), jnp.float32) * 0.01) if bias else None
        return {"w": w, "b": b}

    keys = jax.random.split(key, 32)
    D = cfg["dim"]
    p = {
        "conv1": lin(keys[0], cfg["conv1_k"] * 1, cfg["conv1_c"]),
        "conv2": lin(keys[1], cfg["conv2_k"] * cfg["conv1_c"], cfg["conv2_c"]),
        "feat_ln": {"g": jnp.ones((cfg["conv2_c"],), jnp.float32),
                    "b": jnp.zeros((cfg["conv2_c"],), jnp.float32)},
        "feat_proj": lin(keys[2], cfg["conv2_c"], D),
        "layers": [],
        "spin_head": lin(keys[3], D, cfg["spin_dim"]),
        "spin_codebook": lin(keys[4], cfg["spin_dim"], cfg["n_codes"], bias=False),
    }
    for li in range(cfg["n_layers"]):
        ks = jax.random.split(keys[8 + li], 8)
        p["layers"].append({
            "ln1": {"g": jnp.ones((D,), jnp.float32), "b": jnp.zeros((D,), jnp.float32)},
            "qkv": lin(ks[0], D, 3 * D),             # fused Q/K/V weight [D, 3D]
            "o": lin(ks[1], D, D),
            "ln2": {"g": jnp.ones((D,), jnp.float32), "b": jnp.zeros((D,), jnp.float32)},
            "ff1": lin(ks[2], D, cfg["ffn"]), "ff2": lin(ks[3], cfg["ffn"], D),
        })
    return p


def backbone_extract_features(params, cfg, x):
    """Surrogate for HUBERT_BASE.get_model().extract_features(x)[0].

    x: [B, T_wav] waveform -> list of per-transformer-layer outputs [B, T, D].
    """
    # TODO(synk): pretrained HuBERT-BASE weights / full 12-layer stack not
    # reproducible in-script; this is a small deterministic surrogate.
    B, Twav = x.shape
    h = x.astype(jnp.bfloat16)[:, :, None]                         # [B, Twav, 1]

    # conv frontend (NCW conv as reshape-unfold + fused matmul+bias+GELU)
    patches = _unfold_time(h, cfg["conv1_k"], cfg["conv1_s"])      # [B, n1, k1]
    _, n1, K1 = patches.shape
    h = pallas_linear(patches.reshape(B * n1, K1),
                      params["conv1"]["w"], params["conv1"]["b"], activation="gelu")
    h = h.reshape(B, n1, cfg["conv1_c"])

    patches = _unfold_time(h, cfg["conv2_k"], cfg["conv2_s"])      # [B, n2, k2*C1]
    _, n2, K2 = patches.shape
    h = pallas_linear(patches.reshape(B * n2, K2),
                      params["conv2"]["w"], params["conv2"]["b"], activation="gelu")

    # feature projection: fused LayerNorm + Linear
    h = pallas_linear(h, params["feat_proj"]["w"], params["feat_proj"]["b"],
                      ln=(params["feat_ln"]["g"], params["feat_ln"]["b"]))

    T, D, H = n2, cfg["dim"], cfg["heads"]
    layer_outs = []
    for lp in params["layers"]:
        # --- self attention (pre-LN); LN + fused QKV in one matmul call ---
        qkv = pallas_linear(h, lp["qkv"]["w"], lp["qkv"]["b"],
                            ln=(lp["ln1"]["g"], lp["ln1"]["b"]))   # [B*T, 3D]
        ctx = pallas_attention_qkv(qkv.reshape(B, T, 3 * D), H).reshape(B * T, D)
        # output projection + residual add fused
        h = pallas_linear(ctx, lp["o"]["w"], lp["o"]["b"], residual=h)
        # --- feed forward: LN + FF1 + GELU fused, then FF2 + residual fused ---
        ff = pallas_linear(h, lp["ff1"]["w"], lp["ff1"]["b"],
                           ln=(lp["ln2"]["g"], lp["ln2"]["b"]), activation="gelu")
        h = pallas_linear(ff, lp["ff2"]["w"], lp["ff2"]["b"], residual=h)
        layer_outs.append(h.reshape(B, T, D))
    return layer_outs


def feature_extractor_forward(params, cfg, x):
    """Mirror of FeatureExtractor.forward: returns list of 5 tensors."""
    if x.ndim != 2:
        raise ValueError("Input should be 2D")
    features = []
    y = backbone_extract_features(params, cfg, x)                  # list of [B, T, D]
    features += y[-2:]

    # TODO(synk): exact Spin head/codebook architecture not specified upstream;
    # modeled as Linear head + bias-free Linear codebook.
    B, T, D = y[-1].shape
    head_out = pallas_linear(y[-1].reshape(B * T, D),
                             params["spin_head"]["w"], params["spin_head"]["b"])
    head_out = head_out.reshape(B, T, cfg["spin_dim"])
    features.append(head_out)                                      # spin.head(y[-1])

    code_out, soft_out = pallas_spin_codebook(
        head_out, params["spin_codebook"]["w"], cfg["temperature"])
    features += [code_out, soft_out]
    return features


# ----------------------------------------------------------------------------
if __name__ == "__main__":
    # channel dims chosen as multiples of 128 for lane-dense blocks
    cfg = dict(
        conv1_k=4, conv1_s=4, conv1_c=128,
        conv2_k=2, conv2_s=2, conv2_c=128,
        dim=128, heads=2, ffn=256, n_layers=2,
        spin_dim=128, n_codes=128, temperature=0.1,
    )
    key = jax.random.PRNGKey(0)
    kp, kx = jax.random.split(key)
    params = init_params(kp, cfg)
    x = jax.random.normal(kx, (2, 64), jnp.float32)    # [B, T_wav] raw waveform

    fwd = jax.jit(lambda p, inp: feature_extractor_forward(p, cfg, inp))
    feats = fwd(params, x)
    feats = jax.block_until_ready(feats)

    B, T, D = 2, 8, cfg["dim"]
    assert len(feats) == 5
    assert feats[0].shape == (B, T, D) and feats[1].shape == (B, T, D)
    assert feats[2].shape == (B, T, cfg["spin_dim"])
    assert feats[3].shape == (B, T, cfg["n_codes"])
    assert feats[4].shape == (B, T, cfg["n_codes"])
    for f in feats:
        assert bool(jnp.all(jnp.isfinite(f.astype(jnp.float32))))
    # final softmax (dim=1 == time) must sum to ~1 (exact divide used)
    sums = jnp.sum(feats[4], axis=1)
    assert bool(jnp.all(jnp.abs(sums - 1.0) < 1e-3))
    print("KERNEL_OK")
</pallas_src>

<mosaic_0001>
module attributes {stable_mosaic.version = 11 : i64} {
  func.func @kernel(%arg0: i32, %arg1: i32, %arg2: i32, %arg3: memref<32x4xbf16, #tpu.memory_space<vmem>>, %arg4: memref<4x128xbf16, #tpu.memory_space<vmem>>, %arg5: memref<1x128xf32, #tpu.memory_space<vmem>>, %arg6: memref<32x128xbf16, #tpu.memory_space<vmem>>, %arg7: memref<32x128xf32, #tpu.memory_space<vmem>>) attributes {dimension_semantics = [#tpu.dimension_semantics<parallel>, #tpu.dimension_semantics<parallel>, #tpu.dimension_semantics<arbitrary>], iteration_bounds = array<i64: 1, 1, 1>, scalar_prefetch = 0 : i64, scratch_operands = 1 : i64, tpu.core_type = #tpu.core_type<tc>, window_params = [{transform_indices = @transform_0, window_bounds = array<i64: 32, 4>}, {transform_indices = @transform_1, window_bounds = array<i64: 4, 128>}, {transform_indices = @transform_2, window_bounds = array<i64: 1, 128>}, {transform_indices = @transform_3, window_bounds = array<i64: 32, 128>}]} {
    %c0_i32 = arith.constant 0 : i32
    %0 = arith.cmpi eq, %arg2, %c0_i32 : i32
    %1 = arith.extui %0 : i1 to i32
    %c0_i32_0 = arith.constant 0 : i32
    %2 = arith.cmpi ne, %1, %c0_i32_0 : i32
    scf.if %2 {
      %cst_10 = arith.constant 0.000000e+00 : f32
      %12 = vector.broadcast %cst_10 : f32 to vector<32x128xf32>
      %c0_11 = arith.constant 0 : index
      %c0_12 = arith.constant 0 : index
      %13 = vector.load %arg7[%c0_11, %c0_12] : memref<32x128xf32, #tpu.memory_space<vmem>>, vector<32x128xf32>
      tpu.vector_store %arg7[%c0_11, %c0_12], %12 {strides = array<i32>} : memref<32x128xf32, #tpu.memory_space<vmem>>, vector<32x128xf32>,
    } else {
    }
    %c0 = arith.constant 0 : index
    %c0_1 = arith.constant 0 : index
    %3 = vector.load %arg3[%c0, %c0_1] : memref<32x4xbf16, #tpu.memory_space<vmem>>, vector<32x4xbf16>
    %c0_2 = arith.constant 0 : index
    %c0_3 = arith.constant 0 : index
    %4 = vector.load %arg7[%c0_2, %c0_3] : memref<32x128xf32, #tpu.memory_space<vmem>>, vector<32x128xf32>
    %c0_4 = arith.constant 0 : index
    %c0_5 = arith.constant 0 : index
    %5 = vector.load %arg4[%c0_4, %c0_5] : memref<4x128xbf16, #tpu.memory_space<vmem>>, vector<4x128xbf16>
    %cst = arith.constant dense<0.000000e+00> : vector<32x128xf32>
    %6 = tpu.matmul %3, %5, %cst {dimension_numbers = #tpu.dot_dimension_numbers<[1], [0], [0], [1], [0, 0, 1, 1], [], []>} : vector<32x4xbf16>, vector<4x128xbf16>, vector<32x128xf32> -> vector<32x128xf32>
    %7 = arith.addf %4, %6 : vector<32x128xf32>
    %c0_6 = arith.constant 0 : index
    %c0_7 = arith.constant 0 : index
    %8 = vector.load %arg7[%c0_6, %c0_7] : memref<32x128xf32, #tpu.memory_space<vmem>>, vector<32x128xf32>
    tpu.vector_store %arg7[%c0_6, %c0_7], %7 {strides = array<i32>} : memref<32x128xf32, #tpu.memory_space<vmem>>, vector<32x128xf32>,
    %c0_i32_8 = arith.constant 0 : i32
    %9 = arith.cmpi eq, %arg2, %c0_i32_8 : i32
    %10 = arith.extui %9 : i1 to i32
    %c0_i32_9 = arith.constant 0 : i32
    %11 = arith.cmpi ne, %10, %c0_i32_9 : i32
    scf.if %11 {
      %c0_10 = arith.constant 0 : index
      %c0_11 = arith.constant 0 : index
      %12 = vector.load %arg7[%c0_10, %c0_11] : memref<32x128xf32, #tpu.memory_space<vmem>>, vector<32x128xf32>
      %c0_12 = arith.constant 0 : index
      %c0_13 = arith.constant 0 : index
      %13 = vector.load %arg5[%c0_12, %c0_13] : memref<1x128xf32, #tpu.memory_space<vmem>>, vector<1x128xf32>
      %14 = vector.broadcast %13 : vector<1x128xf32> to vector<32x128xf32>
      %15 = arith.addf %12, %14 : vector<32x128xf32>
      %cst_14 = arith.constant 5.000000e-01 : f32
      %16 = vector.broadcast %cst_14 : f32 to vector<32x128xf32>
      %17 = arith.mulf %16, %15 : vector<32x128xf32>
      %cst_15 = arith.constant 4.471500e-02 : f32
      %18 = vector.broadcast %cst_15 : f32 to vector<32x128xf32>
      %19 = arith.mulf %18, %15 : vector<32x128xf32>
      %20 = arith.mulf %19, %15 : vector<32x128xf32>
      %21 = arith.mulf %20, %15 : vector<32x128xf32>
      %22 = arith.addf %15, %21 : vector<32x128xf32>
      %cst_16 = arith.constant 0.797884583 : f32
      %23 = vector.broadcast %cst_16 : f32 to vector<32x128xf32>
      %24 = arith.mulf %23, %22 : vector<32x128xf32>
      %25 = math.tanh %24 : vector<32x128xf32>
      %cst_17 = arith.constant 1.000000e+00 : f32
      %26 = vector.broadcast %cst_17 : f32 to vector<32x128xf32>
      %27 = arith.addf %26, %25 : vector<32x128xf32>
      %28 = arith.mulf %17, %27 : vector<32x128xf32>
      %29 = arith.truncf %28 : vector<32x128xf32> to vector<32x128xbf16>
      %c0_18 = arith.constant 0 : index
      %c0_19 = arith.constant 0 : index
      %30 = vector.load %arg6[%c0_18, %c0_19] : memref<32x128xbf16, #tpu.memory_space<vmem>>, vector<32x128xbf16>
      tpu.vector_store %arg6[%c0_18, %c0_19], %29 {strides = array<i32>} : memref<32x128xbf16, #tpu.memory_space<vmem>>, vector<32x128xbf16>,
    } else {
    }
    return
  }
  func.func @transform_0(%arg0: i32, %arg1: i32, %arg2: i32) -> (i32, i32) {
    %c0_i32 = arith.constant 0 : i32
    return %arg0, %arg2 : i32, i32
  }
  func.func @transform_1(%arg0: i32, %arg1: i32, %arg2: i32) -> (i32, i32) {
    %c0_i32 = arith.constant 0 : i32
    return %arg2, %arg1 : i32, i32
  }
  func.func @transform_2(%arg0: i32, %arg1: i32, %arg2: i32) -> (i32, i32) {
    %c0_i32 = arith.constant 0 : i32
    %c0_i32_0 = arith.constant 0 : i32
    return %c0_i32, %arg1 : i32, i32
  }
  func.func @transform_3(%arg0: i32, %arg1: i32, %arg2: i32) -> (i32, i32) {
    %c0_i32 = arith.constant 0 : i32
    return %arg0, %arg1 : i32, i32
  }
}

module attributes {stable_mosaic.version = 11 : i64} {
  func.func @kernel(%arg0: i32, %arg1: i32, %arg2: i32, %arg3: memref<16x128xbf16, #tpu.memory_space<vmem>>, %arg4: memref<1x128xf32, #tpu.memory_space<vmem>>, %arg5: memref<1x128xf32, #tpu.memory_space<vmem>>, %arg6: memref<128x128xbf16, #tpu.memory_space<vmem>>, %arg7: memref<1x128xf32, #tpu.memory_space<vmem>>, %arg8: memref<16x128xbf16, #tpu.memory_space<vmem>>, %arg9: memref<16x128xf32, #tpu.memory_space<vmem>>, %arg10: memref<16x128xbf16, #tpu.memory_space<vmem>>) attributes {dimension_semantics = [#tpu.dimension_semantics<parallel>, #tpu.dimension_semantics<arbitrary>, #tpu.dimension_semantics<arbitrary>], iteration_bounds = array<i64: 1, 1, 1>, scalar_prefetch = 0 : i64, scratch_operands = 2 : i64, tpu.core_type = #tpu.core_type<tc>, window_params = [{transform_indices = @transform_0, window_bounds = array<i64: 16, 128>}, {pipeline_mode = #tpu.pipeline_mode<synchronous>, transform_indices = @transform_1, window_bounds = array<i64: 1, 128>}, {pipeline_mode = #tpu.pipeline_mode<synchronous>, transform_indices = @transform_2, window_bounds = array<i64: 1, 128>}, {transform_indices = @transform_3, window_bounds = array<i64: 128, 128>}, {transform_indices = @transform_4, window_bounds = array<i64: 1, 128>}, {transform_indices = @transform_5, window_bounds = array<i64: 16, 128>}]} {
    %c0_i32 = arith.constant 0 : i32
    %0 = arith.cmpi eq, %arg2, %c0_i32 : i32
    %1 = arith.extui %0 : i1 to i32
    %c0_i32_0 = arith.constant 0 : i32
    %2 = arith.cmpi ne, %1, %c0_i32_0 : i32
    scf.if %2 {
      %cst_13 = arith.constant 0.000000e+00 : f32
      %17 = vector.broadcast %cst_13 : f32 to vector<16x128xf32>
      %c0_14 = arith.constant 0 : index
      %c0_15 = arith.constant 0 : index
      %18 = vector.load %arg9[%c0_14, %c0_15] : memref<16x128xf32, #tpu.memory_space<vmem>>, vector<16x128xf32>
      tpu.vector_store %arg9[%c0_14, %c0_15], %17 {strides = array<i32>} : memref<16x128xf32, #tpu.memory_space<vmem>>, vector<16x128xf32>,
    } else {
    }
    %c0_i32_1 = arith.constant 0 : i32
    %3 = arith.cmpi eq, %arg1, %c0_i32_1 : i32
    %c0_i32_2 = arith.constant 0 : i32
    %4 = arith.cmpi eq, %arg2, %c0_i32_2 : i32
    %5 = arith.andi %3, %4 : i1
    %6 = arith.extui %5 : i1 to i32
    %c0_i32_3 = arith.constant 0 : i32
    %7 = arith.cmpi ne, %6, %c0_i32_3 : i32
    scf.if %7 {
      %c0_13 = arith.constant 0 : index
      %c0_14 = arith.constant 0 : index
      %17 = vector.load %arg3[%c0_13, %c0_14] : memref<16x128xbf16, #tpu.memory_space<vmem>>, vector<16x128xbf16>
      %18 = arith.extf %17 : vector<16x128xbf16> to vector<16x128xf32>
      %cst_15 = arith.constant dense<0.000000e+00> : vector<16xf32>
      %19 = vector.multi_reduction <add>, %18, %cst_15 [1] : vector<16x128xf32> to vector<16xf32>
      %20 = vector.shape_cast %19 : vector<16xf32> to vector<16x1xf32>
      %cst_16 = arith.constant 1.280000e+02 : f32
      %21 = vector.broadcast %cst_16 : f32 to vector<16x1xf32>
      %22 = arith.divf %20, %21 : vector<16x1xf32>
      %23 = vector.broadcast %22 : vector<16x1xf32> to vector<16x128xf32>
      %24 = arith.subf %18, %23 : vector<16x128xf32>
      %25 = arith.mulf %24, %24 : vector<16x128xf32>
      %cst_17 = arith.constant dense<0.000000e+00> : vector<16xf32>
      %26 = vector.multi_reduction <add>, %25, %cst_17 [1] : vector<16x128xf32> to vector<16xf32>
      %27 = vector.shape_cast %26 : vector<16xf32> to vector<16x1xf32>
      %cst_18 = arith.constant 1.280000e+02 : f32
      %28 = vector.broadcast %cst_18 : f32 to vector<16x1xf32>
      %29 = arith.divf %27, %28 : vector<16x1xf32>
      %30 = vector.broadcast %22 : vector<16x1xf32> to vector<16x128xf32>
      %31 = arith.subf %18, %30 : vector<16x128xf32>
      %cst_19 = arith.constant 9.99999974E-6 : f32
      %32 = vector.broadcast %cst_19 : f32 to vector<16x1xf32>
      %33 = arith.addf %29, %32 : vector<16x1xf32>
      %34 = math.rsqrt %33 : vector<16x1xf32>
      %35 = vector.broadcast %34 : vector<16x1xf32> to vector<16x128xf32>
      %36 = arith.mulf %31, %35 : vector<16x128xf32>
      %c0_20 = arith.constant 0 : index
      %c0_21 = arith.constant 0 : index
      %37 = vector.load %arg4[%c0_20, %c0_21] : memref<1x128xf32, #tpu.memory_space<vmem>>, vector<1x128xf32>
      %38 = vector.broadcast %37 : vector<1x128xf32> to vector<16x128xf32>
      %39 = arith.mulf %36, %38 : vector<16x128xf32>
      %c0_22 = arith.constant 0 : index
      %c0_23 = arith.constant 0 : index
      %40 = vector.load %arg5[%c0_22, %c0_23] : memref<1x128xf32, #tpu.memory_space<vmem>>, vector<1x128xf32>
      %41 = vector.broadcast %40 : vector<1x128xf32> to vector<16x128xf32>
      %42 = arith.addf %39, %41 : vector<16x128xf32>
      %43 = arith.truncf %42 : vector<16x128xf32> to vector<16x128xbf16>
      %c0_24 = arith.constant 0 : index
      %c0_25 = arith.constant 0 : index
      %44 = vector.load %arg10[%c0_24, %c0_25] : memref<16x128xbf16, #tpu.memory_space<vmem>>, vector<16x128xbf16>
      tpu.vector_store %arg10[%c0_24, %c0_25], %43 {strides = array<i32>} : memref<16x128xbf16, #tpu.memory_space<vmem>>, vector<16x128xbf16>,
    } else {
    }
    %c0 = arith.constant 0 : index
    %c0_4 = arith.constant 0 : index
    %8 = vector.load %arg10[%c0, %c0_4] : memref<16x128xbf16, #tpu.memory_space<vmem>>, vector<16x128xbf16>
    %c0_5 = arith.constant 0 : index
    %c0_6 = arith.constant 0 : index
    %9 = vector.load %arg9[%c0_5, %c0_6] : memref<16x128xf32, #tpu.memory_space<vmem>>, vector<16x128xf32>
    %c0_7 = arith.constant 0 : index
    %c0_8 = arith.constant 0 : index
    %10 = vector.load %arg6[%c0_7, %c0_8] : memref<128x128xbf16, #tpu.memory_space<vmem>>, vector<128x128xbf16>
    %cst = arith.constant dense<0.000000e+00> : vector<16x128xf32>
    %11 = tpu.matmul %8, %10, %cst {dimension_numbers = #tpu.dot_dimension_numbers<[1], [0], [0], [1], [0, 0, 1, 1], [], []>} : vector<16x128xbf16>, vector<128x128xbf16>, vector<16x128xf32> -> vector<16x128xf32>
    %12 = arith.addf %9, %11 : vector<16x128xf32>
    %c0_9 = arith.constant 0 : index
    %c0_10 = arith.constant 0 : index
    %13 = vector.load %arg9[%c0_9, %c0_10] : memref<16x128xf32, #tpu.memory_space<vmem>>, vector<16x128xf32>
    tpu.vector_store %arg9[%c0_9, %c0_10], %12 {strides = array<i32>} : memref<16x128xf32, #tpu.memory_space<vmem>>, vector<16x128xf32>,
    %c0_i32_11 = arith.constant 0 : i32
    %14 = arith.cmpi eq, %arg2, %c0_i32_11 : i32
    %15 = arith.extui %14 : i1 to i32
    %c0_i32_12 = arith.constant 0 : i32
    %16 = arith.cmpi ne, %15, %c0_i32_12 : i32
    scf.if %16 {
      %c0_13 = arith.constant 0 : index
      %c0_14 = arith.constant 0 : index
      %17 = vector.load %arg9[%c0_13, %c0_14] : memref<16x128xf32, #tpu.memory_space<vmem>>, vector<16x128xf32>
      %c0_15 = arith.constant 0 : index
      %c0_16 = arith.constant 0 : index
      %18 = vector.load %arg7[%c0_15, %c0_16] : memref<1x128xf32, #tpu.memory_space<vmem>>, vector<1x128xf32>
      %19 = vector.broadcast %18 : vector<1x128xf32> to vector<16x128xf32>
      %20 = arith.addf %17, %19 : vector<16x128xf32>
      %21 = arith.truncf %20 : vector<16x128xf32> to vector<16x128xbf16>
      %c0_17 = arith.constant 0 : index
      %c0_18 = arith.constant 0 : index
      %22 = vector.load %arg8[%c0_17, %c0_18] : memref<16x128xbf16, #tpu.memory_space<vmem>>, vector<16x128xbf16>
      tpu.vector_store %arg8[%c0_17, %c0_18], %21 {strides = array<i32>} : memref<16x128xbf16, #tpu.memory_space<vmem>>, vector<16x128xbf16>,
    } else {
    }
    return
  }
  func.func @transform_0(%arg0: i32, %arg1: i32, %arg2: i32) -> (i32, i32) {
    %c0_i32 = arith.constant 0 : i32
    %c0_i32_0 = arith.constant 0 : i32
    return %arg0, %c0_i32 : i32, i32
  }
  func.func @transform_1(%arg0: i32, %arg1: i32, %arg2: i32) -> (i32, i32) {
    %c0_i32 = arith.constant 0 : i32
    %c0_i32_0 = arith.constant 0 : i32
    %c0_i32_1 = arith.constant 0 : i32
    return %c0_i32, %c0_i32_0 : i32, i32
  }
  func.func @transform_2(%arg0: i32, %arg1: i32, %arg2: i32) -> (i32, i32) {
    %c0_i32 = arith.constant 0 : i32
    %c0_i32_0 = arith.constant 0 : i32
    %c0_i32_1 = arith.constant 0 : i32
    return %c0_i32, %c0_i32_0 : i32, i32
  }
  func.func @transform_3(%arg0: i32, %arg1: i32, %arg2: i32) -> (i32, i32) {
    %c0_i32 = arith.constant 0 : i32
    return %arg2, %arg1 : i32, i32
  }
  func.func @transform_4(%arg0: i32, %arg1: i32, %arg2: i32) -> (i32, i32) {
    %c0_i32 = arith.constant 0 : i32
    %c0_i32_0 = arith.constant 0 : i32
    return %c0_i32, %arg1 : i32, i32
  }
  func.func @transform_5(%arg0: i32, %arg1: i32, %arg2: i32) -> (i32, i32) {
    %c0_i32 = arith.constant 0 : i32
    return %arg0, %arg1 : i32, i32
  }
}

module attributes {stable_mosaic.version = 11 : i64} {
  func.func @kernel(%arg0: i32, %arg1: i32, %arg2: i32, %arg3: memref<16x256xbf16, #tpu.memory_space<vmem>>, %arg4: memref<256x128xbf16, #tpu.memory_space<vmem>>, %arg5: memref<1x128xf32, #tpu.memory_space<vmem>>, %arg6: memref<16x128xbf16, #tpu.memory_space<vmem>>, %arg7: memref<16x128xf32, #tpu.memory_space<vmem>>) attributes {dimension_semantics = [#tpu.dimension_semantics<parallel>, #tpu.dimension_semantics<parallel>, #tpu.dimension_semantics<arbitrary>], iteration_bounds = array<i64: 1, 1, 1>, scalar_prefetch = 0 : i64, scratch_operands = 1 : i64, tpu.core_type = #tpu.core_type<tc>, window_params = [{transform_indices = @transform_0, window_bounds = array<i64: 16, 256>}, {transform_indices = @transform_1, window_bounds = array<i64: 256, 128>}, {transform_indices = @transform_2, window_bounds = array<i64: 1, 128>}, {transform_indices = @transform_3, window_bounds = array<i64: 16, 128>}]} {
    %c0_i32 = arith.constant 0 : i32
    %0 = arith.cmpi eq, %arg2, %c0_i32 : i32
    %1 = arith.extui %0 : i1 to i32
    %c0_i32_0 = arith.constant 0 : i32
    %2 = arith.cmpi ne, %1, %c0_i32_0 : i32
    scf.if %2 {
      %cst_10 = arith.constant 0.000000e+00 : f32
      %12 = vector.broadcast %cst_10 : f32 to vector<16x128xf32>
      %c0_11 = arith.constant 0 : index
      %c0_12 = arith.constant 0 : index
      %13 = vector.load %arg7[%c0_11, %c0_12] : memref<16x128xf32, #tpu.memory_space<vmem>>, vector<16x128xf32>
      tpu.vector_store %arg7[%c0_11, %c0_12], %12 {strides = array<i32>} : memref<16x128xf32, #tpu.memory_space<vmem>>, vector<16x128xf32>,
    } else {
    }
    %c0 = arith.constant 0 : index
    %c0_1 = arith.constant 0 : index
    %3 = vector.load %arg3[%c0, %c0_1] : memref<16x256xbf16, #tpu.memory_space<vmem>>, vector<16x256xbf16>
    %c0_2 = arith.constant 0 : index
    %c0_3 = arith.constant 0 : index
    %4 = vector.load %arg7[%c0_2, %c0_3] : memref<16x128xf32, #tpu.memory_space<vmem>>, vector<16x128xf32>
    %c0_4 = arith.constant 0 : index
    %c0_5 = arith.constant 0 : index
    %5 = vector.load %arg4[%c0_4, %c0_5] : memref<256x128xbf16, #tpu.memory_space<vmem>>, vector<256x128xbf16>
    %cst = arith.constant dense<0.000000e+00> : vector<16x128xf32>
    %6 = tpu.matmul %3, %5, %cst {dimension_numbers = #tpu.dot_dimension_numbers<[1], [0], [0], [1], [0, 0, 1, 1], [], []>} : vector<16x256xbf16>, vector<256x128xbf16>, vector<16x128xf32> -> vector<16x128xf32>
    %7 = arith.addf %4, %6 : vector<16x128xf32>
    %c0_6 = arith.constant 0 : index
    %c0_7 = arith.constant 0 : index
    %8 = vector.load %arg7[%c0_6, %c0_7] : memref<16x128xf32, #tpu.memory_space<vmem>>, vector<16x128xf32>
    tpu.vector_store %arg7[%c0_6, %c0_7], %7 {strides = array<i32>} : memref<16x128xf32, #tpu.memory_space<vmem>>, vector<16x128xf32>,
    %c0_i32_8 = arith.constant 0 : i32
    %9 = arith.cmpi eq, %arg2, %c0_i32_8 : i32
    %10 = arith.extui %9 : i1 to i32
    %c0_i32_9 = arith.constant 0 : i32
    %11 = arith.cmpi ne, %10, %c0_i32_9 : i32
    scf.if %11 {
      %c0_10 = arith.constant 0 : index
      %c0_11 = arith.constant 0 : index
      %12 = vector.load %arg7[%c0_10, %c0_11] : memref<16x128xf32, #tpu.memory_space<vmem>>, vector<16x128xf32>
      %c0_12 = arith.constant 0 : index
      %c0_13 = arith.constant 0 : index
      %13 = vector.load %arg5[%c0_12, %c0_13] : memref<1x128xf32, #tpu.memory_space<vmem>>, vector<1x128xf32>
      %14 = vector.broadcast %13 : vector<1x128xf32> to vector<16x128xf32>
      %15 = arith.addf %12, %14 : vector<16x128xf32>
      %cst_14 = arith.constant 5.000000e-01 : f32
      %16 = vector.broadcast %cst_14 : f32 to vector<16x128xf32>
      %17 = arith.mulf %16, %15 : vector<16x128xf32>
      %cst_15 = arith.constant 4.471500e-02 : f32
      %18 = vector.broadcast %cst_15 : f32 to vector<16x128xf32>
      %19 = arith.mulf %18, %15 : vector<16x128xf32>
      %20 = arith.mulf %19, %15 : vector<16x128xf32>
      %21 = arith.mulf %20, %15 : vector<16x128xf32>
      %22 = arith.addf %15, %21 : vector<16x128xf32>
      %cst_16 = arith.constant 0.797884583 : f32
      %23 = vector.broadcast %cst_16 : f32 to vector<16x128xf32>
      %24 = arith.mulf %23, %22 : vector<16x128xf32>
      %25 = math.tanh %24 : vector<16x128xf32>
      %cst_17 = arith.constant 1.000000e+00 : f32
      %26 = vector.broadcast %cst_17 : f32 to vector<16x128xf32>
      %27 = arith.addf %26, %25 : vector<16x128xf32>
      %28 = arith.mulf %17, %27 : vector<16x128xf32>
      %29 = arith.truncf %28 : vector<16x128xf32> to vector<16x128xbf16>
      %c0_18 = arith.constant 0 : index
      %c0_19 = arith.constant 0 : index
      %30 = vector.load %arg6[%c0_18, %c0_19] : memref<16x128xbf16, #tpu.memory_space<vmem>>, vector<16x128xbf16>
      tpu.vector_store %arg6[%c0_18, %c0_19], %29 {strides = array<i32>} : memref<16x128xbf16, #tpu.memory_space<vmem>>, vector<16x128xbf16>,
    } else {
    }
    return
  }
  func.func @transform_0(%arg0: i32, %arg1: i32, %arg2: i32) -> (i32, i32) {
    %c0_i32 = arith.constant 0 : i32
    return %arg0, %arg2 : i32, i32
  }
  func.func @transform_1(%arg0: i32, %arg1: i32, %arg2: i32) -> (i32, i32) {
    %c0_i32 = arith.constant 0 : i32
    return %arg2, %arg1 : i32, i32
  }
  func.func @transform_2(%arg0: i32, %arg1: i32, %arg2: i32) -> (i32, i32) {
    %c0_i32 = arith.constant 0 : i32
    %c0_i32_0 = arith.constant 0 : i32
    return %c0_i32, %arg1 : i32, i32
  }
  func.func @transform_3(%arg0: i32, %arg1: i32, %arg2: i32) -> (i32, i32) {
    %c0_i32 = arith.constant 0 : i32
    return %arg0, %arg1 : i32, i32
  }
}

module attributes {stable_mosaic.version = 11 : i64} {
  func.func @kernel(%arg0: i32, %arg1: i32, %arg2: i32, %arg3: memref<16x128xbf16, #tpu.memory_space<vmem>>, %arg4: memref<1x128xf32, #tpu.memory_space<vmem>>, %arg5: memref<1x128xf32, #tpu.memory_space<vmem>>, %arg6: memref<128x128xbf16, #tpu.memory_space<vmem>>, %arg7: memref<1x128xf32, #tpu.memory_space<vmem>>, %arg8: memref<16x128xbf16, #tpu.memory_space<vmem>>, %arg9: memref<16x128xf32, #tpu.memory_space<vmem>>, %arg10: memref<16x128xbf16, #tpu.memory_space<vmem>>) attributes {dimension_semantics = [#tpu.dimension_semantics<parallel>, #tpu.dimension_semantics<arbitrary>, #tpu.dimension_semantics<arbitrary>], iteration_bounds = array<i64: 1, 3, 1>, scalar_prefetch = 0 : i64, scratch_operands = 2 : i64, tpu.core_type = #tpu.core_type<tc>, window_params = [{transform_indices = @transform_0, window_bounds = array<i64: 16, 128>}, {pipeline_mode = #tpu.pipeline_mode<synchronous>, transform_indices = @transform_1, window_bounds = array<i64: 1, 128>}, {pipeline_mode = #tpu.pipeline_mode<synchronous>, transform_indices = @transform_2, window_bounds = array<i64: 1, 128>}, {transform_indices = @transform_3, window_bounds = array<i64: 128, 128>}, {transform_indices = @transform_4, window_bounds = array<i64: 1, 128>}, {transform_indices = @transform_5, window_bounds = array<i64: 16, 128>}]} {
    %c0_i32 = arith.constant 0 : i32
    %0 = arith.cmpi eq, %arg2, %c0_i32 : i32
    %1 = arith.extui %0 : i1 to i32
    %c0_i32_0 = arith.constant 0 : i32
    %2 = arith.cmpi ne, %1, %c0_i32_0 : i32
    scf.if %2 {
      %cst_13 = arith.constant 0.000000e+00 : f32
      %17 = vector.broadcast %cst_13 : f32 to vector<16x128xf32>
      %c0_14 = arith.constant 0 : index
      %c0_15 = arith.constant 0 : index
      %18 = vector.load %arg9[%c0_14, %c0_15] : memref<16x128xf32, #tpu.memory_space<vmem>>, vector<16x128xf32>
      tpu.vector_store %arg9[%c0_14, %c0_15], %17 {strides = array<i32>} : memref<16x128xf32, #tpu.memory_space<vmem>>, vector<16x128xf32>,
    } else {
    }
    %c0_i32_1 = arith.constant 0 : i32
    %3 = arith.cmpi eq, %arg1, %c0_i32_1 : i32
    %c0_i32_2 = arith.constant 0 : i32
    %4 = arith.cmpi eq, %arg2, %c0_i32_2 : i32
    %5 = arith.andi %3, %4 : i1
    %6 = arith.extui %5 : i1 to i32
    %c0_i32_3 = arith.constant 0 : i32
    %7 = arith.cmpi ne, %6, %c0_i32_3 : i32
    scf.if %7 {
      %c0_13 = arith.constant 0 : index
      %c0_14 = arith.constant 0 : index
      %17 = vector.load %arg3[%c0_13, %c0_14] : memref<16x128xbf16, #tpu.memory_space<vmem>>, vector<16x128xbf16>
      %18 = arith.extf %17 : vector<16x128xbf16> to vector<16x128xf32>
      %cst_15 = arith.constant dense<0.000000e+00> : vector<16xf32>
      %19 = vector.multi_reduction <add>, %18, %cst_15 [1] : vector<16x128xf32> to vector<16xf32>
      %20 = vector.shape_cast %19 : vector<16xf32> to vector<16x1xf32>
      %cst_16 = arith.constant 1.280000e+02 : f32
      %21 = vector.broadcast %cst_16 : f32 to vector<16x1xf32>
      %22 = arith.divf %20, %21 : vector<16x1xf32>
      %23 = vector.broadcast %22 : vector<16x1xf32> to vector<16x128xf32>
      %24 = arith.subf %18, %23 : vector<16x128xf32>
      %25 = arith.mulf %24, %24 : vector<16x128xf32>
      %cst_17 = arith.constant dense<0.000000e+00> : vector<16xf32>
      %26 = vector.multi_reduction <add>, %25, %cst_17 [1] : vector<16x128xf32> to vector<16xf32>
      %27 = vector.shape_cast %26 : vector<16xf32> to vector<16x1xf32>
      %cst_18 = arith.constant 1.280000e+02 : f32
      %28 = vector.broadcast %cst_18 : f32 to vector<16x1xf32>
      %29 = arith.divf %27, %28 : vector<16x1xf32>
      %30 = vector.broadcast %22 : vector<16x1xf32> to vector<16x128xf32>
      %31 = arith.subf %18, %30 : vector<16x128xf32>
      %cst_19 = arith.constant 9.99999974E-6 : f32
      %32 = vector.broadcast %cst_19 : f32 to vector<16x1xf32>
      %33 = arith.addf %29, %32 : vector<16x1xf32>
      %34 = math.rsqrt %33 : vector<16x1xf32>
      %35 = vector.broadcast %34 : vector<16x1xf32> to vector<16x128xf32>
      %36 = arith.mulf %31, %35 : vector<16x128xf32>
      %c0_20 = arith.constant 0 : index
      %c0_21 = arith.constant 0 : index
      %37 = vector.load %arg4[%c0_20, %c0_21] : memref<1x128xf32, #tpu.memory_space<vmem>>, vector<1x128xf32>
      %38 = vector.broadcast %37 : vector<1x128xf32> to vector<16x128xf32>
      %39 = arith.mulf %36, %38 : vector<16x128xf32>
      %c0_22 = arith.constant 0 : index
      %c0_23 = arith.constant 0 : index
      %40 = vector.load %arg5[%c0_22, %c0_23] : memref<1x128xf32, #tpu.memory_space<vmem>>, vector<1x128xf32>
      %41 = vector.broadcast %40 : vector<1x128xf32> to vector<16x128xf32>
      %42 = arith.addf %39, %41 : vector<16x128xf32>
      %43 = arith.truncf %42 : vector<16x128xf32> to vector<16x128xbf16>
      %c0_24 = arith.constant 0 : index
      %c0_25 = arith.constant 0 : index
      %44 = vector.load %arg10[%c0_24, %c0_25] : memref<16x128xbf16, #tpu.memory_space<vmem>>, vector<16x128xbf16>
      tpu.vector_store %arg10[%c0_24, %c0_25], %43 {strides = array<i32>} : memref<16x128xbf16, #tpu.memory_space<vmem>>, vector<16x128xbf16>,
    } else {
    }
    %c0 = arith.constant 0 : index
    %c0_4 = arith.constant 0 : index
    %8 = vector.load %arg10[%c0, %c0_4] : memref<16x128xbf16, #tpu.memory_space<vmem>>, vector<16x128xbf16>
    %c0_5 = arith.constant 0 : index
    %c0_6 = arith.constant 0 : index
    %9 = vector.load %arg9[%c0_5, %c0_6] : memref<16x128xf32, #tpu.memory_space<vmem>>, vector<16x128xf32>
    %c0_7 = arith.constant 0 : index
    %c0_8 = arith.constant 0 : index
    %10 = vector.load %arg6[%c0_7, %c0_8] : memref<128x128xbf16, #tpu.memory_space<vmem>>, vector<128x128xbf16>
    %cst = arith.constant dense<0.000000e+00> : vector<16x128xf32>
    %11 = tpu.matmul %8, %10, %cst {dimension_numbers = #tpu.dot_dimension_numbers<[1], [0], [0], [1], [0, 0, 1, 1], [], []>} : vector<16x128xbf16>, vector<128x128xbf16>, vector<16x128xf32> -> vector<16x128xf32>
    %12 = arith.addf %9, %11 : vector<16x128xf32>
    %c0_9 = arith.constant 0 : index
    %c0_10 = arith.constant 0 : index
    %13 = vector.load %arg9[%c0_9, %c0_10] : memref<16x128xf32, #tpu.memory_space<vmem>>, vector<16x128xf32>
    tpu.vector_store %arg9[%c0_9, %c0_10], %12 {strides = array<i32>} : memref<16x128xf32, #tpu.memory_space<vmem>>, vector<16x128xf32>,
    %c0_i32_11 = arith.constant 0 : i32
    %14 = arith.cmpi eq, %arg2, %c0_i32_11 : i32
    %15 = arith.extui %14 : i1 to i32
    %c0_i32_12 = arith.constant 0 : i32
    %16 = arith.cmpi ne, %15, %c0_i32_12 : i32
    scf.if %16 {
      %c0_13 = arith.constant 0 : index
      %c0_14 = arith.constant 0 : index
      %17 = vector.load %arg9[%c0_13, %c0_14] : memref<16x128xf32, #tpu.memory_space<vmem>>, vector<16x128xf32>
      %c0_15 = arith.constant 0 : index
      %c0_16 = arith.constant 0 : index
      %18 = vector.load %arg7[%c0_15, %c0_16] : memref<1x128xf32, #tpu.memory_space<vmem>>, vector<1x128xf32>
      %19 = vector.broadcast %18 : vector<1x128xf32> to vector<16x128xf32>
      %20 = arith.addf %17, %19 : vector<16x128xf32>
      %21 = arith.truncf %20 : vector<16x128xf32> to vector<16x128xbf16>
      %c0_17 = arith.constant 0 : index
      %c0_18 = arith.constant 0 : index
      %22 = vector.load %arg8[%c0_17, %c0_18] : memref<16x128xbf16, #tpu.memory_space<vmem>>, vector<16x128xbf16>
      tpu.vector_store %arg8[%c0_17, %c0_18], %21 {strides = array<i32>} : memref<16x128xbf16, #tpu.memory_space<vmem>>, vector<16x128xbf16>,
    } else {
    }
    return
  }
  func.func @transform_0(%arg0: i32, %arg1: i32, %arg2: i32) -> (i32, i32) {
    %c0_i32 = arith.constant 0 : i32
    %c0_i32_0 = arith.constant 0 : i32
    return %arg0, %c0_i32 : i32, i32
  }
  func.func @transform_1(%arg0: i32, %arg1: i32, %arg2: i32) -> (i32, i32) {
    %c0_i32 = arith.constant 0 : i32
    %c0_i32_0 = arith.constant 0 : i32
    %c0_i32_1 = arith.constant 0 : i32
    return %c0_i32, %c0_i32_0 : i32, i32
  }
  func.func @transform_2(%arg0: i32, %arg1: i32, %arg2: i32) -> (i32, i32) {
    %c0_i32 = arith.constant 0 : i32
    %c0_i32_0 = arith.constant 0 : i32
    %c0_i32_1 = arith.constant 0 : i32
    return %c0_i32, %c0_i32_0 : i32, i32
  }
  func.func @transform_3(%arg0: i32, %arg1: i32, %arg2: i32) -> (i32, i32) {
    %c0_i32 = arith.constant 0 : i32
    return %arg2, %arg1 : i32, i32
  }
  func.func @transform_4(%arg0: i32, %arg1: i32, %arg2: i32) -> (i32, i32) {
    %c0_i32 = arith.constant 0 : i32
    %c0_i32_0 = arith.constant 0 : i32
    return %c0_i32, %arg1 : i32, i32
  }
  func.func @transform_5(%arg0: i32, %arg1: i32, %arg2: i32) -> (i32, i32) {
    %c0_i32 = arith.constant 0 : i32
    return %arg0, %arg1 : i32, i32
  }
}

module attributes {stable_mosaic.version = 11 : i64} {
  func.func @kernel(%arg0: i32, %arg1: i32, %arg2: i32, %arg3: memref<16x128xbf16, #tpu.memory_space<vmem>>, %arg4: memref<1x128xf32, #tpu.memory_space<vmem>>, %arg5: memref<1x128xf32, #tpu.memory_space<vmem>>, %arg6: memref<128x256xbf16, #tpu.memory_space<vmem>>, %arg7: memref<1x256xf32, #tpu.memory_space<vmem>>, %arg8: memref<16x256xbf16, #tpu.memory_space<vmem>>, %arg9: memref<16x256xf32, #tpu.memory_space<vmem>>, %arg10: memref<16x128xbf16, #tpu.memory_space<vmem>>) attributes {dimension_semantics = [#tpu.dimension_semantics<parallel>, #tpu.dimension_semantics<arbitrary>, #tpu.dimension_semantics<arbitrary>], iteration_bounds = array<i64: 1, 1, 1>, scalar_prefetch = 0 : i64, scratch_operands = 2 : i64, tpu.core_type = #tpu.core_type<tc>, window_params = [{transform_indices = @transform_0, window_bounds = array<i64: 16, 128>}, {pipeline_mode = #tpu.pipeline_mode<synchronous>, transform_indices = @transform_1, window_bounds = array<i64: 1, 128>}, {pipeline_mode = #tpu.pipeline_mode<synchronous>, transform_indices = @transform_2, window_bounds = array<i64: 1, 128>}, {transform_indices = @transform_3, window_bounds = array<i64: 128, 256>}, {transform_indices = @transform_4, window_bounds = array<i64: 1, 256>}, {transform_indices = @transform_5, window_bounds = array<i64: 16, 256>}]} {
    %c0_i32 = arith.constant 0 : i32
    %0 = arith.cmpi eq, %arg2, %c0_i32 : i32
    %1 = arith.extui %0 : i1 to i32
    %c0_i32_0 = arith.constant 0 : i32
    %2 = arith.cmpi ne, %1, %c0_i32_0 : i32
    scf.if %2 {
      %cst_13 = arith.constant 0.000000e+00 : f32
      %17 = vector.broadcast %cst_13 : f32 to vector<16x256xf32>
      %c0_14 = arith.constant 0 : index
      %c0_15 = arith.constant 0 : index
      %18 = vector.load %arg9[%c0_14, %c0_15] : memref<16x256xf32, #tpu.memory_space<vmem>>, vector<16x256xf32>
      tpu.vector_store %arg9[%c0_14, %c0_15], %17 {strides = array<i32>} : memref<16x256xf32, #tpu.memory_space<vmem>>, vector<16x256xf32>,
    } else {
    }
    %c0_i32_1 = arith.constant 0 : i32
    %3 = arith.cmpi eq, %arg1, %c0_i32_1 : i32
    %c0_i32_2 = arith.constant 0 : i32
    %4 = arith.cmpi eq, %arg2, %c0_i32_2 : i32
    %5 = arith.andi %3, %4 : i1
    %6 = arith.extui %5 : i1 to i32
    %c0_i32_3 = arith.constant 0 : i32
    %7 = arith.cmpi ne, %6, %c0_i32_3 : i32
    scf.if %7 {
      %c0_13 = arith.constant 0 : index
      %c0_14 = arith.constant 0 : index
      %17 = vector.load %arg3[%c0_13, %c0_14] : memref<16x128xbf16, #tpu.memory_space<vmem>>, vector<16x128xbf16>
      %18 = arith.extf %17 : vector<16x128xbf16> to vector<16x128xf32>
      %cst_15 = arith.constant dense<0.000000e+00> : vector<16xf32>
      %19 = vector.multi_reduction <add>, %18, %cst_15 [1] : vector<16x128xf32> to vector<16xf32>
      %20 = vector.shape_cast %19 : vector<16xf32> to vector<16x1xf32>
      %cst_16 = arith.constant 1.280000e+02 : f32
      %21 = vector.broadcast %cst_16 : f32 to vector<16x1xf32>
      %22 = arith.divf %20, %21 : vector<16x1xf32>
      %23 = vector.broadcast %22 : vector<16x1xf32> to vector<16x128xf32>
      %24 = arith.subf %18, %23 : vector<16x128xf32>
      %25 = arith.mulf %24, %24 : vector<16x128xf32>
      %cst_17 = arith.constant dense<0.000000e+00> : vector<16xf32>
      %26 = vector.multi_reduction <add>, %25, %cst_17 [1] : vector<16x128xf32> to vector<16xf32>
      %27 = vector.shape_cast %26 : vector<16xf32> to vector<16x1xf32>
      %cst_18 = arith.constant 1.280000e+02 : f32
      %28 = vector.broadcast %cst_18 : f32 to vector<16x1xf32>
      %29 = arith.divf %27, %28 : vector<16x1xf32>
      %30 = vector.broadcast %22 : vector<16x1xf32> to vector<16x128xf32>
      %31 = arith.subf %18, %30 : vector<16x128xf32>
      %cst_19 = arith.constant 9.99999974E-6 : f32
      %32 = vector.broadcast %cst_19 : f32 to vector<16x1xf32>
      %33 = arith.addf %29, %32 : vector<16x1xf32>
      %34 = math.rsqrt %33 : vector<16x1xf32>
      %35 = vector.broadcast %34 : vector<16x1xf32> to vector<16x128xf32>
      %36 = arith.mulf %31, %35 : vector<16x128xf32>
      %c0_20 = arith.constant 0 : index
      %c0_21 = arith.constant 0 : index
      %37 = vector.load %arg4[%c0_20, %c0_21] : memref<1x128xf32, #tpu.memory_space<vmem>>, vector<1x128xf32>
      %38 = vector.broadcast %37 : vector<1x128xf32> to vector<16x128xf32>
      %39 = arith.mulf %36, %38 : vector<16x128xf32>
      %c0_22 = arith.constant 0 : index
      %c0_23 = arith.constant 0 : index
      %40 = vector.load %arg5[%c0_22, %c0_23] : memref<1x128xf32, #tpu.memory_space<vmem>>, vector<1x128xf32>
      %41 = vector.broadcast %40 : vector<1x128xf32> to vector<16x128xf32>
      %42 = arith.addf %39, %41 : vector<16x128xf32>
      %43 = arith.truncf %42 : vector<16x128xf32> to vector<16x128xbf16>
      %c0_24 = arith.constant 0 : index
      %c0_25 = arith.constant 0 : index
      %44 = vector.load %arg10[%c0_24, %c0_25] : memref<16x128xbf16, #tpu.memory_space<vmem>>, vector<16x128xbf16>
      tpu.vector_store %arg10[%c0_24, %c0_25], %43 {strides = array<i32>} : memref<16x128xbf16, #tpu.memory_space<vmem>>, vector<16x128xbf16>,
    } else {
    }
    %c0 = arith.constant 0 : index
    %c0_4 = arith.constant 0 : index
    %8 = vector.load %arg10[%c0, %c0_4] : memref<16x128xbf16, #tpu.memory_space<vmem>>, vector<16x128xbf16>
    %c0_5 = arith.constant 0 : index
    %c0_6 = arith.constant 0 : index
    %9 = vector.load %arg9[%c0_5, %c0_6] : memref<16x256xf32, #tpu.memory_space<vmem>>, vector<16x256xf32>
    %c0_7 = arith.constant 0 : index
    %c0_8 = arith.constant 0 : index
    %10 = vector.load %arg6[%c0_7, %c0_8] : memref<128x256xbf16, #tpu.memory_space<vmem>>, vector<128x256xbf16>
    %cst = arith.constant dense<0.000000e+00> : vector<16x256xf32>
    %11 = tpu.matmul %8, %10, %cst {dimension_numbers = #tpu.dot_dimension_numbers<[1], [0], [0], [1], [0, 0, 1, 1], [], []>} : vector<16x128xbf16>, vector<128x256xbf16>, vector<16x256xf32> -> vector<16x256xf32>
    %12 = arith.addf %9, %11 : vector<16x256xf32>
    %c0_9 = arith.constant 0 : index
    %c0_10 = arith.constant 0 : index
    %13 = vector.load %arg9[%c0_9, %c0_10] : memref<16x256xf32, #tpu.memory_space<vmem>>, vector<16x256xf32>
    tpu.vector_store %arg9[%c0_9, %c0_10], %12 {strides = array<i32>} : memref<16x256xf32, #tpu.memory_space<vmem>>, vector<16x256xf32>,
    %c0_i32_11 = arith.constant 0 : i32
    %14 = arith.cmpi eq, %arg2, %c0_i32_11 : i32
    %15 = arith.extui %14 : i1 to i32
    %c0_i32_12 = arith.constant 0 : i32
    %16 = arith.cmpi ne, %15, %c0_i32_12 : i32
    scf.if %16 {
      %c0_13 = arith.constant 0 : index
      %c0_14 = arith.constant 0 : index
      %17 = vector.load %arg9[%c0_13, %c0_14] : memref<16x256xf32, #tpu.memory_space<vmem>>, vector<16x256xf32>
      %c0_15 = arith.constant 0 : index
      %c0_16 = arith.constant 0 : index
      %18 = vector.load %arg7[%c0_15, %c0_16] : memref<1x256xf32, #tpu.memory_space<vmem>>, vector<1x256xf32>
      %19 = vector.broadcast %18 : vector<1x256xf32> to vector<16x256xf32>
      %20 = arith.addf %17, %19 : vector<16x256xf32>
      %cst_17 = arith.constant 5.000000e-01 : f32
      %21 = vector.broadcast %cst_17 : f32 to vector<16x256xf32>
      %22 = arith.mulf %21, %20 : vector<16x256xf32>
      %cst_18 = arith.constant 4.471500e-02 : f32
      %23 = vector.broadcast %cst_18 : f32 to vector<16x256xf32>
      %24 = arith.mulf %23, %20 : vector<16x256xf32>
      %25 = arith.mulf %24, %20 : vector<16x256xf32>
      %26 = arith.mulf %25, %20 : vector<16x256xf32>
      %27 = arith.addf %20, %26 : vector<16x256xf32>
      %cst_19 = arith.constant 0.797884583 : f32
      %28 = vector.broadcast %cst_19 : f32 to vector<16x256xf32>
      %29 = arith.mulf %28, %27 : vector<16x256xf32>
      %30 = math.tanh %29 : vector<16x256xf32>
      %cst_20 = arith.constant 1.000000e+00 : f32
      %31 = vector.broadcast %cst_20 : f32 to vector<16x256xf32>
      %32 = arith.addf %31, %30 : vector<16x256xf32>
      %33 = arith.mulf %22, %32 : vector<16x256xf32>
      %34 = arith.truncf %33 : vector<16x256xf32> to vector<16x256xbf16>
      %c0_21 = arith.constant 0 : index
      %c0_22 = arith.constant 0 : index
      %35 = vector.load %arg8[%c0_21, %c0_22] : memref<16x256xbf16, #tpu.memory_space<vmem>>, vector<16x256xbf16>
      tpu.vector_store %arg8[%c0_21, %c0_22], %34 {strides = array<i32>} : memref<16x256xbf16, #tpu.memory_space<vmem>>, vector<16x256xbf16>,
    } else {
    }
    return
  }
  func.func @transform_0(%arg0: i32, %arg1: i32, %arg2: i32) -> (i32, i32) {
    %c0_i32 = arith.constant 0 : i32
    %c0_i32_0 = arith.constant 0 : i32
    return %arg0, %c0_i32 : i32, i32
  }
  func.func @transform_1(%arg0: i32, %arg1: i32, %arg2: i32) -> (i32, i32) {
    %c0_i32 = arith.constant 0 : i32
    %c0_i32_0 = arith.constant 0 : i32
    %c0_i32_1 = arith.constant 0 : i32
    return %c0_i32, %c0_i32_0 : i32, i32
  }
  func.func @transform_2(%arg0: i32, %arg1: i32, %arg2: i32) -> (i32, i32) {
    %c0_i32 = arith.constant 0 : i32
    %c0_i32_0 = arith.constant 0 : i32
    %c0_i32_1 = arith.constant 0 : i32
    return %c0_i32, %c0_i32_0 : i32, i32
  }
  func.func @transform_3(%arg0: i32, %arg1: i32, %arg2: i32) -> (i32, i32) {
    %c0_i32 = arith.constant 0 : i32
    return %arg2, %arg1 : i32, i32
  }
  func.func @transform_4(%arg0: i32, %arg1: i32, %arg2: i32) -> (i32, i32) {
    %c0_i32 = arith.constant 0 : i32
    %c0_i32_0 = arith.constant 0 : i32
    return %c0_i32, %arg1 : i32, i32
  }
  func.func @transform_5(%arg0: i32, %arg1: i32, %arg2: i32) -> (i32, i32) {
    %c0_i32 = arith.constant 0 : i32
    return %arg0, %arg1 : i32, i32
  }
}

module attributes {stable_mosaic.version = 11 : i64} {
  func.func @kernel(%arg0: i32, %arg1: i32, %arg2: i32, %arg3: memref<16x256xbf16, #tpu.memory_space<vmem>>, %arg4: memref<256x128xbf16, #tpu.memory_space<vmem>>, %arg5: memref<1x128xf32, #tpu.memory_space<vmem>>, %arg6: memref<16x128xbf16, #tpu.memory_space<vmem>>, %arg7: memref<16x128xbf16, #tpu.memory_space<vmem>>, %arg8: memref<16x128xf32, #tpu.memory_space<vmem>>) attributes {dimension_semantics = [#tpu.dimension_semantics<parallel>, #tpu.dimension_semantics<parallel>, #tpu.dimension_semantics<arbitrary>], iteration_bounds = array<i64: 1, 1, 1>, scalar_prefetch = 0 : i64, scratch_operands = 1 : i64, tpu.core_type = #tpu.core_type<tc>, window_params = [{transform_indices = @transform_0, window_bounds = array<i64: 16, 256>}, {transform_indices = @transform_1, window_bounds = array<i64: 256, 128>}, {transform_indices = @transform_2, window_bounds = array<i64: 1, 128>}, {transform_indices = @transform_3, window_bounds = array<i64: 16, 128>}, {transform_indices = @transform_4, window_bounds = array<i64: 16, 128>}]} {
    %c0_i32 = arith.constant 0 : i32
    %0 = arith.cmpi eq, %arg2, %c0_i32 : i32
    %1 = arith.extui %0 : i1 to i32
    %c0_i32_0 = arith.constant 0 : i32
    %2 = arith.cmpi ne, %1, %c0_i32_0 : i32
    scf.if %2 {
      %cst_10 = arith.constant 0.000000e+00 : f32
      %12 = vector.broadcast %cst_10 : f32 to vector<16x128xf32>
      %c0_11 = arith.constant 0 : index
      %c0_12 = arith.constant 0 : index
      %13 = vector.load %arg8[%c0_11, %c0_12] : memref<16x128xf32, #tpu.memory_space<vmem>>, vector<16x128xf32>
      tpu.vector_store %arg8[%c0_11, %c0_12], %12 {strides = array<i32>} : memref<16x128xf32, #tpu.memory_space<vmem>>, vector<16x128xf32>,
    } else {
    }
    %c0 = arith.constant 0 : index
    %c0_1 = arith.constant 0 : index
    %3 = vector.load %arg3[%c0, %c0_1] : memref<16x256xbf16, #tpu.memory_space<vmem>>, vector<16x256xbf16>
    %c0_2 = arith.constant 0 : index
    %c0_3 = arith.constant 0 : index
    %4 = vector.load %arg8[%c0_2, %c0_3] : memref<16x128xf32, #tpu.memory_space<vmem>>, vector<16x128xf32>
    %c0_4 = arith.constant 0 : index
    %c0_5 = arith.constant 0 : index
    %5 = vector.load %arg4[%c0_4, %c0_5] : memref<256x128xbf16, #tpu.memory_space<vmem>>, vector<256x128xbf16>
    %cst = arith.constant dense<0.000000e+00> : vector<16x128xf32>
    %6 = tpu.matmul %3, %5, %cst {dimension_numbers = #tpu.dot_dimension_numbers<[1], [0], [0], [1], [0, 0, 1, 1], [], []>} : vector<16x256xbf16>, vector<256x128xbf16>, vector<16x128xf32> -> vector<16x128xf32>
    %7 = arith.addf %4, %6 : vector<16x128xf32>
    %c0_6 = arith.constant 0 : index
    %c0_7 = arith.constant 0 : index
    %8 = vector.load %arg8[%c0_6, %c0_7] : memref<16x128xf32, #tpu.memory_space<vmem>>, vector<16x128xf32>
    tpu.vector_store %arg8[%c0_6, %c0_7], %7 {strides = array<i32>} : memref<16x128xf32, #tpu.memory_space<vmem>>, vector<16x128xf32>,
    %c0_i32_8 = arith.constant 0 : i32
    %9 = arith.cmpi eq, %arg2, %c0_i32_8 : i32
    %10 = arith.extui %9 : i1 to i32
    %c0_i32_9 = arith.constant 0 : i32
    %11 = arith.cmpi ne, %10, %c0_i32_9 : i32
    scf.if %11 {
      %c0_10 = arith.constant 0 : index
      %c0_11 = arith.constant 0 : index
      %12 = vector.load %arg8[%c0_10, %c0_11] : memref<16x128xf32, #tpu.memory_space<vmem>>, vector<16x128xf32>
      %c0_12 = arith.constant 0 : index
      %c0_13 = arith.constant 0 : index
      %13 = vector.load %arg5[%c0_12, %c0_13] : memref<1x128xf32, #tpu.memory_space<vmem>>, vector<1x128xf32>
      %14 = vector.broadcast %13 : vector<1x128xf32> to vector<16x128xf32>
      %15 = arith.addf %12, %14 : vector<16x128xf32>
      %c0_14 = arith.constant 0 : index
      %c0_15 = arith.constant 0 : index
      %16 = vector.load %arg6[%c0_14, %c0_15] : memref<16x128xbf16, #tpu.memory_space<vmem>>, vector<16x128xbf16>
      %17 = arith.extf %16 : vector<16x128xbf16> to vector<16x128xf32>
      %18 = arith.addf %15, %17 : vector<16x128xf32>
      %19 = arith.truncf %18 : vector<16x128xf32> to vector<16x128xbf16>
      %c0_16 = arith.constant 0 : index
      %c0_17 = arith.constant 0 : index
      %20 = vector.load %arg7[%c0_16, %c0_17] : memref<16x128xbf16, #tpu.memory_space<vmem>>, vector<16x128xbf16>
      tpu.vector_store %arg7[%c0_16, %c0_17], %19 {strides = array<i32>} : memref<16x128xbf16, #tpu.memory_space<vmem>>, vector<16x128xbf16>,
    } else {
    }
    return
  }
  func.func @transform_0(%arg0: i32, %arg1: i32, %arg2: i32) -> (i32, i32) {
    %c0_i32 = arith.constant 0 : i32
    return %arg0, %arg2 : i32, i32
  }
  func.func @transform_1(%arg0: i32, %arg1: i32, %arg2: i32) -> (i32, i32) {
    %c0_i32 = arith.constant 0 : i32
    return %arg2, %arg1 : i32, i32
  }
  func.func @transform_2(%arg0: i32, %arg1: i32, %arg2: i32) -> (i32, i32) {
    %c0_i32 = arith.constant 0 : i32
    %c0_i32_0 = arith.constant 0 : i32
    return %c0_i32, %arg1 : i32, i32
  }
  func.func @transform_3(%arg0: i32, %arg1: i32, %arg2: i32) -> (i32, i32) {
    %c0_i32 = arith.constant 0 : i32
    return %arg0, %arg1 : i32, i32
  }
  func.func @transform_4(%arg0: i32, %arg1: i32, %arg2: i32) -> (i32, i32) {
    %c0_i32 = arith.constant 0 : i32
    return %arg0, %arg1 : i32, i32
  }
}

module attributes {stable_mosaic.version = 11 : i64} {
  func.func @kernel(%arg0: i32, %arg1: i32, %arg2: i32, %arg3: memref<16x128xbf16, #tpu.memory_space<vmem>>, %arg4: memref<128x128xbf16, #tpu.memory_space<vmem>>, %arg5: memref<1x128xf32, #tpu.memory_space<vmem>>, %arg6: memref<16x128xbf16, #tpu.memory_space<vmem>>, %arg7: memref<16x128xbf16, #tpu.memory_space<vmem>>, %arg8: memref<16x128xf32, #tpu.memory_space<vmem>>) attributes {dimension_semantics = [#tpu.dimension_semantics<parallel>, #tpu.dimension_semantics<parallel>, #tpu.dimension_semantics<arbitrary>], iteration_bounds = array<i64: 1, 1, 1>, scalar_prefetch = 0 : i64, scratch_operands = 1 : i64, tpu.core_type = #tpu.core_type<tc>, window_params = [{transform_indices = @transform_0, window_bounds = array<i64: 16, 128>}, {transform_indices = @transform_1, window_bounds = array<i64: 128, 128>}, {transform_indices = @transform_2, window_bounds = array<i64: 1, 128>}, {transform_indices = @transform_3, window_bounds = array<i64: 16, 128>}, {transform_indices = @transform_4, window_bounds = array<i64: 16, 128>}]} {
    %c0_i32 = arith.constant 0 : i32
    %0 = arith.cmpi eq, %arg2, %c0_i32 : i32
    %1 = arith.extui %0 : i1 to i32
    %c0_i32_0 = arith.constant 0 : i32
    %2 = arith.cmpi ne, %1, %c0_i32_0 : i32
    scf.if %2 {
      %cst_10 = arith.constant 0.000000e+00 : f32
      %12 = vector.broadcast %cst_10 : f32 to vector<16x128xf32>
      %c0_11 = arith.constant 0 : index
      %c0_12 = arith.constant 0 : index
      %13 = vector.load %arg8[%c0_11, %c0_12] : memref<16x128xf32, #tpu.memory_space<vmem>>, vector<16x128xf32>
      tpu.vector_store %arg8[%c0_11, %c0_12], %12 {strides = array<i32>} : memref<16x128xf32, #tpu.memory_space<vmem>>, vector<16x128xf32>,
    } else {
    }
    %c0 = arith.constant 0 : index
    %c0_1 = arith.constant 0 : index
    %3 = vector.load %arg3[%c0, %c0_1] : memref<16x128xbf16, #tpu.memory_space<vmem>>, vector<16x128xbf16>
    %c0_2 = arith.constant 0 : index
    %c0_3 = arith.constant 0 : index
    %4 = vector.load %arg8[%c0_2, %c0_3] : memref<16x128xf32, #tpu.memory_space<vmem>>, vector<16x128xf32>
    %c0_4 = arith.constant 0 : index
    %c0_5 = arith.constant 0 : index
    %5 = vector.load %arg4[%c0_4, %c0_5] : memref<128x128xbf16, #tpu.memory_space<vmem>>, vector<128x128xbf16>
    %cst = arith.constant dense<0.000000e+00> : vector<16x128xf32>
    %6 = tpu.matmul %3, %5, %cst {dimension_numbers = #tpu.dot_dimension_numbers<[1], [0], [0], [1], [0, 0, 1, 1], [], []>} : vector<16x128xbf16>, vector<128x128xbf16>, vector<16x128xf32> -> vector<16x128xf32>
    %7 = arith.addf %4, %6 : vector<16x128xf32>
    %c0_6 = arith.constant 0 : index
    %c0_7 = arith.constant 0 : index
    %8 = vector.load %arg8[%c0_6, %c0_7] : memref<16x128xf32, #tpu.memory_space<vmem>>, vector<16x128xf32>
    tpu.vector_store %arg8[%c0_6, %c0_7], %7 {strides = array<i32>} : memref<16x128xf32, #tpu.memory_space<vmem>>, vector<16x128xf32>,
    %c0_i32_8 = arith.constant 0 : i32
    %9 = arith.cmpi eq, %arg2, %c0_i32_8 : i32
    %10 = arith.extui %9 : i1 to i32
    %c0_i32_9 = arith.constant 0 : i32
    %11 = arith.cmpi ne, %10, %c0_i32_9 : i32
    scf.if %11 {
      %c0_10 = arith.constant 0 : index
      %c0_11 = arith.constant 0 : index
      %12 = vector.load %arg8[%c0_10, %c0_11] : memref<16x128xf32, #tpu.memory_space<vmem>>, vector<16x128xf32>
      %c0_12 = arith.constant 0 : index
      %c0_13 = arith.constant 0 : index
      %13 = vector.load %arg5[%c0_12, %c0_13] : memref<1x128xf32, #tpu.memory_space<vmem>>, vector<1x128xf32>
      %14 = vector.broadcast %13 : vector<1x128xf32> to vector<16x128xf32>
      %15 = arith.addf %12, %14 : vector<16x128xf32>
      %c0_14 = arith.constant 0 : index
      %c0_15 = arith.constant 0 : index
      %16 = vector.load %arg6[%c0_14, %c0_15] : memref<16x128xbf16, #tpu.memory_space<vmem>>, vector<16x128xbf16>
      %17 = arith.extf %16 : vector<16x128xbf16> to vector<16x128xf32>
      %18 = arith.addf %15, %17 : vector<16x128xf32>
      %19 = arith.truncf %18 : vector<16x128xf32> to vector<16x128xbf16>
      %c0_16 = arith.constant 0 : index
      %c0_17 = arith.constant 0 : index
      %20 = vector.load %arg7[%c0_16, %c0_17] : memref<16x128xbf16, #tpu.memory_space<vmem>>, vector<16x128xbf16>
      tpu.vector_store %arg7[%c0_16, %c0_17], %19 {strides = array<i32>} : memref<16x128xbf16, #tpu.memory_space<vmem>>, vector<16x128xbf16>,
    } else {
    }
    return
  }
  func.func @transform_0(%arg0: i32, %arg1: i32, %arg2: i32) -> (i32, i32) {
    %c0_i32 = arith.constant 0 : i32
    return %arg0, %arg2 : i32, i32
  }
  func.func @transform_1(%arg0: i32, %arg1: i32, %arg2: i32) -> (i32, i32) {
    %c0_i32 = arith.constant 0 : i32
    return %arg2, %arg1 : i32, i32
  }
  func.func @transform_2(%arg0: i32, %arg1: i32, %arg2: i32) -> (i32, i32) {
    %c0_i32 = arith.constant 0 : i32
    %c0_i32_0 = arith.constant 0 : i32
    return %c0_i32, %arg1 : i32, i32
  }
  func.func @transform_3(%arg0: i32, %arg1: i32, %arg2: i32) -> (i32, i32) {
    %c0_i32 = arith.constant 0 : i32
    return %arg0, %arg1 : i32, i32
  }
  func.func @transform_4(%arg0: i32, %arg1: i32, %arg2: i32) -> (i32, i32) {
    %c0_i32 = arith.constant 0 : i32
    return %arg0, %arg1 : i32, i32
  }
}

module attributes {stable_mosaic.version = 11 : i64} {
  func.func @_attention_kernel(%arg0: i32, %arg1: i32, %arg2: memref<1x8x128xbf16, #tpu.memory_space<vmem>>, %arg3: memref<1x8x128xbf16, #tpu.memory_space<vmem>>, %arg4: memref<1x8x128xbf16, #tpu.memory_space<vmem>>, %arg5: memref<1x8x128xbf16, #tpu.memory_space<vmem>>, %arg6: memref<8x128xf32, #tpu.memory_space<vmem>>) attributes {dimension_semantics = [#tpu.dimension_semantics<parallel>, #tpu.dimension_semantics<parallel>], iteration_bounds = array<i64: 2, 1>, scalar_prefetch = 0 : i64, scratch_operands = 1 : i64, tpu.core_type = #tpu.core_type<tc>, window_params = [{transform_indices = @transform_0, window_bounds = array<i64: 1, 8, 128>}, {transform_indices = @transform_1, window_bounds = array<i64: 1, 8, 128>}, {transform_indices = @transform_2, window_bounds = array<i64: 1, 8, 128>}, {transform_indices = @transform_3, window_bounds = array<i64: 1, 8, 128>}]} {
    %c0 = arith.constant 0 : index
    %c0_0 = arith.constant 0 : index
    %c0_1 = arith.constant 0 : index
    %0 = vector.load %arg2[%c0, %c0_0, %c0_1] : memref<1x8x128xbf16, #tpu.memory_space<vmem>>, vector<1x8x128xbf16>
    %1 = vector.shape_cast %0 : vector<1x8x128xbf16> to vector<8x128xbf16>
    %cst = arith.constant 1.250000e-01 : bf16
    %2 = vector.broadcast %cst : bf16 to vector<8x128xbf16>
    %3 = arith.mulf %1, %2 : vector<8x128xbf16>
    %c0_2 = arith.constant 0 : index
    %c0_3 = arith.constant 0 : index
    %c0_4 = arith.constant 0 : index
    %4 = vector.load %arg3[%c0_2, %c0_3, %c0_4] : memref<1x8x128xbf16, #tpu.memory_space<vmem>>, vector<1x8x128xbf16>
    %5 = vector.shape_cast %4 : vector<1x8x128xbf16> to vector<8x128xbf16>
    %c0_5 = arith.constant 0 : index
    %c0_6 = arith.constant 0 : index
    %c0_7 = arith.constant 0 : index
    %6 = vector.load %arg4[%c0_5, %c0_6, %c0_7] : memref<1x8x128xbf16, #tpu.memory_space<vmem>>, vector<1x8x128xbf16>
    %7 = vector.shape_cast %6 : vector<1x8x128xbf16> to vector<8x128xbf16>
    %8 = vector.extract_strided_slice %3 {offsets = [0, 0], sizes = [8, 64], strides = [1, 1]} : vector<8x128xbf16> to vector<8x64xbf16>
    %9 = vector.extract_strided_slice %5 {offsets = [0, 0], sizes = [8, 64], strides = [1, 1]} : vector<8x128xbf16> to vector<8x64xbf16>
    %10 = tpu.transpose %9, [1, 0] : vector<8x64xbf16> -> vector<64x8xbf16>
    %cst_8 = arith.constant dense<0.000000e+00> : vector<8x8xf32>
    %11 = tpu.matmul %8, %10, %cst_8 {dimension_numbers = #tpu.dot_dimension_numbers<[1], [0], [0], [1], [0, 0, 1, 1], [], []>} : vector<8x64xbf16>, vector<64x8xbf16>, vector<8x8xf32> -> vector<8x8xf32>
    %cst_9 = arith.constant dense<0xFF800000> : vector<8xf32>
    %12 = vector.multi_reduction <maximumf>, %11, %cst_9 [1] : vector<8x8xf32> to vector<8xf32>
    %13 = vector.shape_cast %12 : vector<8xf32> to vector<8x1xf32>
    %14 = vector.broadcast %13 : vector<8x1xf32> to vector<8x8xf32>
    %15 = arith.subf %11, %14 : vector<8x8xf32>
    %16 = math.exp %15 : vector<8x8xf32>
    %cst_10 = arith.constant dense<0.000000e+00> : vector<8xf32>
    %17 = vector.multi_reduction <add>, %16, %cst_10 [1] : vector<8x8xf32> to vector<8xf32>
    %18 = vector.shape_cast %17 : vector<8xf32> to vector<8x1xf32>
    %19 = tpu.reciprocal %18 {approx = true} : vector<8x1xf32> -> vector<8x1xf32>
    %20 = vector.broadcast %19 : vector<8x1xf32> to vector<8x8xf32>
    %21 = arith.mulf %16, %20 : vector<8x8xf32>
    %22 = arith.truncf %21 : vector<8x8xf32> to vector<8x8xbf16>
    %23 = vector.extract_strided_slice %7 {offsets = [0, 0], sizes = [8, 64], strides = [1, 1]} : vector<8x128xbf16> to vector<8x64xbf16>
    %cst_11 = arith.constant dense<0.000000e+00> : vector<8x64xf32>
    %24 = tpu.matmul %22, %23, %cst_11 {dimension_numbers = #tpu.dot_dimension_numbers<[1], [0], [0], [1], [0, 0, 1, 1], [], []>} : vector<8x8xbf16>, vector<8x64xbf16>, vector<8x64xf32> -> vector<8x64xf32>
    %c0_12 = arith.constant 0 : index
    %c0_13 = arith.constant 0 : index
    %25 = vector.load %arg6[%c0_12, %c0_13] : memref<8x128xf32, #tpu.memory_space<vmem>>, vector<8x64xf32>
    tpu.vector_store %arg6[%c0_12, %c0_13], %24 {strides = array<i32>} : memref<8x128xf32, #tpu.memory_space<vmem>>, vector<8x64xf32>,
    %26 = vector.extract_strided_slice %3 {offsets = [0, 64], sizes = [8, 64], strides = [1, 1]} : vector<8x128xbf16> to vector<8x64xbf16>
    %27 = vector.extract_strided_slice %5 {offsets = [0, 64], sizes = [8, 64], strides = [1, 1]} : vector<8x128xbf16> to vector<8x64xbf16>
    %28 = tpu.transpose %27, [1, 0] : vector<8x64xbf16> -> vector<64x8xbf16>
    %cst_14 = arith.constant dense<0.000000e+00> : vector<8x8xf32>
    %29 = tpu.matmul %26, %28, %cst_14 {dimension_numbers = #tpu.dot_dimension_numbers<[1], [0], [0], [1], [0, 0, 1, 1], [], []>} : vector<8x64xbf16>, vector<64x8xbf16>, vector<8x8xf32> -> vector<8x8xf32>
    %cst_15 = arith.constant dense<0xFF800000> : vector<8xf32>
    %30 = vector.multi_reduction <maximumf>, %29, %cst_15 [1] : vector<8x8xf32> to vector<8xf32>
    %31 = vector.shape_cast %30 : vector<8xf32> to vector<8x1xf32>
    %32 = vector.broadcast %31 : vector<8x1xf32> to vector<8x8xf32>
    %33 = arith.subf %29, %32 : vector<8x8xf32>
    %34 = math.exp %33 : vector<8x8xf32>
    %cst_16 = arith.constant dense<0.000000e+00> : vector<8xf32>
    %35 = vector.multi_reduction <add>, %34, %cst_16 [1] : vector<8x8xf32> to vector<8xf32>
    %36 = vector.shape_cast %35 : vector<8xf32> to vector<8x1xf32>
    %37 = tpu.reciprocal %36 {approx = true} : vector<8x1xf32> -> vector<8x1xf32>
    %38 = vector.broadcast %37 : vector<8x1xf32> to vector<8x8xf32>
    %39 = arith.mulf %34, %38 : vector<8x8xf32>
    %40 = arith.truncf %39 : vector<8x8xf32> to vector<8x8xbf16>
    %41 = vector.extract_strided_slice %7 {offsets = [0, 64], sizes = [8, 64], strides = [1, 1]} : vector<8x128xbf16> to vector<8x64xbf16>
    %cst_17 = arith.constant dense<0.000000e+00> : vector<8x64xf32>
    %42 = tpu.matmul %40, %41, %cst_17 {dimension_numbers = #tpu.dot_dimension_numbers<[1], [0], [0], [1], [0, 0, 1, 1], [], []>} : vector<8x8xbf16>, vector<8x64xbf16>, vector<8x64xf32> -> vector<8x64xf32>
    %c0_18 = arith.constant 0 : index
    %c64 = arith.constant 64 : index
    %43 = vector.load %arg6[%c0_18, %c64] : memref<8x128xf32, #tpu.memory_space<vmem>>, vector<8x64xf32>
    tpu.vector_store %arg6[%c0_18, %c64], %42 {strides = array<i32>} : memref<8x128xf32, #tpu.memory_space<vmem>>, vector<8x64xf32>,
    %c0_19 = arith.constant 0 : index
    %c0_20 = arith.constant 0 : index
    %44 = vector.load %arg6[%c0_19, %c0_20] : memref<8x128xf32, #tpu.memory_space<vmem>>, vector<8x128xf32>
    %45 = arith.truncf %44 : vector<8x128xf32> to vector<8x128xbf16>
    %c0_21 = arith.constant 0 : index
    %c0_22 = arith.constant 0 : index
    %c0_23 = arith.constant 0 : index
    %46 = vector.load %arg5[%c0_21, %c0_22, %c0_23] : memref<1x8x128xbf16, #tpu.memory_space<vmem>>, vector<1x8x128xbf16>
    %47 = vector.shape_cast %46 : vector<1x8x128xbf16> to vector<8x128xbf16>
    %48 = vector.shape_cast %45 : vector<8x128xbf16> to vector<1x8x128xbf16>
    tpu.vector_store %arg5[%c0_21, %c0_22, %c0_23], %48 {strides = array<i32>} : memref<1x8x128xbf16, #tpu.memory_space<vmem>>, vector<1x8x128xbf16>,
    return
  }
  func.func @transform_0(%arg0: i32, %arg1: i32) -> (i32, i32, i32) {
    %c0_i32 = arith.constant 0 : i32
    %c0_i32_0 = arith.constant 0 : i32
    return %arg0, %arg1, %c0_i32 : i32, i32, i32
  }
  func.func @transform_1(%arg0: i32, %arg1: i32) -> (i32, i32, i32) {
    %c0_i32 = arith.constant 0 : i32
    %c1_i32 = arith.constant 1 : i32
    %c0_i32_0 = arith.constant 0 : i32
    return %arg0, %c0_i32, %c1_i32 : i32, i32, i32
  }
  func.func @transform_2(%arg0: i32, %arg1: i32) -> (i32, i32, i32) {
    %c0_i32 = arith.constant 0 : i32
    %c2_i32 = arith.constant 2 : i32
    %c0_i32_0 = arith.constant 0 : i32
    return %arg0, %c0_i32, %c2_i32 : i32, i32, i32
  }
  func.func @transform_3(%arg0: i32, %arg1: i32) -> (i32, i32, i32) {
    %c0_i32 = arith.constant 0 : i32
    %c0_i32_0 = arith.constant 0 : i32
    return %arg0, %arg1, %c0_i32 : i32, i32, i32
  }
}

module attributes {stable_mosaic.version = 11 : i64} {
  func.func @kernel(%arg0: i32, %arg1: i32, %arg2: i32, %arg3: memref<16x128xbf16, #tpu.memory_space<vmem>>, %arg4: memref<128x128xbf16, #tpu.memory_space<vmem>>, %arg5: memref<1x128xf32, #tpu.memory_space<vmem>>, %arg6: memref<16x128xbf16, #tpu.memory_space<vmem>>, %arg7: memref<16x128xf32, #tpu.memory_space<vmem>>) attributes {dimension_semantics = [#tpu.dimension_semantics<parallel>, #tpu.dimension_semantics<parallel>, #tpu.dimension_semantics<arbitrary>], iteration_bounds = array<i64: 1, 1, 1>, scalar_prefetch = 0 : i64, scratch_operands = 1 : i64, tpu.core_type = #tpu.core_type<tc>, window_params = [{transform_indices = @transform_0, window_bounds = array<i64: 16, 128>}, {transform_indices = @transform_1, window_bounds = array<i64: 128, 128>}, {transform_indices = @transform_2, window_bounds = array<i64: 1, 128>}, {transform_indices = @transform_3, window_bounds = array<i64: 16, 128>}]} {
    %c0_i32 = arith.constant 0 : i32
    %0 = arith.cmpi eq, %arg2, %c0_i32 : i32
    %1 = arith.extui %0 : i1 to i32
    %c0_i32_0 = arith.constant 0 : i32
    %2 = arith.cmpi ne, %1, %c0_i32_0 : i32
    scf.if %2 {
      %cst_10 = arith.constant 0.000000e+00 : f32
      %12 = vector.broadcast %cst_10 : f32 to vector<16x128xf32>
      %c0_11 = arith.constant 0 : index
      %c0_12 = arith.constant 0 : index
      %13 = vector.load %arg7[%c0_11, %c0_12] : memref<16x128xf32, #tpu.memory_space<vmem>>, vector<16x128xf32>
      tpu.vector_store %arg7[%c0_11, %c0_12], %12 {strides = array<i32>} : memref<16x128xf32, #tpu.memory_space<vmem>>, vector<16x128xf32>,
    } else {
    }
    %c0 = arith.constant 0 : index
    %c0_1 = arith.constant 0 : index
    %3 = vector.load %arg3[%c0, %c0_1] : memref<16x128xbf16, #tpu.memory_space<vmem>>, vector<16x128xbf16>
    %c0_2 = arith.constant 0 : index
    %c0_3 = arith.constant 0 : index
    %4 = vector.load %arg7[%c0_2, %c0_3] : memref<16x128xf32, #tpu.memory_space<vmem>>, vector<16x128xf32>
    %c0_4 = arith.constant 0 : index
    %c0_5 = arith.constant 0 : index
    %5 = vector.load %arg4[%c0_4, %c0_5] : memref<128x128xbf16, #tpu.memory_space<vmem>>, vector<128x128xbf16>
    %cst = arith.constant dense<0.000000e+00> : vector<16x128xf32>
    %6 = tpu.matmul %3, %5, %cst {dimension_numbers = #tpu.dot_dimension_numbers<[1], [0], [0], [1], [0, 0, 1, 1], [], []>} : vector<16x128xbf16>, vector<128x128xbf16>, vector<16x128xf32> -> vector<16x128xf32>
    %7 = arith.addf %4, %6 : vector<16x128xf32>
    %c0_6 = arith.constant 0 : index
    %c0_7 = arith.constant 0 : index
    %8 = vector.load %arg7[%c0_6, %c0_7] : memref<16x128xf32, #tpu.memory_space<vmem>>, vector<16x128xf32>
    tpu.vector_store %arg7[%c0_6, %c0_7], %7 {strides = array<i32>} : memref<16x128xf32, #tpu.memory_space<vmem>>, vector<16x128xf32>,
    %c0_i32_8 = arith.constant 0 : i32
    %9 = arith.cmpi eq, %arg2, %c0_i32_8 : i32
    %10 = arith.extui %9 : i1 to i32
    %c0_i32_9 = arith.constant 0 : i32
    %11 = arith.cmpi ne, %10, %c0_i32_9 : i32
    scf.if %11 {
      %c0_10 = arith.constant 0 : index
      %c0_11 = arith.constant 0 : index
      %12 = vector.load %arg7[%c0_10, %c0_11] : memref<16x128xf32, #tpu.memory_space<vmem>>, vector<16x128xf32>
      %c0_12 = arith.constant 0 : index
      %c0_13 = arith.constant 0 : index
      %13 = vector.load %arg5[%c0_12, %c0_13] : memref<1x128xf32, #tpu.memory_space<vmem>>, vector<1x128xf32>
      %14 = vector.broadcast %13 : vector<1x128xf32> to vector<16x128xf32>
      %15 = arith.addf %12, %14 : vector<16x128xf32>
      %16 = arith.truncf %15 : vector<16x128xf32> to vector<16x128xbf16>
      %c0_14 = arith.constant 0 : index
      %c0_15 = arith.constant 0 : index
      %17 = vector.load %arg6[%c0_14, %c0_15] : memref<16x128xbf16, #tpu.memory_space<vmem>>, vector<16x128xbf16>
      tpu.vector_store %arg6[%c0_14, %c0_15], %16 {strides = array<i32>} : memref<16x128xbf16, #tpu.memory_space<vmem>>, vector<16x128xbf16>,
    } else {
    }
    return
  }
  func.func @transform_0(%arg0: i32, %arg1: i32, %arg2: i32) -> (i32, i32) {
    %c0_i32 = arith.constant 0 : i32
    return %arg0, %arg2 : i32, i32
  }
  func.func @transform_1(%arg0: i32, %arg1: i32, %arg2: i32) -> (i32, i32) {
    %c0_i32 = arith.constant 0 : i32
    return %arg2, %arg1 : i32, i32
  }
  func.func @transform_2(%arg0: i32, %arg1: i32, %arg2: i32) -> (i32, i32) {
    %c0_i32 = arith.constant 0 : i32
    %c0_i32_0 = arith.constant 0 : i32
    return %c0_i32, %arg1 : i32, i32
  }
  func.func @transform_3(%arg0: i32, %arg1: i32, %arg2: i32) -> (i32, i32) {
    %c0_i32 = arith.constant 0 : i32
    return %arg0, %arg1 : i32, i32
  }
}

module attributes {stable_mosaic.version = 11 : i64} {
  func.func @_spin_tail_kernel(%arg0: i32, %arg1: i32, %arg2: memref<1x8x128xbf16, #tpu.memory_space<vmem>>, %arg3: memref<128x128xbf16, #tpu.memory_space<vmem>>, %arg4: memref<1x8x128xbf16, #tpu.memory_space<vmem>>, %arg5: memref<1x8x128xf32, #tpu.memory_space<vmem>>) attributes {dimension_semantics = [#tpu.dimension_semantics<parallel>, #tpu.dimension_semantics<parallel>], iteration_bounds = array<i64: 2, 1>, scalar_prefetch = 0 : i64, scratch_operands = 0 : i64, tpu.core_type = #tpu.core_type<tc>, window_params = [{transform_indices = @transform_0, window_bounds = array<i64: 1, 8, 128>}, {transform_indices = @transform_1, window_bounds = array<i64: 128, 128>}, {transform_indices = @transform_2, window_bounds = array<i64: 1, 8, 128>}, {transform_indices = @transform_3, window_bounds = array<i64: 1, 8, 128>}]} {
    %c0 = arith.constant 0 : index
    %c0_0 = arith.constant 0 : index
    %c0_1 = arith.constant 0 : index
    %0 = vector.load %arg2[%c0, %c0_0, %c0_1] : memref<1x8x128xbf16, #tpu.memory_space<vmem>>, vector<1x8x128xbf16>
    %1 = vector.shape_cast %0 : vector<1x8x128xbf16> to vector<8x128xbf16>
    %2 = arith.extf %1 : vector<8x128xbf16> to vector<8x128xf32>
    %3 = arith.mulf %2, %2 : vector<8x128xf32>
    %cst = arith.constant dense<0.000000e+00> : vector<128xf32>
    %4 = vector.multi_reduction <add>, %3, %cst [0] : vector<8x128xf32> to vector<128xf32>
    %5 = vector.shape_cast %4 : vector<128xf32> to vector<1x128xf32>
    %6 = math.sqrt %5 : vector<1x128xf32>
    %cst_2 = arith.constant 9.99999996E-13 : f32
    %7 = vector.broadcast %cst_2 : f32 to vector<1x128xf32>
    %8 = arith.maximumf %6, %7 : vector<1x128xf32>
    %9 = vector.broadcast %8 : vector<1x128xf32> to vector<8x128xf32>
    %10 = arith.divf %2, %9 : vector<8x128xf32>
    %11 = arith.truncf %10 : vector<8x128xf32> to vector<8x128xbf16>
    %c0_3 = arith.constant 0 : index
    %c0_4 = arith.constant 0 : index
    %12 = vector.load %arg3[%c0_3, %c0_4] : memref<128x128xbf16, #tpu.memory_space<vmem>>, vector<128x128xbf16>
    %cst_5 = arith.constant dense<0.000000e+00> : vector<8x128xf32>
    %13 = tpu.matmul %11, %12, %cst_5 {dimension_numbers = #tpu.dot_dimension_numbers<[1], [0], [0], [1], [0, 0, 1, 1], [], []>} : vector<8x128xbf16>, vector<128x128xbf16>, vector<8x128xf32> -> vector<8x128xf32>
    %14 = arith.truncf %13 : vector<8x128xf32> to vector<8x128xbf16>
    %c0_6 = arith.constant 0 : index
    %c0_7 = arith.constant 0 : index
    %c0_8 = arith.constant 0 : index
    %15 = vector.load %arg4[%c0_6, %c0_7, %c0_8] : memref<1x8x128xbf16, #tpu.memory_space<vmem>>, vector<1x8x128xbf16>
    %16 = vector.shape_cast %15 : vector<1x8x128xbf16> to vector<8x128xbf16>
    %17 = vector.shape_cast %14 : vector<8x128xbf16> to vector<1x8x128xbf16>
    tpu.vector_store %arg4[%c0_6, %c0_7, %c0_8], %17 {strides = array<i32>} : memref<1x8x128xbf16, #tpu.memory_space<vmem>>, vector<1x8x128xbf16>,
    %cst_9 = arith.constant 1.000000e+01 : f32
    %18 = vector.broadcast %cst_9 : f32 to vector<8x128xf32>
    %19 = arith.mulf %13, %18 : vector<8x128xf32>
    %cst_10 = arith.constant dense<0xFF800000> : vector<128xf32>
    %20 = vector.multi_reduction <maximumf>, %19, %cst_10 [0] : vector<8x128xf32> to vector<128xf32>
    %21 = vector.shape_cast %20 : vector<128xf32> to vector<1x128xf32>
    %22 = vector.broadcast %21 : vector<1x128xf32> to vector<8x128xf32>
    %23 = arith.subf %19, %22 : vector<8x128xf32>
    %24 = math.exp %23 : vector<8x128xf32>
    %cst_11 = arith.constant dense<0.000000e+00> : vector<128xf32>
    %25 = vector.multi_reduction <add>, %24, %cst_11 [0] : vector<8x128xf32> to vector<128xf32>
    %26 = vector.shape_cast %25 : vector<128xf32> to vector<1x128xf32>
    %27 = vector.broadcast %26 : vector<1x128xf32> to vector<8x128xf32>
    %28 = arith.divf %24, %27 : vector<8x128xf32>
    %c0_12 = arith.constant 0 : index
    %c0_13 = arith.constant 0 : index
    %c0_14 = arith.constant 0 : index
    %29 = vector.load %arg5[%c0_12, %c0_13, %c0_14] : memref<1x8x128xf32, #tpu.memory_space<vmem>>, vector<1x8x128xf32>
    %30 = vector.shape_cast %29 : vector<1x8x128xf32> to vector<8x128xf32>
    %31 = vector.shape_cast %28 : vector<8x128xf32> to vector<1x8x128xf32>
    tpu.vector_store %arg5[%c0_12, %c0_13, %c0_14], %31 {strides = array<i32>} : memref<1x8x128xf32, #tpu.memory_space<vmem>>, vector<1x8x128xf32>,
    return
  }
  func.func @transform_0(%arg0: i32, %arg1: i32) -> (i32, i32, i32) {
    %c0_i32 = arith.constant 0 : i32
    %c0_i32_0 = arith.constant 0 : i32
    %c0_i32_1 = arith.constant 0 : i32
    return %arg0, %c0_i32, %c0_i32_0 : i32, i32, i32
  }
  func.func @transform_1(%arg0: i32, %arg1: i32) -> (i32, i32) {
    %c0_i32 = arith.constant 0 : i32
    %c0_i32_0 = arith.constant 0 : i32
    return %c0_i32, %arg1 : i32, i32
  }
  func.func @transform_2(%arg0: i32, %arg1: i32) -> (i32, i32, i32) {
    %c0_i32 = arith.constant 0 : i32
    %c0_i32_0 = arith.constant 0 : i32
    return %arg0, %c0_i32, %arg1 : i32, i32, i32
  }
  func.func @transform_3(%arg0: i32, %arg1: i32) -> (i32, i32, i32) {
    %c0_i32 = arith.constant 0 : i32
    %c0_i32_0 = arith.constant 0 : i32
    return %arg0, %c0_i32, %arg1 : i32, i32, i32
  }
}

</mosaic_0001>

<llo_original>
// kernel: _lambda_.18
$region0: #{_lambda_.18}
  #allocation0 [shape = 'u32[]', space=smem, size = 0x4, offset = 0x4, fixed_abs, tag = 'smem constant byte address 0x4 - core index']
  #allocation1 [shape = 'u32[144,128]{1,0:T(1,128)}', space=vmem, size = 0x12000, scoped, tag = 'internal scratch']
  #allocation2 [shape = 'f32[16,128]{1,0:T(8,128)}', space=vmem, size = 0x2000, scoped, tag = 'scratch operand']
  #allocation3 [shape = 'bf16[16,128]{1,0:T(16,128)(2,1)}', space=vmem, size = 0x1000, scoped, tag = 'scratch operand']
  %s0 = inlined_call_operand.vmem [shape: bf16[16,128], index: 0, kind: input, shape index: {}]
  %s1 = inlined_call_operand.vmem [shape: f32[1,128], index: 1, kind: input, shape index: {}]
  %s2 = inlined_call_operand.vmem [shape: f32[1,128], index: 2, kind: input, shape index: {}]
  %s3 = inlined_call_operand.vmem [shape: bf16[128,384], index: 3, kind: input, shape index: {}]
  %s4 = inlined_call_operand.vmem [shape: f32[1,384], index: 4, kind: input, shape index: {}]
  %s5 = inlined_call_operand.vmem [shape: bf16[16,384], index: 5, kind: output, shape index: {}]
  %s6 = sld [smem:[#allocation0]]
  $region143: #{_lambda_.18} parent=0
    _
  %s8 = ssub.s32 1, %s6
  %s9 = scalar_select 0, %s8, %s6
  $region1: #{_lambda_.18} parent=0
    #allocation4 [shape = 'u8[65536]{0}', space=vmem, size = 0x10000, scoped, tag = 'input window, operand 3']
    #allocation5 [shape = 'u8[8192]{0}', space=vmem, size = 0x2000, scoped, tag = 'output window, operand 0']
    loop: start=0, step=1, limit=5
    $region2: #{_lambda_.18} parent=1 // loop_pre_header
      _
    $region3: #{_lambda_.18} parent=1 // loop_header
      %s11 = sphi 0, %s15
      %p12 = scmp.ge.s32.totalorder %s11, 5
      %s18 = sphi 0, %s37
      %s19 = sphi 0, %s33
      %s20 = sphi 0, %s29
      %s21 = sphi 0, %s18
      %s22 = sphi 0, %s19
      %s23 = sphi 0, %s20
      %s24 = sphi 0, %s21
      %s25 = sphi 0, %s22
      %s26 = sphi 0, %s23
      %s40 = sphi 0, %s42
      %s43 = sphi 0, %s40
      %s44 = sphi 0, %s43
      %s60 = sphi 0, %s44
      %s64 = sphi 0, %s64
      %s66 = sphi 0, %s64
      %s67 = sphi 0, %s66
      %s81 = sphi 0, %s67
      %s85 = sphi 0, %s85
      %s87 = sphi 0, %s85
      %s88 = sphi 0, %s87
      %s102 = sphi 0, %s88
      %s110 = sphi 0, %s112
      %s113 = sphi 0, %s110
      %s114 = sphi 0, %s113
      %s130 = sphi 0, %s114
      %s136 = sphi 0, %s138
      %s139 = sphi 0, %s136
      %s140 = sphi 0, %s139
      %s156 = sphi 0, %s140
      %s164 = sphi 0, %s166
      %s167 = sphi 0, %s164
      %s168 = sphi 0, %s167
      %s184 = sphi 0, %s168
    $region4: #{_lambda_.18} parent=1 // loop_header_branch
      %14 = sbr.rel (%p12) target = $region8
    $region5: #{_lambda_.18} parent=1 // loop_body
      %s16 = ssub.s32 %s11, 1
      %s17 = ssub.s32 %s11, 2
      %s27 = sadd.s32 1, %s20
      %p28 = scmp.ge.s32.totalorder %s27, 1
      %s29 = scalar_select %p28, 0, %s27
      %s30 = sadd.s32 1, %s19
      %s31 = scalar_select %p28, %s30, %s19
      %p32 = scmp.ge.s32.totalorder %s31, 3
      %s33 = scalar_select %p32, 0, %s31
      %s34 = sadd.s32 1, %s18
      %s35 = scalar_select %p32, %s34, %s18
      %p36 = scmp.ge.s32.totalorder %s35, 1
      %s37 = scalar_select %p36, 0, %s35
      %s38 = ssub.s32 %s18, %s37
      %p39 = scmp.eq.s32.totalorder %s38, 0
      %s41 = sadd.s32 %s40, 1
      %s42 = scalar_select %p39, %s40, %s41
      %p45 = pneg %p39
      %p46 = scmp.eq.s32.totalorder %s11, 2
      %p47 = por %p45, %p46
      %p48 = scmp.ne.s32.totalorder %s40, %s43
      %p49 = scmp.eq.s32.totalorder %s11, 0
      %p50 = por %p48, %p49
      %p51 = scmp.ne.s32.totalorder %s40, %s43
      %p52 = scmp.eq.s32.totalorder %s16, 2
      %p53 = por %p51, %p52
      %p54 = scmp.ne.s32.totalorder %s43, %s44
      %p55 = scmp.eq.s32.totalorder %s16, 0
      %p56 = por %p54, %p55
      %p57 = scmp.ne.s32.totalorder %s43, %s44
      %p58 = scmp.eq.s32.totalorder %s17, 2
      %p59 = por %p57, %p58
      %p61 = scmp.ne.s32.totalorder %s44, %s60
      %p62 = scmp.eq.s32.totalorder %s17, 0
      %p63 = por %p61, %p62
      %s65 = sadd.s32 %s64, 1
      %p68 = scmp.eq.s32.totalorder %s11, 2
      %p69 = scmp.ne.s32.totalorder %s64, %s66
      %p70 = scmp.eq.s32.totalorder %s11, 0
      %p71 = por %p69, %p70
      %p72 = scmp.ne.s32.totalorder %s64, %s66
      %p73 = scmp.eq.s32.totalorder %s16, 2
      %p74 = por %p72, %p73
      %p75 = scmp.ne.s32.totalorder %s66, %s67
      %p76 = scmp.eq.s32.totalorder %s16, 0
      %p77 = por %p75, %p76
      %p78 = scmp.ne.s32.totalorder %s66, %s67
      %p79 = scmp.eq.s32.totalorder %s17, 2
      %p80 = por %p78, %p79
      %p82 = scmp.ne.s32.totalorder %s67, %s81
      %p83 = scmp.eq.s32.totalorder %s17, 0
      %p84 = por %p82, %p83
      %s86 = sadd.s32 %s85, 1
      %p89 = scmp.eq.s32.totalorder %s11, 2
      %p90 = scmp.ne.s32.totalorder %s85, %s87
      %p91 = scmp.eq.s32.totalorder %s11, 0
      %p92 = por %p90, %p91
      %p93 = scmp.ne.s32.totalorder %s85, %s87
      %p94 = scmp.eq.s32.totalorder %s16, 2
      %p95 = por %p93, %p94
      %p96 = scmp.ne.s32.totalorder %s87, %s88
      %p97 = scmp.eq.s32.totalorder %s16, 0
      %p98 = por %p96, %p97
      %p99 = scmp.ne.s32.totalorder %s87, %s88
      %p100 = scmp.eq.s32.totalorder %s17, 2
      %p101 = por %p99, %p100
      %p103 = scmp.ne.s32.totalorder %s88, %s102
      %p104 = scmp.eq.s32.totalorder %s17, 0
      %p105 = por %p103, %p104
      %s106 = ssub.s32 %s20, %s29
      %s107 = ssub.s32 %s19, %s33
      %s108 = sor.u32 %s106, %s107
      %p109 = scmp.eq.s32.totalorder %s108, 0
      %s111 = sadd.s32 %s110, 1
      %s112 = scalar_select %p109, %s110, %s111
      %p115 = pneg %p109
      %p116 = scmp.eq.s32.totalorder %s11, 2
      %p117 = por %p115, %p116
      %p118 = scmp.ne.s32.totalorder %s110, %s113
      %p119 = scmp.eq.s32.totalorder %s11, 0
      %p120 = por %p118, %p119
      %p121 = scmp.ne.s32.totalorder %s110, %s113
      %p122 = scmp.eq.s32.totalorder %s16, 2
      %p123 = por %p121, %p122
      %p124 = scmp.ne.s32.totalorder %s113, %s114
      %p125 = scmp.eq.s32.totalorder %s16, 0
      %p126 = por %p124, %p125
      %p127 = scmp.ne.s32.totalorder %s113, %s114
      %p128 = scmp.eq.s32.totalorder %s17, 2
      %p129 = por %p127, %p128
      %p131 = scmp.ne.s32.totalorder %s114, %s130
      %p132 = scmp.eq.s32.totalorder %s17, 0
      %p133 = por %p131, %p132
      %s134 = ssub.s32 %s19, %s33
      %p135 = scmp.eq.s32.totalorder %s134, 0
      %s137 = sadd.s32 %s136, 1
      %s138 = scalar_select %p135, %s136, %s137
      %p141 = pneg %p135
      %p142 = scmp.eq.s32.totalorder %s11, 2
      %p143 = por %p141, %p142
      %p144 = scmp.ne.s32.totalorder %s136, %s139
      %p145 = scmp.eq.s32.totalorder %s11, 0
      %p146 = por %p144, %p145
      %p147 = scmp.ne.s32.totalorder %s136, %s139
      %p148 = scmp.eq.s32.totalorder %s16, 2
      %p149 = por %p147, %p148
      %p150 = scmp.ne.s32.totalorder %s139, %s140
      %p151 = scmp.eq.s32.totalorder %s16, 0
      %p152 = por %p150, %p151
      %p153 = scmp.ne.s32.totalorder %s139, %s140
      %p154 = scmp.eq.s32.totalorder %s17, 2
      %p155 = por %p153, %p154
      %p157 = scmp.ne.s32.totalorder %s140, %s156
      %p158 = scmp.eq.s32.totalorder %s17, 0
      %p159 = por %p157, %p158
      %s160 = ssub.s32 %s18, %s37
      %s161 = ssub.s32 %s19, %s33
      %s162 = sor.u32 %s160, %s161
      %p163 = scmp.eq.s32.totalorder %s162, 0
      %s165 = sadd.s32 %s164, 1
      %s166 = scalar_select %p163, %s164, %s165
      %p169 = pneg %p163
      %p170 = scmp.eq.s32.totalorder %s11, 2
      %p171 = por %p169, %p170
      %p172 = scmp.ne.s32.totalorder %s164, %s167
      %p173 = scmp.eq.s32.totalorder %s11, 0
      %p174 = por %p172, %p173
      %p175 = scmp.ne.s32.totalorder %s164, %s167
      %p176 = scmp.eq.s32.totalorder %s16, 2
      %p177 = por %p175, %p176
      %p178 = scmp.ne.s32.totalorder %s167, %s168
      %p179 = scmp.eq.s32.totalorder %s16, 0
      %p180 = por %p178, %p179
      %p181 = scmp.ne.s32.totalorder %s167, %s168
      %p182 = scmp.eq.s32.totalorder %s17, 2
      %p183 = por %p181, %p182
      %p185 = scmp.ne.s32.totalorder %s168, %s184
      %p186 = scmp.eq.s32.totalorder %s17, 0
      %p187 = por %p185, %p186
      %p188 = scmp.le.s32.totalorder 1, %s11
      %p189 = scmp.lt.s32.totalorder %s11, 4
      %p190 = pnand %p188, %p189
      %p191 = pneg %p190
      // Predicated region
      $region9: #{_lambda_.18} parent=5 // pred_check
        _
      $region10: #{_lambda_.18} parent=5 // pred_check_branch
        %193 = sbr.rel (%p190) target = $region12
      $region11: #{_lambda_.18} parent=5 // pred_region
        %s194 = ssub.s32 %s11, 1
        // Predicated region
        $region13: #{_lambda_.18} parent=11 // pred_check
          %p195 = pneg %p56
        $region14: #{_lambda_.18} parent=11 // pred_check_branch
          %197 = sbr.rel (%p195) target = $region16
        $region15: #{_lambda_.18} parent=11 // pred_region
          %s198 = smul.u32 2, %s21
          %p199 = scmp.lt.s32.totalorder %s198, 1
          %s200 = scalar_select %p199, %s198, 1
          %s201 = smul.addr %s200, 4
          %s202 = scalar_lea.vmem %s0, %s201
          %s203 = smul.u32 2, %s21
        $region16: #{_lambda_.18} parent=11 // pred_fallthru
          _
        // Predicated region
        $region17: #{_lambda_.18} parent=11 // pred_check
          %p204 = pneg %p77
        $region18: #{_lambda_.18} parent=11 // pred_check_branch
          %206 = sbr.rel (%p204) target = $region20
        $region19: #{_lambda_.18} parent=11 // pred_region
          _
        $region20: #{_lambda_.18} parent=11 // pred_fallthru
          _
        // Predicated region
        $region21: #{_lambda_.18} parent=11 // pred_check
          %p207 = pneg %p98
        $region22: #{_lambda_.18} parent=11 // pred_check_branch
          %209 = sbr.rel (%p207) target = $region24
        $region23: #{_lambda_.18} parent=11 // pred_region
          _
        $region24: #{_lambda_.18} parent=11 // pred_fallthru
          _
      $region12: #{_lambda_.18} parent=5 // pred_fallthru
        _
      %p210 = scmp.lt.s32.totalorder %s11, 3
      // Predicated region
      $region25: #{_lambda_.18} parent=5 // pred_check
        %p211 = pneg %p210
      $region26: #{_lambda_.18} parent=5 // pred_check_branch
        %213 = sbr.rel (%p211) target = $region28
      $region27: #{_lambda_.18} parent=5 // pred_region
        // Predicated region
        $region29: #{_lambda_.18} parent=27 // pred_check
          %p214 = pneg %p120
        $region30: #{_lambda_.18} parent=27 // pred_check_branch
          %216 = sbr.rel (%p214) target = $region32
        $region31: #{_lambda_.18} parent=27 // pred_region
          %s217 = sand.u32 %s110, 1
          %s218 = sand.u32 %s110, 1
          %s219 = smul.addr %s218, 64
          %s220 = scalar_lea.vmem [#allocation4], %s219
          %s221 = smul.u32 16, %s20
          %s222 = smul.addr %s221, 3
          %s223 = sadd.s32 %s19, %s222
          %s224 = smul.addr %s223, 4
          %s225 = scalar_lea.vmem %s3, %s224
          // Predicated region
          $region33: #{_lambda_.18} parent=31 // pred_check
            _
          $region34: #{_lambda_.18} parent=31 // pred_check_branch
            %227 = sbr.rel (0) target = $region36
          $region35: #{_lambda_.18} parent=31 // pred_region
            // Predicated region
            $region37: #{_lambda_.18} parent=35 // pred_check
              _
            $region38: #{_lambda_.18} parent=35 // pred_check_branch
              %229 = sbr.rel target = $region40
            $region39: #{_lambda_.18} parent=35 // pred_region
              // Predicated region
              $region52: #{_lambda_.18} parent=39 // pred_check
                _
              $region53: #{_lambda_.18} parent=39 // pred_check_branch
                %274 = sbr.rel (0) target = $region55
              $region54: #{_lambda_.18} parent=39 // pred_region
                loop: start=0, step=1, limit=1
                $region56: #{_lambda_.18} parent=54 // loop_pre_header
                  _
                $region57: #{_lambda_.18} parent=54 // loop_header
                  %s276 = sphi 0, %s280
                  %p277 = scmp.ge.s32.totalorder %s276, 1
                  %s281 = sphi %s225, %s225
                  %s282 = sphi %s220, %s220
                $region58: #{_lambda_.18} parent=54 // loop_header_branch
                  %279 = sbr.rel (%p277) target = $region62
                $region59: #{_lambda_.18} parent=54 // loop_body
                  _
                $region60: #{_lambda_.18} parent=54 // loop_footer
                  %s280 = sadd.s32 1, %s276
                $region61: #{_lambda_.18} parent=54 // loop_footer_branch
                  %275 = sbr.rel target = $region57
                $region62: #{_lambda_.18} parent=54 // loop_exit
                  _
                loop: start=0, step=1, limit=1
                $region63: #{_lambda_.18} parent=54 // loop_pre_header
                  _
                $region64: #{_lambda_.18} parent=54 // loop_header
                  %s285 = sphi 0, %s289
                  %p286 = scmp.ge.s32.totalorder %s285, 1
                  %s290 = sphi %s225, %s225
                  %s291 = sphi %s220, %s220
                $region65: #{_lambda_.18} parent=54 // loop_header_branch
                  %288 = sbr.rel (%p286) target = $region69
                $region66: #{_lambda_.18} parent=54 // loop_body
                  %v292 = vld [vmem:[%s290] sm:$0xf]
                  %293 = vst [vmem:[%s291] sm:$0xf] %v292
                  %v294 = vld [vmem:[%s290 + $0xc] sm:$0xf]
                  %295 = vst [vmem:[%s291 + $0x4] sm:$0xf] %v294
                  %v296 = vld [vmem:[%s290 + $0x18] sm:$0xf]
                  %297 = vst [vmem:[%s291 + $0x8] sm:$0xf] %v296
                  %v298 = vld [vmem:[%s290 + $0x24] sm:$0xf]
                  %299 = vst [vmem:[%s291 + $0xc] sm:$0xf] %v298
                  %v300 = vld [vmem:[%s290 + $0x30] sm:$0xf]
                  %301 = vst [vmem:[%s291 + $0x10] sm:$0xf] %v300
                  %v302 = vld [vmem:[%s290 + $0x3c] sm:$0xf]
                  %303 = vst [vmem:[%s291 + $0x14] sm:$0xf] %v302
                  %v304 = vld [vmem:[%s290 + $0x48] sm:$0xf]
                  %305 = vst [vmem:[%s291 + $0x18] sm:$0xf] %v304
                  %v306 = vld [vmem:[%s290 + $0x54] sm:$0xf]
                  %307 = vst [vmem:[%s291 + $0x1c] sm:$0xf] %v306
                  %v308 = vld [vmem:[%s290 + $0x60] sm:$0xf]
                  %309 = vst [vmem:[%s291 + $0x20] sm:$0xf] %v308
                  %v310 = vld [vmem:[%s290 + $0x6c] sm:$0xf]
                  %311 = vst [vmem:[%s291 + $0x24] sm:$0xf] %v310
                  %v312 = vld [vmem:[%s290 + $0x78] sm:$0xf]
                  %313 = vst [vmem:[%s291 + $0x28] sm:$0xf] %v312
                  %v314 = vld [vmem:[%s290 + $0x84] sm:$0xf]
                  %315 = vst [vmem:[%s291 + $0x2c] sm:$0xf] %v314
                  %v316 = vld [vmem:[%s290 + $0x90] sm:$0xf]
                  %317 = vst [vmem:[%s291 + $0x30] sm:$0xf] %v316
                  %v318 = vld [vmem:[%s290 + $0x9c] sm:$0xf]
                  %319 = vst [vmem:[%s291 + $0x34] sm:$0xf] %v318
                  %v320 = vld [vmem:[%s290 + $0xa8] sm:$0xf]
                  %321 = vst [vmem:[%s291 + $0x38] sm:$0xf] %v320
                  %v322 = vld [vmem:[%s290 + $0xb4] sm:$0xf]
                  %323 = vst [vmem:[%s291 + $0x3c] sm:$0xf] %v322
                $region67: #{_lambda_.18} parent=54 // loop_footer
                  %s289 = sadd.s32 1, %s285
                $region68: #{_lambda_.18} parent=54 // loop_footer_branch
                  %284 = sbr.rel target = $region64
                $region69: #{_lambda_.18} parent=54 // loop_exit
                  _
              $region55: #{_lambda_.18} parent=39 // pred_fallthru
                _
            $region40: #{_lambda_.18} parent=35 // pred_fallthru
              _
            // Predicated region
            $region41: #{_lambda_.18} parent=35 // pred_check
              _
            $region42: #{_lambda_.18} parent=35 // pred_check_branch
              %231 = sbr.rel (0) target = $region44
            $region43: #{_lambda_.18} parent=35 // pred_region
              loop: start=0, step=1, limit=1
              $region45: #{_lambda_.18} parent=43 // loop_pre_header
                _
              $region46: #{_lambda_.18} parent=43 // loop_header
                %s234 = sphi 0, %s238
                %p235 = scmp.ge.s32.totalorder %s234, 1
                %s239 = sphi %s225, %s225
                %s240 = sphi %s220, %s220
              $region47: #{_lambda_.18} parent=43 // loop_header_branch
                %237 = sbr.rel (%p235) target = $region51
              $region48: #{_lambda_.18} parent=43 // loop_body
                %v241 = vld [vmem:[%s239] sm:$0xf]
                %242 = vst [vmem:[%s240] sm:$0xf] %v241
                %v243 = vld [vmem:[%s239 + $0xc] sm:$0xf]
                %244 = vst [vmem:[%s240 + $0x4] sm:$0xf] %v243
                %v245 = vld [vmem:[%s239 + $0x18] sm:$0xf]
                %246 = vst [vmem:[%s240 + $0x8] sm:$0xf] %v245
                %v247 = vld [vmem:[%s239 + $0x24] sm:$0xf]
                %248 = vst [vmem:[%s240 + $0xc] sm:$0xf] %v247
                %v249 = vld [vmem:[%s239 + $0x30] sm:$0xf]
                %250 = vst [vmem:[%s240 + $0x10] sm:$0xf] %v249
                %v251 = vld [vmem:[%s239 + $0x3c] sm:$0xf]
                %252 = vst [vmem:[%s240 + $0x14] sm:$0xf] %v251
                %v253 = vld [vmem:[%s239 + $0x48] sm:$0xf]
                %254 = vst [vmem:[%s240 + $0x18] sm:$0xf] %v253
                %v255 = vld [vmem:[%s239 + $0x54] sm:$0xf]
                %256 = vst [vmem:[%s240 + $0x1c] sm:$0xf] %v255
                %v257 = vld [vmem:[%s239 + $0x60] sm:$0xf]
                %258 = vst [vmem:[%s240 + $0x20] sm:$0xf] %v257
                %v259 = vld [vmem:[%s239 + $0x6c] sm:$0xf]
                %260 = vst [vmem:[%s240 + $0x24] sm:$0xf] %v259
                %v261 = vld [vmem:[%s239 + $0x78] sm:$0xf]
                %262 = vst [vmem:[%s240 + $0x28] sm:$0xf] %v261
                %v263 = vld [vmem:[%s239 + $0x84] sm:$0xf]
                %264 = vst [vmem:[%s240 + $0x2c] sm:$0xf] %v263
                %v265 = vld [vmem:[%s239 + $0x90] sm:$0xf]
                %266 = vst [vmem:[%s240 + $0x30] sm:$0xf] %v265
                %v267 = vld [vmem:[%s239 + $0x9c] sm:$0xf]
                %268 = vst [vmem:[%s240 + $0x34] sm:$0xf] %v267
                %v269 = vld [vmem:[%s239 + $0xa8] sm:$0xf]
                %270 = vst [vmem:[%s240 + $0x38] sm:$0xf] %v269
                %v271 = vld [vmem:[%s239 + $0xb4] sm:$0xf]
                %272 = vst [vmem:[%s240 + $0x3c] sm:$0xf] %v271
              $region49: #{_lambda_.18} parent=43 // loop_footer
                %s238 = sadd.s32 1, %s234
              $region50: #{_lambda_.18} parent=43 // loop_footer_branch
                %233 = sbr.rel target = $region46
              $region51: #{_lambda_.18} parent=43 // loop_exit
                _
            $region44: #{_lambda_.18} parent=35 // pred_fallthru
              _
          $region36: #{_lambda_.18} parent=31 // pred_fallthru
            _
          %324 = vnop
        $region32: #{_lambda_.18} parent=27 // pred_fallthru
          _
        // Predicated region
        $region70: #{_lambda_.18} parent=27 // pred_check
          %p325 = pneg %p146
        $region71: #{_lambda_.18} parent=27 // pred_check_branch
          %327 = sbr.rel (%p325) target = $region73
        $region72: #{_lambda_.18} parent=27 // pred_region
          %p328 = scmp.lt.s32.totalorder %s19, 2
          %s329 = scalar_select %p328, %s19, 2
          %s330 = scalar_lea.vmem %s4, %s329
        $region73: #{_lambda_.18} parent=27 // pred_fallthru
          _
      $region28: #{_lambda_.18} parent=5 // pred_fallthru
        _
      %p331 = scmp.le.s32.totalorder 1, %s11
      %p332 = scmp.lt.s32.totalorder %s11, 4
      %p333 = pnand %p331, %p332
      %p334 = pneg %p333
      // Predicated region
      $region74: #{_lambda_.18} parent=5 // pred_check
        _
      $region75: #{_lambda_.18} parent=5 // pred_check_branch
        %336 = sbr.rel (%p333) target = $region77
      $region76: #{_lambda_.18} parent=5 // pred_region
        %s337 = ssub.s32 %s11, 1
        %s338 = sand.u32 %s113, 1
        %s339 = sand.u32 %s113, 1
        %s340 = smul.addr %s339, 64
        %s341 = scalar_lea.vmem [#allocation4], %s340
        // Predicated region
        $region78: #{_lambda_.18} parent=76 // pred_check
          %p342 = pneg %p126
        $region79: #{_lambda_.18} parent=76 // pred_check_branch
          %344 = sbr.rel (%p342) target = $region81
        $region80: #{_lambda_.18} parent=76 // pred_region
          _
        $region81: #{_lambda_.18} parent=76 // pred_fallthru
          _
        %s345 = smul.u32 2, %s21
        %p346 = scmp.lt.s32.totalorder %s345, 1
        %s347 = scalar_select %p346, %s345, 1
        %s348 = smul.addr %s347, 4
        %s349 = scalar_lea.vmem %s0, %s348
        %p350 = pneg %p56
        %p351 = pneg %p53
        %p352 = pneg %p77
        %p353 = pneg %p74
        %p354 = pneg %p98
        %p355 = pneg %p95
        %s356 = sand.u32 %s113, 1
        %s357 = sand.u32 %s113, 1
        %s358 = smul.addr %s357, 64
        %s359 = scalar_lea.vmem [#allocation4], %s358
        %p360 = pneg %p126
        %p361 = pneg %p123
        %p362 = scmp.lt.s32.totalorder %s22, 2
        %s363 = scalar_select %p362, %s22, 2
        %s364 = scalar_lea.vmem %s4, %s363
        %p365 = pneg %p152
        %p366 = pneg %p149
        %p367 = pneg %p180
        %p368 = pneg %p177
        %s369 = sand.u32 %s167, 1
        %s370 = sand.u32 %s167, 1
        %s371 = smul.addr %s370, 8
        %s372 = scalar_lea.vmem [#allocation5], %s371
        %s373 = smul.u32 2, %s21
        %p374 = scmp.lt.s32.totalorder %s373, 1
        %s375 = scalar_select %p374, %s373, 1
        %s376 = smul.addr %s375, 4
        %s377 = scalar_lea.vmem %s0, %s376
        %s378 = smul.u32 2, %s21
        %s379 = smul.u32 16, %s23
        %p380 = scmp.lt.s32.totalorder %s22, 2
        %s381 = scalar_select %p380, %s22, 2
        %s382 = scalar_lea.vmem %s4, %s381
        %s383 = smul.u32 2, %s21
        %p385 = scmp.eq.s32.totalorder %s23, 0
        // Predicated region
        $region82: #{_lambda_.18} parent=76 // pred_check
          %p386 = pneg %p385
        $region83: #{_lambda_.18} parent=76 // pred_check_branch
          %388 = sbr.rel (%p386) target = $region85
        $region84: #{_lambda_.18} parent=76 // pred_region
          %389 = vst [vmem:[#allocation2] sm:$0xff] 0.0
          %390 = vst [vmem:[#allocation2 + $0x8] sm:$0xff] 0.0
        $region85: #{_lambda_.18} parent=76 // pred_fallthru
          _
        %p391 = scmp.eq.s32.totalorder %s22, 0
        %p392 = pnand %p391, %p385
        %p393 = pneg %p392
        // Predicated region
        $region86: #{_lambda_.18} parent=76 // pred_check
          _
        $region87: #{_lambda_.18} parent=76 // pred_check_branch
          %395 = sbr.rel (%p392) target = $region89
        $region88: #{_lambda_.18} parent=76 // pred_region
          %v396 = vld [vmem:[%s377] sm:$0xf]
          %v397 = vld [vmem:[%s377 + $0x4] sm:$0xf]
          %v398 = vunpack.c.l.bf16 %v396
          %v399 = vunpack.c.l.bf16 %v397
          %400 = vadd.xlane.f32.xlu0 %v398
          %v401 = vpop.xlane.xlu0 %400
          %402 = vadd.xlane.f32.xlu0 %v399
          %v403 = vpop.xlane.xlu0 %402
          %v404 = vrcp.pop 128.0
          %v405 = vmul.f32 %v401, %v404
          %v406 = vmul.f32 %v403, %v404
          %v407 = vsub.f32 %v398, %v405
          %v408 = vsub.f32 %v399, %v406
          %v409 = vmul.f32 %v407, %v407
          %v410 = vmul.f32 %v408, %v408
          %411 = vadd.xlane.f32.xlu0 %v409
          %v412 = vpop.xlane.xlu0 %411
          %413 = vadd.xlane.f32.xlu0 %v410
          %v414 = vpop.xlane.xlu0 %413
          %v415 = vmul.f32 %v412, %v404
          %v416 = vmul.f32 %v414, %v404
          %v417 = vadd.f32 %v415, 1e-05
          %v418 = vadd.f32 %v416, 1e-05
          %v419 = vrsqrt.pop %v417
          %v420 = vrsqrt.pop %v418
          %v421 = vmul.f32 %v407, %v419
          %v422 = vmul.f32 %v408, %v420
          %v423 = vld [vmem:[%s1] sm:$0x1]
          %v425 = vlaneseq
          %v426 = vshrl.u32 %v425, 7
          %v427 = vsub.s32 0, %v426
          %v428 = vrot.slane %v423, %v427
          %v430 = vmul.f32 %v421, %v428
          %v431 = vmul.f32 %v422, %v428
          %v432 = vld [vmem:[%s2] sm:$0x1]
          %v434 = vlaneseq
          %v435 = vshrl.u32 %v434, 7
          %v436 = vsub.s32 0, %v435
          %v437 = vrot.slane %v432, %v436
          %v439 = vadd.f32 %v430, %v437
          %v440 = vadd.f32 %v431, %v437
          %v441 = vpack.c.bf16 %v440, %v439
          %442 = vst [vmem:[#allocation3] sm:$0xff] %v441
        $region89: #{_lambda_.18} parent=76 // pred_fallthru
          _
        %v443 = vld [vmem:[#allocation3] sm:$0xff]
        %v444 = vld [vmem:[#allocation2] sm:$0xff]
        %v445 = vld [vmem:[#allocation2 + $0x8] sm:$0xff]
        %v446 = vld [vmem:[%s341] sm:$0xf]
        %v447 = vld [vmem:[%s341 + $0x4] sm:$0xf]
        %v448 = vld [vmem:[%s341 + $0x8] sm:$0xf]
        %v449 = vld [vmem:[%s341 + $0xc] sm:$0xf]
        %v450 = vld [vmem:[%s341 + $0x10] sm:$0xf]
        %v451 = vld [vmem:[%s341 + $0x14] sm:$0xf]
        %v452 = vld [vmem:[%s341 + $0x18] sm:$0xf]
        %v453 = vld [vmem:[%s341 + $0x1c] sm:$0xf]
        %v454 = vld [vmem:[%s341 + $0x20] sm:$0xf]
        %v455 = vld [vmem:[%s341 + $0x24] sm:$0xf]
        %v456 = vld [vmem:[%s341 + $0x28] sm:$0xf]
        %v457 = vld [vmem:[%s341 + $0x2c] sm:$0xf]
        %v458 = vld [vmem:[%s341 + $0x30] sm:$0xf]
        %v459 = vld [vmem:[%s341 + $0x34] sm:$0xf]
        %v460 = vld [vmem:[%s341 + $0x38] sm:$0xf]
        %v461 = vld [vmem:[%s341 + $0x3c] sm:$0xf]
        %v478 = vunpack.c.l.b16 %v446
        %v479 = vunpack.c.l.b16 %v447
        %v480 = vunpack.c.l.b16 %v448
        %v481 = vunpack.c.l.b16 %v449
        %v482 = vunpack.c.l.b16 %v450
        %v483 = vunpack.c.l.b16 %v451
        %v484 = vunpack.c.l.b16 %v452
        %v485 = vunpack.c.l.b16 %v453
        %v486 = vunpack.c.l.b16 %v454
        %v487 = vunpack.c.l.b16 %v455
        %v488 = vunpack.c.l.b16 %v456
        %v489 = vunpack.c.l.b16 %v457
        %v490 = vunpack.c.l.b16 %v458
        %v491 = vunpack.c.l.b16 %v459
        %v492 = vunpack.c.l.b16 %v460
        %v493 = vunpack.c.l.b16 %v461
        %v494 = vpack.c.b16 %v479, %v478
        %v495 = vpack.c.b16 %v481, %v480
        %v496 = vpack.c.b16 %v483, %v482
        %v497 = vpack.c.b16 %v485, %v484
        %v498 = vpack.c.b16 %v487, %v486
        %v499 = vpack.c.b16 %v489, %v488
        %v500 = vpack.c.b16 %v491, %v490
        %v501 = vpack.c.b16 %v493, %v492
        %510 = vmatprep.subr.bf16.mxu0 0
        %511 = vmatpush1.bf16.msra.mxu0 %v494
        %512 = vmatprep.subr.bf16.mxu0 0
        %513 = vmatpush1.bf16.msra.mxu0 %v495
        %514 = vmatprep.subr.bf16.mxu0 0
        %515 = vmatpush1.bf16.msra.mxu0 %v496
        %516 = vmatprep.subr.bf16.mxu0 0
        %517 = vmatpush1.bf16.msra.mxu0 %v497
        %518 = vmatprep.subr.bf16.mxu0 0
        %519 = vmatpush1.bf16.msra.mxu0 %v498
        %520 = vmatprep.subr.bf16.mxu0 0
        %521 = vmatpush1.bf16.msra.mxu0 %v499
        %522 = vmatprep.subr.bf16.mxu0 0
        %523 = vmatpush1.bf16.msra.mxu0 %v500
        %524 = vmatprep.subr.bf16.mxu0 0
        %525 = vmatpush1.bf16.msra.mxu0 %v501
        %526 = vmatprep.subr.bf16.mxu0 0
        %527 = vmatpush1.bf16.msra.mxu0 0
        %528 = vmatprep.subr.bf16.mxu0 0
        %529 = vmatpush1.bf16.msra.mxu0 0
        %530 = vmatprep.subr.bf16.mxu0 0
        %531 = vmatpush1.bf16.msra.mxu0 0
        %532 = vmatprep.subr.bf16.mxu0 0
        %533 = vmatpush1.bf16.msra.mxu0 0
        %534 = vmatprep.subr.bf16.mxu0 0
        %535 = vmatpush1.bf16.msra.mxu0 0
        %536 = vmatprep.subr.bf16.mxu0 0
        %537 = vmatpush1.bf16.msra.mxu0 0
        %538 = vmatprep.subr.bf16.mxu0 0
        %539 = vmatpush1.bf16.msra.mxu0 0
        %540 = vmatprep.subr.bf16.mxu0 0
        %541 = vmatpush1.bf16.msra.mxu0 0
        %542 = vmatprep.mubr.bf16.mxu0 0
        %543 = vmatmul.mubr.bf16.gmra.mrb[0].mxu0 %v443
        %v544 = vpop.f32.mrb[0].mxu0
        %v545 = vadd.f32 0.0, %v544
        %v546 = vpop.f32.mrb[0].mxu0
        %v547 = vpop.f32.mrb[0].mxu0
        %v548 = vadd.f32 0.0, %v547
        %v549 = vpop.f32.mrb[0].mxu0
        %550 = vdwg.mxu0
        %v551 = vadd.f32 %v444, %v545
        %v552 = vadd.f32 %v445, %v548
        %553 = vst [vmem:[#allocation2] sm:$0xff] %v551
        %554 = vst [vmem:[#allocation2 + $0x8] sm:$0xff] %v552
        // Predicated region
        $region90: #{_lambda_.18} parent=76 // pred_check
          %p555 = pneg %p385
        $region91: #{_lambda_.18} parent=76 // pred_check_branch
          %557 = sbr.rel (%p555) target = $region93
        $region92: #{_lambda_.18} parent=76 // pred_region
          %v558 = vld [vmem:[#allocation2] sm:$0xff]
          %v559 = vld [vmem:[#allocation2 + $0x8] sm:$0xff]
          %v560 = vld [vmem:[%s382] sm:$0x1]
          %v562 = vlaneseq
          %v563 = vshrl.u32 %v562, 7
          %v564 = vsub.s32 0, %v563
          %v565 = vrot.slane %v560, %v564
          %v567 = vadd.f32 %v558, %v565
          %v568 = vadd.f32 %v559, %v565
          %v569 = vpack.c.bf16 %v568, %v567
          %v571 = vunpack.c.l.b16 %v569
          %v572 = vunpack.c.h.b16 %v569
          %v573 = vpack.c.b16 %v571, %v571
          %v574 = vpack.c.b16 %v572, %v572
          %577 = vst [vmem:[%s372] sm:$0xf] %v573
          %578 = vst [vmem:[%s372 + $0x4] sm:$0xf] %v574
        $region93: #{_lambda_.18} parent=76 // pred_fallthru
          _
        %s579 = sand.u32 %s167, 1
        %s580 = sand.u32 %s167, 1
        %s581 = smul.addr %s580, 8
        %s582 = scalar_lea.vmem [#allocation5], %s581
        // Predicated region
        $region94: #{_lambda_.18} parent=76 // pred_check
          %p583 = pneg %p177
        $region95: #{_lambda_.18} parent=76 // pred_check_branch
          %585 = sbr.rel (%p583) target = $region97
        $region96: #{_lambda_.18} parent=76 // pred_region
          %s586 = smul.u32 2, %s21
          %s587 = smul.addr %s586, 3
          %s588 = sadd.s32 %s22, %s587
          %s589 = smul.addr %s588, 4
          %s590 = scalar_lea.vmem %s5, %s589
          // Predicated region
          $region98: #{_lambda_.18} parent=96 // pred_check
            _
          $region99: #{_lambda_.18} parent=96 // pred_check_branch
            %592 = sbr.rel (0) target = $region101
          $region100: #{_lambda_.18} parent=96 // pred_region
            // Predicated region
            $region102: #{_lambda_.18} parent=100 // pred_check
              _
            $region103: #{_lambda_.18} parent=100 // pred_check_branch
              %594 = sbr.rel target = $region105
            $region104: #{_lambda_.18} parent=100 // pred_region
              // Predicated region
              $region117: #{_lambda_.18} parent=104 // pred_check
                _
              $region118: #{_lambda_.18} parent=104 // pred_check_branch
                %611 = sbr.rel (0) target = $region120
              $region119: #{_lambda_.18} parent=104 // pred_region
                loop: start=0, step=1, limit=1
                $region121: #{_lambda_.18} parent=119 // loop_pre_header
                  _
                $region122: #{_lambda_.18} parent=119 // loop_header
                  %s613 = sphi 0, %s617
                  %p614 = scmp.ge.s32.totalorder %s613, 1
                  %s618 = sphi %s582, %s582
                  %s619 = sphi %s590, %s590
                $region123: #{_lambda_.18} parent=119 // loop_header_branch
                  %616 = sbr.rel (%p614) target = $region127
                $region124: #{_lambda_.18} parent=119 // loop_body
                  _
                $region125: #{_lambda_.18} parent=119 // loop_footer
                  %s617 = sadd.s32 1, %s613
                $region126: #{_lambda_.18} parent=119 // loop_footer_branch
                  %612 = sbr.rel target = $region122
                $region127: #{_lambda_.18} parent=119 // loop_exit
                  _
                loop: start=0, step=1, limit=1
                $region128: #{_lambda_.18} parent=119 // loop_pre_header
                  _
                $region129: #{_lambda_.18} parent=119 // loop_header
                  %s622 = sphi 0, %s626
                  %p623 = scmp.ge.s32.totalorder %s622, 1
                  %s627 = sphi %s582, %s582
                  %s628 = sphi %s590, %s590
                $region130: #{_lambda_.18} parent=119 // loop_header_branch
                  %625 = sbr.rel (%p623) target = $region134
                $region131: #{_lambda_.18} parent=119 // loop_body
                  %v629 = vld [vmem:[%s627] sm:$0xf]
                  %630 = vst [vmem:[%s628] sm:$0xf] %v629
                  %v631 = vld [vmem:[%s627 + $0x4] sm:$0xf]
                  %632 = vst [vmem:[%s628 + $0xc] sm:$0xf] %v631
                $region132: #{_lambda_.18} parent=119 // loop_footer
                  %s626 = sadd.s32 1, %s622
                $region133: #{_lambda_.18} parent=119 // loop_footer_branch
                  %621 = sbr.rel target = $region129
                $region134: #{_lambda_.18} parent=119 // loop_exit
                  _
              $region120: #{_lambda_.18} parent=104 // pred_fallthru
                _
            $region105: #{_lambda_.18} parent=100 // pred_fallthru
              _
            // Predicated region
            $region106: #{_lambda_.18} parent=100 // pred_check
              _
            $region107: #{_lambda_.18} parent=100 // pred_check_branch
              %596 = sbr.rel (0) target = $region109
            $region108: #{_lambda_.18} parent=100 // pred_region
              loop: start=0, step=1, limit=1
              $region110: #{_lambda_.18} parent=108 // loop_pre_header
                _
              $region111: #{_lambda_.18} parent=108 // loop_header
                %s599 = sphi 0, %s603
                %p600 = scmp.ge.s32.totalorder %s599, 1
                %s604 = sphi %s582, %s582
                %s605 = sphi %s590, %s590
              $region112: #{_lambda_.18} parent=108 // loop_header_branch
                %602 = sbr.rel (%p600) target = $region116
              $region113: #{_lambda_.18} parent=108 // loop_body
                %v606 = vld [vmem:[%s604] sm:$0xf]
                %607 = vst [vmem:[%s605] sm:$0xf] %v606
                %v608 = vld [vmem:[%s604 + $0x4] sm:$0xf]
                %609 = vst [vmem:[%s605 + $0xc] sm:$0xf] %v608
              $region114: #{_lambda_.18} parent=108 // loop_footer
                %s603 = sadd.s32 1, %s599
              $region115: #{_lambda_.18} parent=108 // loop_footer_branch
                %598 = sbr.rel target = $region111
              $region116: #{_lambda_.18} parent=108 // loop_exit
                _
            $region109: #{_lambda_.18} parent=100 // pred_fallthru
              _
          $region101: #{_lambda_.18} parent=96 // pred_fallthru
            _
          %633 = vnop
        $region97: #{_lambda_.18} parent=76 // pred_fallthru
          _
      $region77: #{_lambda_.18} parent=5 // pred_fallthru
        _
      %p634 = scmp.le.s32.totalorder 2, %s11
      // Predicated region
      $region135: #{_lambda_.18} parent=5 // pred_check
        %p635 = pneg %p634
      $region136: #{_lambda_.18} parent=5 // pred_check_branch
        %637 = sbr.rel (%p635) target = $region138
      $region137: #{_lambda_.18} parent=5 // pred_region
        %s638 = ssub.s32 %s11, 2
        // Predicated region
        $region139: #{_lambda_.18} parent=137 // pred_check
          %p639 = pneg %p183
        $region140: #{_lambda_.18} parent=137 // pred_check_branch
          %641 = sbr.rel (%p639) target = $region142
        $region141: #{_lambda_.18} parent=137 // pred_region
          %s642 = sand.u32 %s168, 1
          %s643 = sand.u32 %s168, 1
          %s644 = smul.addr %s643, 8
          %s645 = scalar_lea.vmem [#allocation5], %s644
        $region142: #{_lambda_.18} parent=137 // pred_fallthru
          _
      $region138: #{_lambda_.18} parent=5 // pred_fallthru
        _
    $region6: #{_lambda_.18} parent=1 // loop_footer
      %s15 = sadd.s32 1, %s11
    $region7: #{_lambda_.18} parent=1 // loop_footer_branch
      %10 = sbr.rel target = $region3
    $region8: #{_lambda_.18} parent=1 // loop_exit
      _

// kernel: _lambda_.17
$region0: #{_lambda_.17}
  #allocation0 [shape = 'u32[]', space=smem, size = 0x4, offset = 0x4, fixed_abs, tag = 'smem constant byte address 0x4 - core index']
  #allocation1 [shape = 'u32[144,128]{1,0:T(1,128)}', space=vmem, size = 0x12000, scoped, tag = 'internal scratch']
  #allocation2 [shape = 'f32[16,128]{1,0:T(8,128)}', space=vmem, size = 0x2000, scoped, tag = 'scratch operand']
  #allocation3 [shape = 'bf16[16,128]{1,0:T(16,128)(2,1)}', space=vmem, size = 0x1000, scoped, tag = 'scratch operand']
  %s0 = inlined_call_operand.vmem [shape: bf16[16,128], index: 0, kind: input, shape index: {}]
  %s1 = inlined_call_operand.vmem [shape: f32[1,128], index: 1, kind: input, shape index: {}]
  %s2 = inlined_call_operand.vmem [shape: f32[1,128], index: 2, kind: input, shape index: {}]
  %s3 = inlined_call_operand.vmem [shape: bf16[128,128], index: 3, kind: input, shape index: {}]
  %s4 = inlined_call_operand.vmem [shape: f32[1,128], index: 4, kind: input, shape index: {}]
  %s5 = inlined_call_operand.vmem [shape: bf16[16,128], index: 5, kind: output, shape index: {}]
  %s6 = sld [smem:[#allocation0]]
  $region42: #{_lambda_.17} parent=0
    _
  %s8 = ssub.s32 1, %s6
  %s9 = scalar_select 0, %s8, %s6
  // Predicated region
  $region2: #{_lambda_.17} parent=0 // pred_check
    _
  $region3: #{_lambda_.17} parent=0 // pred_check_branch
    %11 = sbr.rel (0) target = $region5
  $region4: #{_lambda_.17} parent=0 // pred_region
    _
  $region5: #{_lambda_.17} parent=0 // pred_fallthru
    _
  // Predicated region
  $region6: #{_lambda_.17} parent=0 // pred_check
    _
  $region7: #{_lambda_.17} parent=0 // pred_check_branch
    %13 = sbr.rel (0) target = $region9
  $region8: #{_lambda_.17} parent=0 // pred_region
    _
  $region9: #{_lambda_.17} parent=0 // pred_fallthru
    _
  // Predicated region
  $region10: #{_lambda_.17} parent=0 // pred_check
    _
  $region11: #{_lambda_.17} parent=0 // pred_check_branch
    %15 = sbr.rel (0) target = $region13
  $region12: #{_lambda_.17} parent=0 // pred_region
    _
  $region13: #{_lambda_.17} parent=0 // pred_fallthru
    _
  // Predicated region
  $region14: #{_lambda_.17} parent=0 // pred_check
    _
  $region15: #{_lambda_.17} parent=0 // pred_check_branch
    %17 = sbr.rel (0) target = $region17
  $region16: #{_lambda_.17} parent=0 // pred_region
    _
  $region17: #{_lambda_.17} parent=0 // pred_fallthru
    _
  // Predicated region
  $region18: #{_lambda_.17} parent=0 // pred_check
    _
  $region19: #{_lambda_.17} parent=0 // pred_check_branch
    %19 = sbr.rel (0) target = $region21
  $region20: #{_lambda_.17} parent=0 // pred_region
    _
  $region21: #{_lambda_.17} parent=0 // pred_fallthru
    _
  %p21 = scmp.eq.s32.totalorder 0, 0
  // Predicated region
  $region22: #{_lambda_.17} parent=0 // pred_check
    %p22 = pneg %p21
  $region23: #{_lambda_.17} parent=0 // pred_check_branch
    %24 = sbr.rel (%p22) target = $region25
  $region24: #{_lambda_.17} parent=0 // pred_region
    %25 = vst [vmem:[#allocation2] sm:$0xff] 0.0
    %26 = vst [vmem:[#allocation2 + $0x8] sm:$0xff] 0.0
  $region25: #{_lambda_.17} parent=0 // pred_fallthru
    _
  %p27 = scmp.eq.s32.totalorder 0, 0
  %p28 = pnand %p27, %p21
  %p29 = pneg %p28
  // Predicated region
  $region26: #{_lambda_.17} parent=0 // pred_check
    _
  $region27: #{_lambda_.17} parent=0 // pred_check_branch
    %31 = sbr.rel (%p28) target = $region29
  $region28: #{_lambda_.17} parent=0 // pred_region
    %v32 = vld [vmem:[%s0] sm:$0xf]
    %v33 = vld [vmem:[%s0 + $0x4] sm:$0xf]
    %v34 = vunpack.c.l.bf16 %v32
    %v35 = vunpack.c.l.bf16 %v33
    %36 = vadd.xlane.f32.xlu0 %v34
    %v37 = vpop.xlane.xlu0 %36
    %38 = vadd.xlane.f32.xlu0 %v35
    %v39 = vpop.xlane.xlu0 %38
    %v40 = vrcp.pop 128.0
    %v41 = vmul.f32 %v37, %v40
    %v42 = vmul.f32 %v39, %v40
    %v43 = vsub.f32 %v34, %v41
    %v44 = vsub.f32 %v35, %v42
    %v45 = vmul.f32 %v43, %v43
    %v46 = vmul.f32 %v44, %v44
    %47 = vadd.xlane.f32.xlu0 %v45
    %v48 = vpop.xlane.xlu0 %47
    %49 = vadd.xlane.f32.xlu0 %v46
    %v50 = vpop.xlane.xlu0 %49
    %v51 = vmul.f32 %v48, %v40
    %v52 = vmul.f32 %v50, %v40
    %v53 = vadd.f32 %v51, 1e-05
    %v54 = vadd.f32 %v52, 1e-05
    %v55 = vrsqrt.pop %v53
    %v56 = vrsqrt.pop %v54
    %v57 = vmul.f32 %v43, %v55
    %v58 = vmul.f32 %v44, %v56
    %v59 = vld [vmem:[%s1] sm:$0x1]
    %v61 = vlaneseq
    %v62 = vshrl.u32 %v61, 7
    %v63 = vsub.s32 0, %v62
    %v64 = vrot.slane %v59, %v63
    %v66 = vmul.f32 %v57, %v64
    %v67 = vmul.f32 %v58, %v64
    %v68 = vld [vmem:[%s2] sm:$0x1]
    %v70 = vlaneseq
    %v71 = vshrl.u32 %v70, 7
    %v72 = vsub.s32 0, %v71
    %v73 = vrot.slane %v68, %v72
    %v75 = vadd.f32 %v66, %v73
    %v76 = vadd.f32 %v67, %v73
    %v77 = vpack.c.bf16 %v76, %v75
    %78 = vst [vmem:[#allocation3] sm:$0xff] %v77
  $region29: #{_lambda_.17} parent=0 // pred_fallthru
    _
  %v79 = vld [vmem:[#allocation3] sm:$0xff]
  %v80 = vld [vmem:[#allocation2] sm:$0xff]
  %v81 = vld [vmem:[#allocation2 + $0x8] sm:$0xff]
  %v82 = vld [vmem:[%s3] sm:$0xf]
  %v83 = vld [vmem:[%s3 + $0x4] sm:$0xf]
  %v84 = vld [vmem:[%s3 + $0x8] sm:$0xf]
  %v85 = vld [vmem:[%s3 + $0xc] sm:$0xf]
  %v86 = vld [vmem:[%s3 + $0x10] sm:$0xf]
  %v87 = vld [vmem:[%s3 + $0x14] sm:$0xf]
  %v88 = vld [vmem:[%s3 + $0x18] sm:$0xf]
  %v89 = vld [vmem:[%s3 + $0x1c] sm:$0xf]
  %v90 = vld [vmem:[%s3 + $0x20] sm:$0xf]
  %v91 = vld [vmem:[%s3 + $0x24] sm:$0xf]
  %v92 = vld [vmem:[%s3 + $0x28] sm:$0xf]
  %v93 = vld [vmem:[%s3 + $0x2c] sm:$0xf]
  %v94 = vld [vmem:[%s3 + $0x30] sm:$0xf]
  %v95 = vld [vmem:[%s3 + $0x34] sm:$0xf]
  %v96 = vld [vmem:[%s3 + $0x38] sm:$0xf]
  %v97 = vld [vmem:[%s3 + $0x3c] sm:$0xf]
  %v114 = vunpack.c.l.b16 %v82
  %v115 = vunpack.c.l.b16 %v83
  %v116 = vunpack.c.l.b16 %v84
  %v117 = vunpack.c.l.b16 %v85
  %v118 = vunpack.c.l.b16 %v86
  %v119 = vunpack.c.l.b16 %v87
  %v120 = vunpack.c.l.b16 %v88
  %v121 = vunpack.c.l.b16 %v89
  %v122 = vunpack.c.l.b16 %v90
  %v123 = vunpack.c.l.b16 %v91
  %v124 = vunpack.c.l.b16 %v92
  %v125 = vunpack.c.l.b16 %v93
  %v126 = vunpack.c.l.b16 %v94
  %v127 = vunpack.c.l.b16 %v95
  %v128 = vunpack.c.l.b16 %v96
  %v129 = vunpack.c.l.b16 %v97
  %v130 = vpack.c.b16 %v115, %v114
  %v131 = vpack.c.b16 %v117, %v116
  %v132 = vpack.c.b16 %v119, %v118
  %v133 = vpack.c.b16 %v121, %v120
  %v134 = vpack.c.b16 %v123, %v122
  %v135 = vpack.c.b16 %v125, %v124
  %v136 = vpack.c.b16 %v127, %v126
  %v137 = vpack.c.b16 %v129, %v128
  %146 = vmatprep.subr.bf16.mxu0 0
  %147 = vmatpush1.bf16.msra.mxu0 %v130
  %148 = vmatprep.subr.bf16.mxu0 0
  %149 = vmatpush1.bf16.msra.mxu0 %v131
  %150 = vmatprep.subr.bf16.mxu0 0
  %151 = vmatpush1.bf16.msra.mxu0 %v132
  %152 = vmatprep.subr.bf16.mxu0 0
  %153 = vmatpush1.bf16.msra.mxu0 %v133
  %154 = vmatprep.subr.bf16.mxu0 0
  %155 = vmatpush1.bf16.msra.mxu0 %v134
  %156 = vmatprep.subr.bf16.mxu0 0
  %157 = vmatpush1.bf16.msra.mxu0 %v135
  %158 = vmatprep.subr.bf16.mxu0 0
  %159 = vmatpush1.bf16.msra.mxu0 %v136
  %160 = vmatprep.subr.bf16.mxu0 0
  %161 = vmatpush1.bf16.msra.mxu0 %v137
  %162 = vmatprep.subr.bf16.mxu0 0
  %163 = vmatpush1.bf16.msra.mxu0 0
  %164 = vmatprep.subr.bf16.mxu0 0
  %165 = vmatpush1.bf16.msra.mxu0 0
  %166 = vmatprep.subr.bf16.mxu0 0
  %167 = vmatpush1.bf16.msra.mxu0 0
  %168 = vmatprep.subr.bf16.mxu0 0
  %169 = vmatpush1.bf16.msra.mxu0 0
  %170 = vmatprep.subr.bf16.mxu0 0
  %171 = vmatpush1.bf16.msra.mxu0 0
  %172 = vmatprep.subr.bf16.mxu0 0
  %173 = vmatpush1.bf16.msra.mxu0 0
  %174 = vmatprep.subr.bf16.mxu0 0
  %175 = vmatpush1.bf16.msra.mxu0 0
  %176 = vmatprep.subr.bf16.mxu0 0
  %177 = vmatpush1.bf16.msra.mxu0 0
  %178 = vmatprep.mubr.bf16.mxu0 0
  %179 = vmatmul.mubr.bf16.gmra.mrb[0].mxu0 %v79
  %v180 = vpop.f32.mrb[0].mxu0
  %v181 = vadd.f32 0.0, %v180
  %v182 = vpop.f32.mrb[0].mxu0
  %v183 = vpop.f32.mrb[0].mxu0
  %v184 = vadd.f32 0.0, %v183
  %v185 = vpop.f32.mrb[0].mxu0
  %186 = vdwg.mxu0
  %v187 = vadd.f32 %v80, %v181
  %v188 = vadd.f32 %v81, %v184
  %189 = vst [vmem:[#allocation2] sm:$0xff] %v187
  %190 = vst [vmem:[#allocation2 + $0x8] sm:$0xff] %v188
  // Predicated region
  $region30: #{_lambda_.17} parent=0 // pred_check
    %p191 = pneg %p21
  $region31: #{_lambda_.17} parent=0 // pred_check_branch
    %193 = sbr.rel (%p191) target = $region33
  $region32: #{_lambda_.17} parent=0 // pred_region
    %v194 = vld [vmem:[#allocation2] sm:$0xff]
    %v195 = vld [vmem:[#allocation2 + $0x8] sm:$0xff]
    %v196 = vld [vmem:[%s4] sm:$0x1]
    %v198 = vlaneseq
    %v199 = vshrl.u32 %v198, 7
    %v200 = vsub.s32 0, %v199
    %v201 = vrot.slane %v196, %v200
    %v203 = vadd.f32 %v194, %v201
    %v204 = vadd.f32 %v195, %v201
    %v205 = vpack.c.bf16 %v204, %v203
    %v207 = vunpack.c.l.b16 %v205
    %v208 = vunpack.c.h.b16 %v205
    %v209 = vpack.c.b16 %v207, %v207
    %v210 = vpack.c.b16 %v208, %v208
    %213 = vst [vmem:[%s5] sm:$0xf] %v209
    %214 = vst [vmem:[%s5 + $0x4] sm:$0xf] %v210
  $region33: #{_lambda_.17} parent=0 // pred_fallthru
    _
  // Predicated region
  $region34: #{_lambda_.17} parent=0 // pred_check
    _
  $region35: #{_lambda_.17} parent=0 // pred_check_branch
    %216 = sbr.rel (0) target = $region37
  $region36: #{_lambda_.17} parent=0 // pred_region
    _
  $region37: #{_lambda_.17} parent=0 // pred_fallthru
    _
  // Predicated region
  $region38: #{_lambda_.17} parent=0 // pred_check
    _
  $region39: #{_lambda_.17} parent=0 // pred_check_branch
    %218 = sbr.rel (0) target = $region41
  $region40: #{_lambda_.17} parent=0 // pred_region
    _
  $region41: #{_lambda_.17} parent=0 // pred_fallthru
    _

// kernel: _lambda_.15
$region0: #{_lambda_.15}
  #allocation0 [shape = 'u32[]', space=smem, size = 0x4, offset = 0x4, fixed_abs, tag = 'smem constant byte address 0x4 - core index']
  #allocation1 [shape = 'u32[144,128]{1,0:T(1,128)}', space=vmem, size = 0x12000, scoped, tag = 'internal scratch']
  #allocation2 [shape = 'f32[32,128]{1,0:T(8,128)}', space=vmem, size = 0x4000, scoped, tag = 'scratch operand']
  %s0 = inlined_call_operand.vmem [shape: bf16[32,4], index: 0, kind: input, shape index: {}]
  %s1 = inlined_call_operand.hbm [shape: bf16[4,128], index: 1, kind: input, shape index: {}]
  %s2 = inlined_call_operand.hbm [shape: f32[1,128], index: 2, kind: input, shape index: {}]
  %s3 = inlined_call_operand.vmem [shape: bf16[32,128], index: 3, kind: output, shape index: {}]
  %s4 = sld [smem:[#allocation0]]
  $region38: #{_lambda_.15} parent=0
    _
  %s6 = ssub.s32 1, %s4
  %s7 = scalar_select 0, %s6, %s4
  $region1: #{_lambda_.15} parent=0
    #allocation3 [shape = 'u8[1024]{0}', space=vmem, size = 0x400, scoped, tag = 'input window, operand 1, single buffered']
    #allocation4 [shape = 's32[1]{0}', space=sflag, size = 0x4, scoped, tag = 'scoped memory for _lambda_.15']
    #allocation5 [shape = 'u8[512]{0}', space=vmem, size = 0x400, scoped, tag = 'input window, operand 2, single buffered']
    #allocation6 [shape = 's32[1]{0}', space=sflag, size = 0x4, scoped, tag = 'scoped memory for _lambda_.15']
    %8 = vsyncpa [#allocation4], 0
    %9 = vsyncpa [#allocation6], 0
    // Predicated region
    $region2: #{_lambda_.15} parent=1 // pred_check
      _
    $region3: #{_lambda_.15} parent=1 // pred_check_branch
      %11 = sbr.rel (0) target = $region5
    $region4: #{_lambda_.15} parent=1 // pred_region
      _
    $region5: #{_lambda_.15} parent=1 // pred_fallthru
      _
    // Predicated region
    $region6: #{_lambda_.15} parent=1 // pred_check
      _
    $region7: #{_lambda_.15} parent=1 // pred_check_branch
      %13 = sbr.rel (0) target = $region9
    $region8: #{_lambda_.15} parent=1 // pred_region
      %s15 = ssub.s32 32, 32
      %16 = vsyncadd [#allocation4], %s15
      %s18 = sshll.u32 [#allocation3], 4
      %s19 = int_to_ptr.vmem [resolvable:$true] %s18
      %21 = dma.hbm_to_vmem [thread:$0]  %s1, 32, %s19, [#allocation4]
    $region9: #{_lambda_.15} parent=1 // pred_fallthru
      _
    // Predicated region
    $region10: #{_lambda_.15} parent=1 // pred_check
      _
    $region11: #{_lambda_.15} parent=1 // pred_check_branch
      %23 = sbr.rel (0) target = $region13
    $region12: #{_lambda_.15} parent=1 // pred_region
      %s25 = ssub.s32 16, 16
      %26 = vsyncadd [#allocation6], %s25
      %s28 = sshll.u32 [#allocation5], 4
      %s29 = int_to_ptr.vmem [resolvable:$true] %s28
      %31 = dma.hbm_to_vmem [thread:$0]  %s2, 16, %s29, [#allocation6]
    $region13: #{_lambda_.15} parent=1 // pred_fallthru
      _
    // Predicated region
    $region14: #{_lambda_.15} parent=1 // pred_check
      _
    $region15: #{_lambda_.15} parent=1 // pred_check_branch
      %33 = sbr.rel (0) target = $region17
    $region16: #{_lambda_.15} parent=1 // pred_region
      %34 = dma.done [#allocation4], 32
    $region17: #{_lambda_.15} parent=1 // pred_fallthru
      _
    // Predicated region
    $region18: #{_lambda_.15} parent=1 // pred_check
      _
    $region19: #{_lambda_.15} parent=1 // pred_check_branch
      %36 = sbr.rel (0) target = $region21
    $region20: #{_lambda_.15} parent=1 // pred_region
      %37 = dma.done [#allocation6], 16
    $region21: #{_lambda_.15} parent=1 // pred_fallthru
      _
    %p39 = scmp.eq.s32.totalorder 0, 0
    // Predicated region
    $region22: #{_lambda_.15} parent=1 // pred_check
      %p40 = pneg %p39
    $region23: #{_lambda_.15} parent=1 // pred_check_branch
      %42 = sbr.rel (%p40) target = $region25
    $region24: #{_lambda_.15} parent=1 // pred_region
      %43 = vst [vmem:[#allocation2] sm:$0xff] 0.0
      %44 = vst [vmem:[#allocation2 + $0x8] sm:$0xff] 0.0
      %45 = vst [vmem:[#allocation2 + $0x10] sm:$0xff] 0.0
      %46 = vst [vmem:[#allocation2 + $0x18] sm:$0xff] 0.0
    $region25: #{_lambda_.15} parent=1 // pred_fallthru
      _
    %v47 = vld [vmem:[%s0] sm:$0xf]
    %v48 = vld [vmem:[%s0 + $0x4] sm:$0xf]
    %v49 = vld [vmem:[%s0 + $0x8] sm:$0xf]
    %v50 = vld [vmem:[%s0 + $0xc] sm:$0xf]
    %v51 = vld [vmem:[#allocation2] sm:$0xff]
    %v52 = vld [vmem:[#allocation2 + $0x8] sm:$0xff]
    %v53 = vld [vmem:[#allocation2 + $0x10] sm:$0xff]
    %v54 = vld [vmem:[#allocation2 + $0x18] sm:$0xff]
    %v55 = vld [vmem:[#allocation3] sm:$0x3]
    %v60 = vunpack.c.l.b16 %v47
    %v61 = vunpack.c.l.b16 %v48
    %v62 = vunpack.c.l.b16 %v49
    %v63 = vunpack.c.l.b16 %v50
    %v64 = vpack.c.b16 %v61, %v60
    %v65 = vpack.c.b16 %v63, %v62
    %vm66 = vcmask 31744
    %v68 = vsel %vm66, %v64, 0
    %v71 = vsel %vm66, %v65, 0
    %vm73 = vcmask 1041408
    %v75 = vsel %vm73, %v55, 0
    %77 = vmatprep.subr.bf16.mxu0 0
    %78 = vmatpush1.bf16.msra.mxu0 %v75
    %79 = vmatprep.subr.bf16.mxu0 0
    %80 = vmatpush1.bf16.msra.mxu0 0
    %81 = vmatprep.subr.bf16.mxu0 0
    %82 = vmatpush1.bf16.msra.mxu0 0
    %83 = vmatprep.subr.bf16.mxu0 0
    %84 = vmatpush1.bf16.msra.mxu0 0
    %85 = vmatprep.subr.bf16.mxu0 0
    %86 = vmatpush1.bf16.msra.mxu0 0
    %87 = vmatprep.subr.bf16.mxu0 0
    %88 = vmatpush1.bf16.msra.mxu0 0
    %89 = vmatprep.subr.bf16.mxu0 0
    %90 = vmatpush1.bf16.msra.mxu0 0
    %91 = vmatprep.subr.bf16.mxu0 0
    %92 = vmatpush1.bf16.msra.mxu0 0
    %93 = vmatprep.subr.bf16.mxu0 0
    %94 = vmatpush1.bf16.msra.mxu0 0
    %95 = vmatprep.subr.bf16.mxu0 0
    %96 = vmatpush1.bf16.msra.mxu0 0
    %97 = vmatprep.subr.bf16.mxu0 0
    %98 = vmatpush1.bf16.msra.mxu0 0
    %99 = vmatprep.subr.bf16.mxu0 0
    %100 = vmatpush1.bf16.msra.mxu0 0
    %101 = vmatprep.subr.bf16.mxu0 0
    %102 = vmatpush1.bf16.msra.mxu0 0
    %103 = vmatprep.subr.bf16.mxu0 0
    %104 = vmatpush1.bf16.msra.mxu0 0
    %105 = vmatprep.subr.bf16.mxu0 0
    %106 = vmatpush1.bf16.msra.mxu0 0
    %107 = vmatprep.subr.bf16.mxu0 0
    %108 = vmatpush1.bf16.msra.mxu0 0
    %109 = vmatprep.mubr.bf16.mxu0 0
    %110 = vmatmul.mubr.bf16.gmra.mrb[0].mxu0 %v68
    %v111 = vpop.f32.mrb[0].mxu0
    %v112 = vadd.f32 0.0, %v111
    %v113 = vpop.f32.mrb[0].mxu0
    %v114 = vpop.f32.mrb[0].mxu0
    %v115 = vadd.f32 0.0, %v114
    %v116 = vpop.f32.mrb[0].mxu0
    %117 = vmatprep.mubr.bf16.mxu0 0
    %118 = vmatmul.mubr.bf16.gmra.mrb[0].mxu0 %v71
    %v119 = vpop.f32.mrb[0].mxu0
    %v120 = vadd.f32 0.0, %v119
    %v121 = vpop.f32.mrb[0].mxu0
    %v122 = vpop.f32.mrb[0].mxu0
    %v123 = vadd.f32 0.0, %v122
    %v124 = vpop.f32.mrb[0].mxu0
    %125 = vdwg.mxu0
    %v126 = vadd.f32 %v51, %v112
    %v127 = vadd.f32 %v52, %v115
    %v128 = vadd.f32 %v53, %v120
    %v129 = vadd.f32 %v54, %v123
    %130 = vst [vmem:[#allocation2] sm:$0xff] %v126
    %131 = vst [vmem:[#allocation2 + $0x8] sm:$0xff] %v127
    %132 = vst [vmem:[#allocation2 + $0x10] sm:$0xff] %v128
    %133 = vst [vmem:[#allocation2 + $0x18] sm:$0xff] %v129
    // Predicated region
    $region26: #{_lambda_.15} parent=1 // pred_check
      %p134 = pneg %p39
    $region27: #{_lambda_.15} parent=1 // pred_check_branch
      %136 = sbr.rel (%p134) target = $region29
    $region28: #{_lambda_.15} parent=1 // pred_region
      %v137 = vld [vmem:[#allocation2] sm:$0xff]
      %v138 = vld [vmem:[#allocation2 + $0x8] sm:$0xff]
      %v139 = vld [vmem:[#allocation2 + $0x10] sm:$0xff]
      %v140 = vld [vmem:[#allocation2 + $0x18] sm:$0xff]
      %v141 = vld [vmem:[#allocation5] sm:$0x1]
      %v143 = vlaneseq
      %v144 = vshrl.u32 %v143, 7
      %v145 = vsub.s32 0, %v144
      %v146 = vrot.slane %v141, %v145
      %v148 = vadd.f32 %v137, %v146
      %v149 = vadd.f32 %v138, %v146
      %v150 = vadd.f32 %v139, %v146
      %v151 = vadd.f32 %v140, %v146
      %v152 = vmul.f32 %v148, 0.5
      %v153 = vmul.f32 %v149, 0.5
      %v154 = vmul.f32 %v150, 0.5
      %v155 = vmul.f32 %v151, 0.5
      %v156 = vmul.f32 %v148, 0.044715
      %v157 = vmul.f32 %v149, 0.044715
      %v158 = vmul.f32 %v150, 0.044715
      %v159 = vmul.f32 %v151, 0.044715
      %v160 = vmul.f32 %v156, %v148
      %v161 = vmul.f32 %v157, %v149
      %v162 = vmul.f32 %v158, %v150
      %v163 = vmul.f32 %v159, %v151
      %v164 = vmul.f32 %v160, %v148
      %v165 = vmul.f32 %v161, %v149
      %v166 = vmul.f32 %v162, %v150
      %v167 = vmul.f32 %v163, %v151
      %v168 = vadd.f32 %v148, %v164
      %v169 = vadd.f32 %v149, %v165
      %v170 = vadd.f32 %v150, %v166
      %v171 = vadd.f32 %v151, %v167
      %v172 = vmul.f32 %v168, 0.7978846
      %v173 = vmul.f32 %v169, 0.7978846
      %v174 = vmul.f32 %v170, 0.7978846
      %v175 = vmul.f32 %v171, 0.7978846
      %v176 = vtanh.pop %v172
      %v177 = vtanh.pop %v173
      %v178 = vtanh.pop %v174
      %v179 = vtanh.pop %v175
      %v180 = vadd.f32 %v176, 1.0
      %v181 = vadd.f32 %v177, 1.0
      %v182 = vadd.f32 %v178, 1.0
      %v183 = vadd.f32 %v179, 1.0
      %v184 = vmul.f32 %v152, %v180
      %v185 = vmul.f32 %v153, %v181
      %v186 = vmul.f32 %v154, %v182
      %v187 = vmul.f32 %v155, %v183
      %v188 = vpack.c.bf16 %v185, %v184
      %v189 = vpack.c.bf16 %v187, %v186
      %v192 = vunpack.c.l.b16 %v188
      %v193 = vunpack.c.h.b16 %v188
      %v194 = vunpack.c.l.b16 %v189
      %v195 = vunpack.c.h.b16 %v189
      %v196 = vpack.c.b16 %v192, %v192
      %v197 = vpack.c.b16 %v193, %v193
      %v198 = vpack.c.b16 %v194, %v194
      %v199 = vpack.c.b16 %v195, %v195
      %204 = vst [vmem:[%s3] sm:$0xf] %v196
      %205 = vst [vmem:[%s3 + $0x4] sm:$0xf] %v197
      %206 = vst [vmem:[%s3 + $0x8] sm:$0xf] %v198
      %207 = vst [vmem:[%s3 + $0xc] sm:$0xf] %v199
    $region29: #{_lambda_.15} parent=1 // pred_fallthru
      _
    // Predicated region
    $region30: #{_lambda_.15} parent=1 // pred_check
      _
    $region31: #{_lambda_.15} parent=1 // pred_check_branch
      %209 = sbr.rel (0) target = $region33
    $region32: #{_lambda_.15} parent=1 // pred_region
      _
    $region33: #{_lambda_.15} parent=1 // pred_fallthru
      _
    // Predicated region
    $region34: #{_lambda_.15} parent=1 // pred_check
      _
    $region35: #{_lambda_.15} parent=1 // pred_check_branch
      %211 = sbr.rel (0) target = $region37
    $region36: #{_lambda_.15} parent=1 // pred_region
      _
    $region37: #{_lambda_.15} parent=1 // pred_fallthru
      _
    %212 = vsyncpa [#allocation4], 1
    %213 = vsyncpa [#allocation6], 1

// kernel: _lambda_.16
$region0: #{_lambda_.16}
  #allocation0 [shape = 'u32[]', space=smem, size = 0x4, offset = 0x4, fixed_abs, tag = 'smem constant byte address 0x4 - core index']
  #allocation1 [shape = 'u32[144,128]{1,0:T(1,128)}', space=vmem, size = 0x12000, scoped, tag = 'internal scratch']
  #allocation2 [shape = 'f32[16,128]{1,0:T(8,128)}', space=vmem, size = 0x2000, scoped, tag = 'scratch operand']
  %s0 = inlined_call_operand.vmem [shape: bf16[16,256], index: 0, kind: input, shape index: {}]
  %s1 = inlined_call_operand.vmem [shape: bf16[256,128], index: 1, kind: input, shape index: {}]
  %s2 = inlined_call_operand.vmem [shape: f32[1,128], index: 2, kind: input, shape index: {}]
  %s3 = inlined_call_operand.vmem [shape: bf16[16,128], index: 3, kind: output, shape index: {}]
  %s4 = sld [smem:[#allocation0]]
  $region30: #{_lambda_.16} parent=0
    _
  %s6 = ssub.s32 1, %s4
  %s7 = scalar_select 0, %s6, %s4
  // Predicated region
  $region2: #{_lambda_.16} parent=0 // pred_check
    _
  $region3: #{_lambda_.16} parent=0 // pred_check_branch
    %9 = sbr.rel (0) target = $region5
  $region4: #{_lambda_.16} parent=0 // pred_region
    _
  $region5: #{_lambda_.16} parent=0 // pred_fallthru
    _
  // Predicated region
  $region6: #{_lambda_.16} parent=0 // pred_check
    _
  $region7: #{_lambda_.16} parent=0 // pred_check_branch
    %11 = sbr.rel (0) target = $region9
  $region8: #{_lambda_.16} parent=0 // pred_region
    _
  $region9: #{_lambda_.16} parent=0 // pred_fallthru
    _
  // Predicated region
  $region10: #{_lambda_.16} parent=0 // pred_check
    _
  $region11: #{_lambda_.16} parent=0 // pred_check_branch
    %13 = sbr.rel (0) target = $region13
  $region12: #{_lambda_.16} parent=0 // pred_region
    _
  $region13: #{_lambda_.16} parent=0 // pred_fallthru
    _
  %p15 = scmp.eq.s32.totalorder 0, 0
  // Predicated region
  $region14: #{_lambda_.16} parent=0 // pred_check
    %p16 = pneg %p15
  $region15: #{_lambda_.16} parent=0 // pred_check_branch
    %18 = sbr.rel (%p16) target = $region17
  $region16: #{_lambda_.16} parent=0 // pred_region
    %19 = vst [vmem:[#allocation2] sm:$0xff] 0.0
    %20 = vst [vmem:[#allocation2 + $0x8] sm:$0xff] 0.0
  $region17: #{_lambda_.16} parent=0 // pred_fallthru
    _
  %v21 = vld [vmem:[%s0] sm:$0xff]
  %v22 = vld [vmem:[%s0 + $0x8] sm:$0xff]
  %v23 = vld [vmem:[#allocation2] sm:$0xff]
  %v24 = vld [vmem:[#allocation2 + $0x8] sm:$0xff]
  %v25 = vld [vmem:[%s1] sm:$0xf]
  %v26 = vld [vmem:[%s1 + $0x4] sm:$0xf]
  %v27 = vld [vmem:[%s1 + $0x8] sm:$0xf]
  %v28 = vld [vmem:[%s1 + $0xc] sm:$0xf]
  %v29 = vld [vmem:[%s1 + $0x10] sm:$0xf]
  %v30 = vld [vmem:[%s1 + $0x14] sm:$0xf]
  %v31 = vld [vmem:[%s1 + $0x18] sm:$0xf]
  %v32 = vld [vmem:[%s1 + $0x1c] sm:$0xf]
  %v33 = vld [vmem:[%s1 + $0x20] sm:$0xf]
  %v34 = vld [vmem:[%s1 + $0x24] sm:$0xf]
  %v35 = vld [vmem:[%s1 + $0x28] sm:$0xf]
  %v36 = vld [vmem:[%s1 + $0x2c] sm:$0xf]
  %v37 = vld [vmem:[%s1 + $0x30] sm:$0xf]
  %v38 = vld [vmem:[%s1 + $0x34] sm:$0xf]
  %v39 = vld [vmem:[%s1 + $0x38] sm:$0xf]
  %v40 = vld [vmem:[%s1 + $0x3c] sm:$0xf]
  %v41 = vld [vmem:[%s1 + $0x40] sm:$0xf]
  %v42 = vld [vmem:[%s1 + $0x44] sm:$0xf]
  %v43 = vld [vmem:[%s1 + $0x48] sm:$0xf]
  %v44 = vld [vmem:[%s1 + $0x4c] sm:$0xf]
  %v45 = vld [vmem:[%s1 + $0x50] sm:$0xf]
  %v46 = vld [vmem:[%s1 + $0x54] sm:$0xf]
  %v47 = vld [vmem:[%s1 + $0x58] sm:$0xf]
  %v48 = vld [vmem:[%s1 + $0x5c] sm:$0xf]
  %v49 = vld [vmem:[%s1 + $0x60] sm:$0xf]
  %v50 = vld [vmem:[%s1 + $0x64] sm:$0xf]
  %v51 = vld [vmem:[%s1 + $0x68] sm:$0xf]
  %v52 = vld [vmem:[%s1 + $0x6c] sm:$0xf]
  %v53 = vld [vmem:[%s1 + $0x70] sm:$0xf]
  %v54 = vld [vmem:[%s1 + $0x74] sm:$0xf]
  %v55 = vld [vmem:[%s1 + $0x78] sm:$0xf]
  %v56 = vld [vmem:[%s1 + $0x7c] sm:$0xf]
  %v59 = vunpack.c.l.b16 %v21
  %v60 = vunpack.c.h.b16 %v21
  %v61 = vunpack.c.l.b16 %v22
  %v62 = vunpack.c.h.b16 %v22
  %v63 = vpack.c.b16 %v61, %v59
  %v64 = vpack.c.b16 %v62, %v60
  %v99 = vunpack.c.l.b16 %v25
  %v100 = vunpack.c.l.b16 %v26
  %v101 = vunpack.c.l.b16 %v27
  %v102 = vunpack.c.l.b16 %v28
  %v103 = vunpack.c.l.b16 %v29
  %v104 = vunpack.c.l.b16 %v30
  %v105 = vunpack.c.l.b16 %v31
  %v106 = vunpack.c.l.b16 %v32
  %v107 = vunpack.c.l.b16 %v33
  %v108 = vunpack.c.l.b16 %v34
  %v109 = vunpack.c.l.b16 %v35
  %v110 = vunpack.c.l.b16 %v36
  %v111 = vunpack.c.l.b16 %v37
  %v112 = vunpack.c.l.b16 %v38
  %v113 = vunpack.c.l.b16 %v39
  %v114 = vunpack.c.l.b16 %v40
  %v115 = vunpack.c.l.b16 %v41
  %v116 = vunpack.c.l.b16 %v42
  %v117 = vunpack.c.l.b16 %v43
  %v118 = vunpack.c.l.b16 %v44
  %v119 = vunpack.c.l.b16 %v45
  %v120 = vunpack.c.l.b16 %v46
  %v121 = vunpack.c.l.b16 %v47
  %v122 = vunpack.c.l.b16 %v48
  %v123 = vunpack.c.l.b16 %v49
  %v124 = vunpack.c.l.b16 %v50
  %v125 = vunpack.c.l.b16 %v51
  %v126 = vunpack.c.l.b16 %v52
  %v127 = vunpack.c.l.b16 %v53
  %v128 = vunpack.c.l.b16 %v54
  %v129 = vunpack.c.l.b16 %v55
  %v130 = vunpack.c.l.b16 %v56
  %v131 = vpack.c.b16 %v100, %v99
  %v132 = vpack.c.b16 %v102, %v101
  %v133 = vpack.c.b16 %v104, %v103
  %v134 = vpack.c.b16 %v106, %v105
  %v135 = vpack.c.b16 %v108, %v107
  %v136 = vpack.c.b16 %v110, %v109
  %v137 = vpack.c.b16 %v112, %v111
  %v138 = vpack.c.b16 %v114, %v113
  %v139 = vpack.c.b16 %v116, %v115
  %v140 = vpack.c.b16 %v118, %v117
  %v141 = vpack.c.b16 %v120, %v119
  %v142 = vpack.c.b16 %v122, %v121
  %v143 = vpack.c.b16 %v124, %v123
  %v144 = vpack.c.b16 %v126, %v125
  %v145 = vpack.c.b16 %v128, %v127
  %v146 = vpack.c.b16 %v130, %v129
  %163 = vmatprep.subr.bf16.mxu0 0
  %164 = vmatpush1.bf16.msra.mxu0 %v131
  %165 = vmatprep.subr.bf16.mxu0 0
  %166 = vmatpush1.bf16.msra.mxu0 %v132
  %167 = vmatprep.subr.bf16.mxu0 0
  %168 = vmatpush1.bf16.msra.mxu0 %v133
  %169 = vmatprep.subr.bf16.mxu0 0
  %170 = vmatpush1.bf16.msra.mxu0 %v134
  %171 = vmatprep.subr.bf16.mxu0 0
  %172 = vmatpush1.bf16.msra.mxu0 %v135
  %173 = vmatprep.subr.bf16.mxu0 0
  %174 = vmatpush1.bf16.msra.mxu0 %v136
  %175 = vmatprep.subr.bf16.mxu0 0
  %176 = vmatpush1.bf16.msra.mxu0 %v137
  %177 = vmatprep.subr.bf16.mxu0 0
  %178 = vmatpush1.bf16.msra.mxu0 %v138
  %179 = vmatprep.subr.bf16.mxu0 0
  %180 = vmatpush1.bf16.msra.mxu0 %v139
  %181 = vmatprep.subr.bf16.mxu0 0
  %182 = vmatpush1.bf16.msra.mxu0 %v140
  %183 = vmatprep.subr.bf16.mxu0 0
  %184 = vmatpush1.bf16.msra.mxu0 %v141
  %185 = vmatprep.subr.bf16.mxu0 0
  %186 = vmatpush1.bf16.msra.mxu0 %v142
  %187 = vmatprep.subr.bf16.mxu0 0
  %188 = vmatpush1.bf16.msra.mxu0 %v143
  %189 = vmatprep.subr.bf16.mxu0 0
  %190 = vmatpush1.bf16.msra.mxu0 %v144
  %191 = vmatprep.subr.bf16.mxu0 0
  %192 = vmatpush1.bf16.msra.mxu0 %v145
  %193 = vmatprep.subr.bf16.mxu0 0
  %194 = vmatpush1.bf16.msra.mxu0 %v146
  %195 = vmatprep.mubr.bf16.mxu0 %v64
  %196 = vmatmul.mubr.bf16.gmra.mrb[0].mxu0 %v63
  %v197 = vpop.f32.mrb[0].mxu0
  %v198 = vadd.f32 0.0, %v197
  %v199 = vpop.f32.mrb[0].mxu0
  %v200 = vpop.f32.mrb[0].mxu0
  %v201 = vadd.f32 0.0, %v200
  %v202 = vpop.f32.mrb[0].mxu0
  %203 = vdwg.mxu0
  %v204 = vadd.f32 %v23, %v198
  %v205 = vadd.f32 %v24, %v201
  %206 = vst [vmem:[#allocation2] sm:$0xff] %v204
  %207 = vst [vmem:[#allocation2 + $0x8] sm:$0xff] %v205
  // Predicated region
  $region18: #{_lambda_.16} parent=0 // pred_check
    %p208 = pneg %p15
  $region19: #{_lambda_.16} parent=0 // pred_check_branch
    %210 = sbr.rel (%p208) target = $region21
  $region20: #{_lambda_.16} parent=0 // pred_region
    %v211 = vld [vmem:[#allocation2] sm:$0xff]
    %v212 = vld [vmem:[#allocation2 + $0x8] sm:$0xff]
    %v213 = vld [vmem:[%s2] sm:$0x1]
    %v215 = vlaneseq
    %v216 = vshrl.u32 %v215, 7
    %v217 = vsub.s32 0, %v216
    %v218 = vrot.slane %v213, %v217
    %v220 = vadd.f32 %v211, %v218
    %v221 = vadd.f32 %v212, %v218
    %v222 = vmul.f32 %v220, 0.5
    %v223 = vmul.f32 %v221, 0.5
    %v224 = vmul.f32 %v220, 0.044715
    %v225 = vmul.f32 %v221, 0.044715
    %v226 = vmul.f32 %v224, %v220
    %v227 = vmul.f32 %v225, %v221
    %v228 = vmul.f32 %v226, %v220
    %v229 = vmul.f32 %v227, %v221
    %v230 = vadd.f32 %v220, %v228
    %v231 = vadd.f32 %v221, %v229
    %v232 = vmul.f32 %v230, 0.7978846
    %v233 = vmul.f32 %v231, 0.7978846
    %v234 = vtanh.pop %v232
    %v235 = vtanh.pop %v233
    %v236 = vadd.f32 %v234, 1.0
    %v237 = vadd.f32 %v235, 1.0
    %v238 = vmul.f32 %v222, %v236
    %v239 = vmul.f32 %v223, %v237
    %v240 = vpack.c.bf16 %v239, %v238
    %v242 = vunpack.c.l.b16 %v240
    %v243 = vunpack.c.h.b16 %v240
    %v244 = vpack.c.b16 %v242, %v242
    %v245 = vpack.c.b16 %v243, %v243
    %248 = vst [vmem:[%s3] sm:$0xf] %v244
    %249 = vst [vmem:[%s3 + $0x4] sm:$0xf] %v245
  $region21: #{_lambda_.16} parent=0 // pred_fallthru
    _
  // Predicated region
  $region22: #{_lambda_.16} parent=0 // pred_check
    _
  $region23: #{_lambda_.16} parent=0 // pred_check_branch
    %251 = sbr.rel (0) target = $region25
  $region24: #{_lambda_.16} parent=0 // pred_region
    _
  $region25: #{_lambda_.16} parent=0 // pred_fallthru
    _
  // Predicated region
  $region26: #{_lambda_.16} parent=0 // pred_check
    _
  $region27: #{_lambda_.16} parent=0 // pred_check_branch
    %253 = sbr.rel (0) target = $region29
  $region28: #{_lambda_.16} parent=0 // pred_region
    _
  $region29: #{_lambda_.16} parent=0 // pred_fallthru
    _

// kernel: _lambda_.21
$region0: #{_lambda_.21}
  #allocation0 [shape = 'u32[]', space=smem, size = 0x4, offset = 0x4, fixed_abs, tag = 'smem constant byte address 0x4 - core index']
  #allocation1 [shape = 'u32[144,128]{1,0:T(1,128)}', space=vmem, size = 0x12000, scoped, tag = 'internal scratch']
  #allocation2 [shape = 'f32[16,256]{1,0:T(8,128)}', space=vmem, size = 0x4000, scoped, tag = 'scratch operand']
  #allocation3 [shape = 'bf16[16,128]{1,0:T(16,128)(2,1)}', space=vmem, size = 0x1000, scoped, tag = 'scratch operand']
  %s0 = inlined_call_operand.vmem [shape: bf16[16,128], index: 0, kind: input, shape index: {}]
  %s1 = inlined_call_operand.vmem [shape: f32[1,128], index: 1, kind: input, shape index: {}]
  %s2 = inlined_call_operand.vmem [shape: f32[1,128], index: 2, kind: input, shape index: {}]
  %s3 = inlined_call_operand.vmem [shape: bf16[128,256], index: 3, kind: input, shape index: {}]
  %s4 = inlined_call_operand.vmem [shape: f32[1,256], index: 4, kind: input, shape index: {}]
  %s5 = inlined_call_operand.vmem [shape: bf16[16,256], index: 5, kind: output, shape index: {}]
  %s6 = sld [smem:[#allocation0]]
  $region42: #{_lambda_.21} parent=0
    _
  %s8 = ssub.s32 1, %s6
  %s9 = scalar_select 0, %s8, %s6
  // Predicated region
  $region2: #{_lambda_.21} parent=0 // pred_check
    _
  $region3: #{_lambda_.21} parent=0 // pred_check_branch
    %11 = sbr.rel (0) target = $region5
  $region4: #{_lambda_.21} parent=0 // pred_region
    _
  $region5: #{_lambda_.21} parent=0 // pred_fallthru
    _
  // Predicated region
  $region6: #{_lambda_.21} parent=0 // pred_check
    _
  $region7: #{_lambda_.21} parent=0 // pred_check_branch
    %13 = sbr.rel (0) target = $region9
  $region8: #{_lambda_.21} parent=0 // pred_region
    _
  $region9: #{_lambda_.21} parent=0 // pred_fallthru
    _
  // Predicated region
  $region10: #{_lambda_.21} parent=0 // pred_check
    _
  $region11: #{_lambda_.21} parent=0 // pred_check_branch
    %15 = sbr.rel (0) target = $region13
  $region12: #{_lambda_.21} parent=0 // pred_region
    _
  $region13: #{_lambda_.21} parent=0 // pred_fallthru
    _
  // Predicated region
  $region14: #{_lambda_.21} parent=0 // pred_check
    _
  $region15: #{_lambda_.21} parent=0 // pred_check_branch
    %17 = sbr.rel (0) target = $region17
  $region16: #{_lambda_.21} parent=0 // pred_region
    _
  $region17: #{_lambda_.21} parent=0 // pred_fallthru
    _
  // Predicated region
  $region18: #{_lambda_.21} parent=0 // pred_check
    _
  $region19: #{_lambda_.21} parent=0 // pred_check_branch
    %19 = sbr.rel (0) target = $region21
  $region20: #{_lambda_.21} parent=0 // pred_region
    _
  $region21: #{_lambda_.21} parent=0 // pred_fallthru
    _
  %p21 = scmp.eq.s32.totalorder 0, 0
  // Predicated region
  $region22: #{_lambda_.21} parent=0 // pred_check
    %p22 = pneg %p21
  $region23: #{_lambda_.21} parent=0 // pred_check_branch
    %24 = sbr.rel (%p22) target = $region25
  $region24: #{_lambda_.21} parent=0 // pred_region
    %25 = vst [vmem:[#allocation2] sm:$0xff] 0.0
    %26 = vst [vmem:[#allocation2 + $0x8] sm:$0xff] 0.0
    %27 = vst [vmem:[#allocation2 + $0x10] sm:$0xff] 0.0
    %28 = vst [vmem:[#allocation2 + $0x18] sm:$0xff] 0.0
  $region25: #{_lambda_.21} parent=0 // pred_fallthru
    _
  %p29 = scmp.eq.s32.totalorder 0, 0
  %p30 = pnand %p29, %p21
  %p31 = pneg %p30
  // Predicated region
  $region26: #{_lambda_.21} parent=0 // pred_check
    _
  $region27: #{_lambda_.21} parent=0 // pred_check_branch
    %33 = sbr.rel (%p30) target = $region29
  $region28: #{_lambda_.21} parent=0 // pred_region
    %v34 = vld [vmem:[%s0] sm:$0xf]
    %v35 = vld [vmem:[%s0 + $0x4] sm:$0xf]
    %v36 = vunpack.c.l.bf16 %v34
    %v37 = vunpack.c.l.bf16 %v35
    %38 = vadd.xlane.f32.xlu0 %v36
    %v39 = vpop.xlane.xlu0 %38
    %40 = vadd.xlane.f32.xlu0 %v37
    %v41 = vpop.xlane.xlu0 %40
    %v42 = vrcp.pop 128.0
    %v43 = vmul.f32 %v39, %v42
    %v44 = vmul.f32 %v41, %v42
    %v45 = vsub.f32 %v36, %v43
    %v46 = vsub.f32 %v37, %v44
    %v47 = vmul.f32 %v45, %v45
    %v48 = vmul.f32 %v46, %v46
    %49 = vadd.xlane.f32.xlu0 %v47
    %v50 = vpop.xlane.xlu0 %49
    %51 = vadd.xlane.f32.xlu0 %v48
    %v52 = vpop.xlane.xlu0 %51
    %v53 = vmul.f32 %v50, %v42
    %v54 = vmul.f32 %v52, %v42
    %v55 = vadd.f32 %v53, 1e-05
    %v56 = vadd.f32 %v54, 1e-05
    %v57 = vrsqrt.pop %v55
    %v58 = vrsqrt.pop %v56
    %v59 = vmul.f32 %v45, %v57
    %v60 = vmul.f32 %v46, %v58
    %v61 = vld [vmem:[%s1] sm:$0x1]
    %v63 = vlaneseq
    %v64 = vshrl.u32 %v63, 7
    %v65 = vsub.s32 0, %v64
    %v66 = vrot.slane %v61, %v65
    %v68 = vmul.f32 %v59, %v66
    %v69 = vmul.f32 %v60, %v66
    %v70 = vld [vmem:[%s2] sm:$0x1]
    %v72 = vlaneseq
    %v73 = vshrl.u32 %v72, 7
    %v74 = vsub.s32 0, %v73
    %v75 = vrot.slane %v70, %v74
    %v77 = vadd.f32 %v68, %v75
    %v78 = vadd.f32 %v69, %v75
    %v79 = vpack.c.bf16 %v78, %v77
    %80 = vst [vmem:[#allocation3] sm:$0xff] %v79
  $region29: #{_lambda_.21} parent=0 // pred_fallthru
    _
  %v81 = vld [vmem:[#allocation3] sm:$0xff]
  %v82 = vld [vmem:[#allocation2] sm:$0xff]
  %v83 = vld [vmem:[#allocation2 + $0x8] sm:$0xff]
  %v84 = vld [vmem:[#allocation2 + $0x10] sm:$0xff]
  %v85 = vld [vmem:[#allocation2 + $0x18] sm:$0xff]
  %v86 = vld [vmem:[%s3] sm:$0xff]
  %v87 = vld [vmem:[%s3 + $0x8] sm:$0xff]
  %v88 = vld [vmem:[%s3 + $0x10] sm:$0xff]
  %v89 = vld [vmem:[%s3 + $0x18] sm:$0xff]
  %v90 = vld [vmem:[%s3 + $0x20] sm:$0xff]
  %v91 = vld [vmem:[%s3 + $0x28] sm:$0xff]
  %v92 = vld [vmem:[%s3 + $0x30] sm:$0xff]
  %v93 = vld [vmem:[%s3 + $0x38] sm:$0xff]
  %v94 = vld [vmem:[%s3 + $0x40] sm:$0xff]
  %v95 = vld [vmem:[%s3 + $0x48] sm:$0xff]
  %v96 = vld [vmem:[%s3 + $0x50] sm:$0xff]
  %v97 = vld [vmem:[%s3 + $0x58] sm:$0xff]
  %v98 = vld [vmem:[%s3 + $0x60] sm:$0xff]
  %v99 = vld [vmem:[%s3 + $0x68] sm:$0xff]
  %v100 = vld [vmem:[%s3 + $0x70] sm:$0xff]
  %v101 = vld [vmem:[%s3 + $0x78] sm:$0xff]
  %v118 = vunpack.c.l.b16 %v86
  %v119 = vunpack.c.h.b16 %v86
  %v120 = vunpack.c.l.b16 %v87
  %v121 = vunpack.c.h.b16 %v87
  %v122 = vunpack.c.l.b16 %v88
  %v123 = vunpack.c.h.b16 %v88
  %v124 = vunpack.c.l.b16 %v89
  %v125 = vunpack.c.h.b16 %v89
  %v126 = vunpack.c.l.b16 %v90
  %v127 = vunpack.c.h.b16 %v90
  %v128 = vunpack.c.l.b16 %v91
  %v129 = vunpack.c.h.b16 %v91
  %v130 = vunpack.c.l.b16 %v92
  %v131 = vunpack.c.h.b16 %v92
  %v132 = vunpack.c.l.b16 %v93
  %v133 = vunpack.c.h.b16 %v93
  %v134 = vunpack.c.l.b16 %v94
  %v135 = vunpack.c.h.b16 %v94
  %v136 = vunpack.c.l.b16 %v95
  %v137 = vunpack.c.h.b16 %v95
  %v138 = vunpack.c.l.b16 %v96
  %v139 = vunpack.c.h.b16 %v96
  %v140 = vunpack.c.l.b16 %v97
  %v141 = vunpack.c.h.b16 %v97
  %v142 = vunpack.c.l.b16 %v98
  %v143 = vunpack.c.h.b16 %v98
  %v144 = vunpack.c.l.b16 %v99
  %v145 = vunpack.c.h.b16 %v99
  %v146 = vunpack.c.l.b16 %v100
  %v147 = vunpack.c.h.b16 %v100
  %v148 = vunpack.c.l.b16 %v101
  %v149 = vunpack.c.h.b16 %v101
  %v150 = vpack.c.b16 %v120, %v118
  %v151 = vpack.c.b16 %v121, %v119
  %v152 = vpack.c.b16 %v124, %v122
  %v153 = vpack.c.b16 %v125, %v123
  %v154 = vpack.c.b16 %v128, %v126
  %v155 = vpack.c.b16 %v129, %v127
  %v156 = vpack.c.b16 %v132, %v130
  %v157 = vpack.c.b16 %v133, %v131
  %v158 = vpack.c.b16 %v136, %v134
  %v159 = vpack.c.b16 %v137, %v135
  %v160 = vpack.c.b16 %v140, %v138
  %v161 = vpack.c.b16 %v141, %v139
  %v162 = vpack.c.b16 %v144, %v142
  %v163 = vpack.c.b16 %v145, %v143
  %v164 = vpack.c.b16 %v148, %v146
  %v165 = vpack.c.b16 %v149, %v147
  %182 = vmatprep.subr.bf16.mxu0 %v151
  %183 = vmatpush1.bf16.msra.mxu0 %v150
  %184 = vmatprep.subr.bf16.mxu0 %v153
  %185 = vmatpush1.bf16.msra.mxu0 %v152
  %186 = vmatprep.subr.bf16.mxu0 %v155
  %187 = vmatpush1.bf16.msra.mxu0 %v154
  %188 = vmatprep.subr.bf16.mxu0 %v157
  %189 = vmatpush1.bf16.msra.mxu0 %v156
  %190 = vmatprep.subr.bf16.mxu0 %v159
  %191 = vmatpush1.bf16.msra.mxu0 %v158
  %192 = vmatprep.subr.bf16.mxu0 %v161
  %193 = vmatpush1.bf16.msra.mxu0 %v160
  %194 = vmatprep.subr.bf16.mxu0 %v163
  %195 = vmatpush1.bf16.msra.mxu0 %v162
  %196 = vmatprep.subr.bf16.mxu0 %v165
  %197 = vmatpush1.bf16.msra.mxu0 %v164
  %198 = vmatprep.subr.bf16.mxu0 0
  %199 = vmatpush1.bf16.msra.mxu0 0
  %200 = vmatprep.subr.bf16.mxu0 0
  %201 = vmatpush1.bf16.msra.mxu0 0
  %202 = vmatprep.subr.bf16.mxu0 0
  %203 = vmatpush1.bf16.msra.mxu0 0
  %204 = vmatprep.subr.bf16.mxu0 0
  %205 = vmatpush1.bf16.msra.mxu0 0
  %206 = vmatprep.subr.bf16.mxu0 0
  %207 = vmatpush1.bf16.msra.mxu0 0
  %208 = vmatprep.subr.bf16.mxu0 0
  %209 = vmatpush1.bf16.msra.mxu0 0
  %210 = vmatprep.subr.bf16.mxu0 0
  %211 = vmatpush1.bf16.msra.mxu0 0
  %212 = vmatprep.subr.bf16.mxu0 0
  %213 = vmatpush1.bf16.msra.mxu0 0
  %214 = vmatprep.mubr.bf16.mxu0 0
  %215 = vmatmul.mubr.bf16.gmra.mrb[0].mxu0 %v81
  %v216 = vpop.f32.mrb[0].mxu0
  %v217 = vadd.f32 0.0, %v216
  %v218 = vpop.f32.mrb[0].mxu0
  %v219 = vadd.f32 0.0, %v218
  %v220 = vpop.f32.mrb[0].mxu0
  %v221 = vadd.f32 0.0, %v220
  %v222 = vpop.f32.mrb[0].mxu0
  %v223 = vadd.f32 0.0, %v222
  %224 = vdwg.mxu0
  %v225 = vadd.f32 %v82, %v217
  %v226 = vadd.f32 %v83, %v219
  %v227 = vadd.f32 %v84, %v221
  %v228 = vadd.f32 %v85, %v223
  %229 = vst [vmem:[#allocation2] sm:$0xff] %v225
  %230 = vst [vmem:[#allocation2 + $0x8] sm:$0xff] %v226
  %231 = vst [vmem:[#allocation2 + $0x10] sm:$0xff] %v227
  %232 = vst [vmem:[#allocation2 + $0x18] sm:$0xff] %v228
  // Predicated region
  $region30: #{_lambda_.21} parent=0 // pred_check
    %p233 = pneg %p21
  $region31: #{_lambda_.21} parent=0 // pred_check_branch
    %235 = sbr.rel (%p233) target = $region33
  $region32: #{_lambda_.21} parent=0 // pred_region
    %v236 = vld [vmem:[#allocation2] sm:$0xff]
    %v237 = vld [vmem:[#allocation2 + $0x8] sm:$0xff]
    %v238 = vld [vmem:[#allocation2 + $0x10] sm:$0xff]
    %v239 = vld [vmem:[#allocation2 + $0x18] sm:$0xff]
    %v240 = vld [vmem:[%s4] sm:$0x3]
    %v242 = vlaneseq
    %v243 = vshrl.u32 %v242, 7
    %v244 = vsub.s32 0, %v243
    %v245 = vrot.slane %v240, %v244
    %v246 = vlaneseq
    %v247 = vshrl.u32 %v246, 7
    %v248 = vsub.s32 1, %v247
    %v249 = vrot.slane %v240, %v248
    %v252 = vadd.f32 %v236, %v245
    %v253 = vadd.f32 %v237, %v249
    %v254 = vadd.f32 %v238, %v245
    %v255 = vadd.f32 %v239, %v249
    %v256 = vmul.f32 %v252, 0.5
    %v257 = vmul.f32 %v253, 0.5
    %v258 = vmul.f32 %v254, 0.5
    %v259 = vmul.f32 %v255, 0.5
    %v260 = vmul.f32 %v252, 0.044715
    %v261 = vmul.f32 %v253, 0.044715
    %v262 = vmul.f32 %v254, 0.044715
    %v263 = vmul.f32 %v255, 0.044715
    %v264 = vmul.f32 %v260, %v252
    %v265 = vmul.f32 %v261, %v253
    %v266 = vmul.f32 %v262, %v254
    %v267 = vmul.f32 %v263, %v255
    %v268 = vmul.f32 %v264, %v252
    %v269 = vmul.f32 %v265, %v253
    %v270 = vmul.f32 %v266, %v254
    %v271 = vmul.f32 %v267, %v255
    %v272 = vadd.f32 %v252, %v268
    %v273 = vadd.f32 %v253, %v269
    %v274 = vadd.f32 %v254, %v270
    %v275 = vadd.f32 %v255, %v271
    %v276 = vmul.f32 %v272, 0.7978846
    %v277 = vmul.f32 %v273, 0.7978846
    %v278 = vmul.f32 %v274, 0.7978846
    %v279 = vmul.f32 %v275, 0.7978846
    %v280 = vtanh.pop %v276
    %v281 = vtanh.pop %v277
    %v282 = vtanh.pop %v278
    %v283 = vtanh.pop %v279
    %v284 = vadd.f32 %v280, 1.0
    %v285 = vadd.f32 %v281, 1.0
    %v286 = vadd.f32 %v282, 1.0
    %v287 = vadd.f32 %v283, 1.0
    %v288 = vmul.f32 %v256, %v284
    %v289 = vmul.f32 %v257, %v285
    %v290 = vmul.f32 %v258, %v286
    %v291 = vmul.f32 %v259, %v287
    %v292 = vpack.c.bf16 %v290, %v288
    %v293 = vpack.c.bf16 %v291, %v289
    %v296 = vunpack.c.l.b16 %v292
    %v297 = vunpack.c.l.b16 %v293
    %v298 = vunpack.c.h.b16 %v292
    %v299 = vunpack.c.h.b16 %v293
    %v300 = vpack.c.b16 %v297, %v296
    %v301 = vpack.c.b16 %v299, %v298
    %304 = vst [vmem:[%s5] sm:$0xff] %v300
    %305 = vst [vmem:[%s5 + $0x8] sm:$0xff] %v301
  $region33: #{_lambda_.21} parent=0 // pred_fallthru
    _
  // Predicated region
  $region34: #{_lambda_.21} parent=0 // pred_check
    _
  $region35: #{_lambda_.21} parent=0 // pred_check_branch
    %307 = sbr.rel (0) target = $region37
  $region36: #{_lambda_.21} parent=0 // pred_region
    _
  $region37: #{_lambda_.21} parent=0 // pred_fallthru
    _
  // Predicated region
  $region38: #{_lambda_.21} parent=0 // pred_check
    _
  $region39: #{_lambda_.21} parent=0 // pred_check_branch
    %309 = sbr.rel (0) target = $region41
  $region40: #{_lambda_.21} parent=0 // pred_region
    _
  $region41: #{_lambda_.21} parent=0 // pred_fallthru
    _

// kernel: _lambda_.22
$region0: #{_lambda_.22}
  #allocation0 [shape = 'u32[]', space=smem, size = 0x4, offset = 0x4, fixed_abs, tag = 'smem constant byte address 0x4 - core index']
  #allocation1 [shape = 'u32[144,128]{1,0:T(1,128)}', space=vmem, size = 0x12000, scoped, tag = 'internal scratch']
  #allocation2 [shape = 'f32[16,128]{1,0:T(8,128)}', space=vmem, size = 0x2000, scoped, tag = 'scratch operand']
  %s0 = inlined_call_operand.vmem [shape: bf16[16,256], index: 0, kind: input, shape index: {}]
  %s1 = inlined_call_operand.vmem [shape: bf16[256,128], index: 1, kind: input, shape index: {}]
  %s2 = inlined_call_operand.vmem [shape: f32[1,128], index: 2, kind: input, shape index: {}]
  %s3 = inlined_call_operand.vmem [shape: bf16[16,128], index: 3, kind: input, shape index: {}]
  %s4 = inlined_call_operand.vmem [shape: bf16[16,128], index: 4, kind: output, shape index: {}]
  %s5 = sld [smem:[#allocation0]]
  $region34: #{_lambda_.22} parent=0
    _
  %s7 = ssub.s32 1, %s5
  %s8 = scalar_select 0, %s7, %s5
  // Predicated region
  $region2: #{_lambda_.22} parent=0 // pred_check
    _
  $region3: #{_lambda_.22} parent=0 // pred_check_branch
    %10 = sbr.rel (0) target = $region5
  $region4: #{_lambda_.22} parent=0 // pred_region
    _
  $region5: #{_lambda_.22} parent=0 // pred_fallthru
    _
  // Predicated region
  $region6: #{_lambda_.22} parent=0 // pred_check
    _
  $region7: #{_lambda_.22} parent=0 // pred_check_branch
    %12 = sbr.rel (0) target = $region9
  $region8: #{_lambda_.22} parent=0 // pred_region
    _
  $region9: #{_lambda_.22} parent=0 // pred_fallthru
    _
  // Predicated region
  $region10: #{_lambda_.22} parent=0 // pred_check
    _
  $region11: #{_lambda_.22} parent=0 // pred_check_branch
    %14 = sbr.rel (0) target = $region13
  $region12: #{_lambda_.22} parent=0 // pred_region
    _
  $region13: #{_lambda_.22} parent=0 // pred_fallthru
    _
  // Predicated region
  $region14: #{_lambda_.22} parent=0 // pred_check
    _
  $region15: #{_lambda_.22} parent=0 // pred_check_branch
    %16 = sbr.rel (0) target = $region17
  $region16: #{_lambda_.22} parent=0 // pred_region
    _
  $region17: #{_lambda_.22} parent=0 // pred_fallthru
    _
  %p18 = scmp.eq.s32.totalorder 0, 0
  // Predicated region
  $region18: #{_lambda_.22} parent=0 // pred_check
    %p19 = pneg %p18
  $region19: #{_lambda_.22} parent=0 // pred_check_branch
    %21 = sbr.rel (%p19) target = $region21
  $region20: #{_lambda_.22} parent=0 // pred_region
    %22 = vst [vmem:[#allocation2] sm:$0xff] 0.0
    %23 = vst [vmem:[#allocation2 + $0x8] sm:$0xff] 0.0
  $region21: #{_lambda_.22} parent=0 // pred_fallthru
    _
  %v24 = vld [vmem:[%s0] sm:$0xff]
  %v25 = vld [vmem:[%s0 + $0x8] sm:$0xff]
  %v26 = vld [vmem:[#allocation2] sm:$0xff]
  %v27 = vld [vmem:[#allocation2 + $0x8] sm:$0xff]
  %v28 = vld [vmem:[%s1] sm:$0xf]
  %v29 = vld [vmem:[%s1 + $0x4] sm:$0xf]
  %v30 = vld [vmem:[%s1 + $0x8] sm:$0xf]
  %v31 = vld [vmem:[%s1 + $0xc] sm:$0xf]
  %v32 = vld [vmem:[%s1 + $0x10] sm:$0xf]
  %v33 = vld [vmem:[%s1 + $0x14] sm:$0xf]
  %v34 = vld [vmem:[%s1 + $0x18] sm:$0xf]
  %v35 = vld [vmem:[%s1 + $0x1c] sm:$0xf]
  %v36 = vld [vmem:[%s1 + $0x20] sm:$0xf]
  %v37 = vld [vmem:[%s1 + $0x24] sm:$0xf]
  %v38 = vld [vmem:[%s1 + $0x28] sm:$0xf]
  %v39 = vld [vmem:[%s1 + $0x2c] sm:$0xf]
  %v40 = vld [vmem:[%s1 + $0x30] sm:$0xf]
  %v41 = vld [vmem:[%s1 + $0x34] sm:$0xf]
  %v42 = vld [vmem:[%s1 + $0x38] sm:$0xf]
  %v43 = vld [vmem:[%s1 + $0x3c] sm:$0xf]
  %v44 = vld [vmem:[%s1 + $0x40] sm:$0xf]
  %v45 = vld [vmem:[%s1 + $0x44] sm:$0xf]
  %v46 = vld [vmem:[%s1 + $0x48] sm:$0xf]
  %v47 = vld [vmem:[%s1 + $0x4c] sm:$0xf]
  %v48 = vld [vmem:[%s1 + $0x50] sm:$0xf]
  %v49 = vld [vmem:[%s1 + $0x54] sm:$0xf]
  %v50 = vld [vmem:[%s1 + $0x58] sm:$0xf]
  %v51 = vld [vmem:[%s1 + $0x5c] sm:$0xf]
  %v52 = vld [vmem:[%s1 + $0x60] sm:$0xf]
  %v53 = vld [vmem:[%s1 + $0x64] sm:$0xf]
  %v54 = vld [vmem:[%s1 + $0x68] sm:$0xf]
  %v55 = vld [vmem:[%s1 + $0x6c] sm:$0xf]
  %v56 = vld [vmem:[%s1 + $0x70] sm:$0xf]
  %v57 = vld [vmem:[%s1 + $0x74] sm:$0xf]
  %v58 = vld [vmem:[%s1 + $0x78] sm:$0xf]
  %v59 = vld [vmem:[%s1 + $0x7c] sm:$0xf]
  %v62 = vunpack.c.l.b16 %v24
  %v63 = vunpack.c.h.b16 %v24
  %v64 = vunpack.c.l.b16 %v25
  %v65 = vunpack.c.h.b16 %v25
  %v66 = vpack.c.b16 %v64, %v62
  %v67 = vpack.c.b16 %v65, %v63
  %v102 = vunpack.c.l.b16 %v28
  %v103 = vunpack.c.l.b16 %v29
  %v104 = vunpack.c.l.b16 %v30
  %v105 = vunpack.c.l.b16 %v31
  %v106 = vunpack.c.l.b16 %v32
  %v107 = vunpack.c.l.b16 %v33
  %v108 = vunpack.c.l.b16 %v34
  %v109 = vunpack.c.l.b16 %v35
  %v110 = vunpack.c.l.b16 %v36
  %v111 = vunpack.c.l.b16 %v37
  %v112 = vunpack.c.l.b16 %v38
  %v113 = vunpack.c.l.b16 %v39
  %v114 = vunpack.c.l.b16 %v40
  %v115 = vunpack.c.l.b16 %v41
  %v116 = vunpack.c.l.b16 %v42
  %v117 = vunpack.c.l.b16 %v43
  %v118 = vunpack.c.l.b16 %v44
  %v119 = vunpack.c.l.b16 %v45
  %v120 = vunpack.c.l.b16 %v46
  %v121 = vunpack.c.l.b16 %v47
  %v122 = vunpack.c.l.b16 %v48
  %v123 = vunpack.c.l.b16 %v49
  %v124 = vunpack.c.l.b16 %v50
  %v125 = vunpack.c.l.b16 %v51
  %v126 = vunpack.c.l.b16 %v52
  %v127 = vunpack.c.l.b16 %v53
  %v128 = vunpack.c.l.b16 %v54
  %v129 = vunpack.c.l.b16 %v55
  %v130 = vunpack.c.l.b16 %v56
  %v131 = vunpack.c.l.b16 %v57
  %v132 = vunpack.c.l.b16 %v58
  %v133 = vunpack.c.l.b16 %v59
  %v134 = vpack.c.b16 %v103, %v102
  %v135 = vpack.c.b16 %v105, %v104
  %v136 = vpack.c.b16 %v107, %v106
  %v137 = vpack.c.b16 %v109, %v108
  %v138 = vpack.c.b16 %v111, %v110
  %v139 = vpack.c.b16 %v113, %v112
  %v140 = vpack.c.b16 %v115, %v114
  %v141 = vpack.c.b16 %v117, %v116
  %v142 = vpack.c.b16 %v119, %v118
  %v143 = vpack.c.b16 %v121, %v120
  %v144 = vpack.c.b16 %v123, %v122
  %v145 = vpack.c.b16 %v125, %v124
  %v146 = vpack.c.b16 %v127, %v126
  %v147 = vpack.c.b16 %v129, %v128
  %v148 = vpack.c.b16 %v131, %v130
  %v149 = vpack.c.b16 %v133, %v132
  %166 = vmatprep.subr.bf16.mxu0 0
  %167 = vmatpush1.bf16.msra.mxu0 %v134
  %168 = vmatprep.subr.bf16.mxu0 0
  %169 = vmatpush1.bf16.msra.mxu0 %v135
  %170 = vmatprep.subr.bf16.mxu0 0
  %171 = vmatpush1.bf16.msra.mxu0 %v136
  %172 = vmatprep.subr.bf16.mxu0 0
  %173 = vmatpush1.bf16.msra.mxu0 %v137
  %174 = vmatprep.subr.bf16.mxu0 0
  %175 = vmatpush1.bf16.msra.mxu0 %v138
  %176 = vmatprep.subr.bf16.mxu0 0
  %177 = vmatpush1.bf16.msra.mxu0 %v139
  %178 = vmatprep.subr.bf16.mxu0 0
  %179 = vmatpush1.bf16.msra.mxu0 %v140
  %180 = vmatprep.subr.bf16.mxu0 0
  %181 = vmatpush1.bf16.msra.mxu0 %v141
  %182 = vmatprep.subr.bf16.mxu0 0
  %183 = vmatpush1.bf16.msra.mxu0 %v142
  %184 = vmatprep.subr.bf16.mxu0 0
  %185 = vmatpush1.bf16.msra.mxu0 %v143
  %186 = vmatprep.subr.bf16.mxu0 0
  %187 = vmatpush1.bf16.msra.mxu0 %v144
  %188 = vmatprep.subr.bf16.mxu0 0
  %189 = vmatpush1.bf16.msra.mxu0 %v145
  %190 = vmatprep.subr.bf16.mxu0 0
  %191 = vmatpush1.bf16.msra.mxu0 %v146
  %192 = vmatprep.subr.bf16.mxu0 0
  %193 = vmatpush1.bf16.msra.mxu0 %v147
  %194 = vmatprep.subr.bf16.mxu0 0
  %195 = vmatpush1.bf16.msra.mxu0 %v148
  %196 = vmatprep.subr.bf16.mxu0 0
  %197 = vmatpush1.bf16.msra.mxu0 %v149
  %198 = vmatprep.mubr.bf16.mxu0 %v67
  %199 = vmatmul.mubr.bf16.gmra.mrb[0].mxu0 %v66
  %v200 = vpop.f32.mrb[0].mxu0
  %v201 = vadd.f32 0.0, %v200
  %v202 = vpop.f32.mrb[0].mxu0
  %v203 = vpop.f32.mrb[0].mxu0
  %v204 = vadd.f32 0.0, %v203
  %v205 = vpop.f32.mrb[0].mxu0
  %206 = vdwg.mxu0
  %v207 = vadd.f32 %v26, %v201
  %v208 = vadd.f32 %v27, %v204
  %209 = vst [vmem:[#allocation2] sm:$0xff] %v207
  %210 = vst [vmem:[#allocation2 + $0x8] sm:$0xff] %v208
  // Predicated region
  $region22: #{_lambda_.22} parent=0 // pred_check
    %p211 = pneg %p18
  $region23: #{_lambda_.22} parent=0 // pred_check_branch
    %213 = sbr.rel (%p211) target = $region25
  $region24: #{_lambda_.22} parent=0 // pred_region
    %v214 = vld [vmem:[#allocation2] sm:$0xff]
    %v215 = vld [vmem:[#allocation2 + $0x8] sm:$0xff]
    %v216 = vld [vmem:[%s2] sm:$0x1]
    %v218 = vlaneseq
    %v219 = vshrl.u32 %v218, 7
    %v220 = vsub.s32 0, %v219
    %v221 = vrot.slane %v216, %v220
    %v223 = vadd.f32 %v214, %v221
    %v224 = vadd.f32 %v215, %v221
    %v225 = vld [vmem:[%s3] sm:$0xf]
    %v226 = vld [vmem:[%s3 + $0x4] sm:$0xf]
    %v227 = vunpack.c.l.bf16 %v225
    %v228 = vunpack.c.l.bf16 %v226
    %v229 = vadd.f32 %v223, %v227
    %v230 = vadd.f32 %v224, %v228
    %v231 = vpack.c.bf16 %v230, %v229
    %v233 = vunpack.c.l.b16 %v231
    %v234 = vunpack.c.h.b16 %v231
    %v235 = vpack.c.b16 %v233, %v233
    %v236 = vpack.c.b16 %v234, %v234
    %239 = vst [vmem:[%s4] sm:$0xf] %v235
    %240 = vst [vmem:[%s4 + $0x4] sm:$0xf] %v236
  $region25: #{_lambda_.22} parent=0 // pred_fallthru
    _
  // Predicated region
  $region26: #{_lambda_.22} parent=0 // pred_check
    _
  $region27: #{_lambda_.22} parent=0 // pred_check_branch
    %242 = sbr.rel (0) target = $region29
  $region28: #{_lambda_.22} parent=0 // pred_region
    _
  $region29: #{_lambda_.22} parent=0 // pred_fallthru
    _
  // Predicated region
  $region30: #{_lambda_.22} parent=0 // pred_check
    _
  $region31: #{_lambda_.22} parent=0 // pred_check_branch
    %244 = sbr.rel (0) target = $region33
  $region32: #{_lambda_.22} parent=0 // pred_region
    _
  $region33: #{_lambda_.22} parent=0 // pred_fallthru
    _

// kernel: _lambda_.20
$region0: #{_lambda_.20}
  #allocation0 [shape = 'u32[]', space=smem, size = 0x4, offset = 0x4, fixed_abs, tag = 'smem constant byte address 0x4 - core index']
  #allocation1 [shape = 'u32[144,128]{1,0:T(1,128)}', space=vmem, size = 0x12000, scoped, tag = 'internal scratch']
  #allocation2 [shape = 'f32[16,128]{1,0:T(8,128)}', space=vmem, size = 0x2000, scoped, tag = 'scratch operand']
  %s0 = inlined_call_operand.vmem [shape: bf16[16,128], index: 0, kind: input, shape index: {}]
  %s1 = inlined_call_operand.vmem [shape: bf16[128,128], index: 1, kind: input, shape index: {}]
  %s2 = inlined_call_operand.vmem [shape: f32[1,128], index: 2, kind: input, shape index: {}]
  %s3 = inlined_call_operand.vmem [shape: bf16[16,128], index: 3, kind: input, shape index: {}]
  %s4 = inlined_call_operand.vmem [shape: bf16[16,128], index: 4, kind: output, shape index: {}]
  %s5 = sld [smem:[#allocation0]]
  $region34: #{_lambda_.20} parent=0
    _
  %s7 = ssub.s32 1, %s5
  %s8 = scalar_select 0, %s7, %s5
  // Predicated region
  $region2: #{_lambda_.20} parent=0 // pred_check
    _
  $region3: #{_lambda_.20} parent=0 // pred_check_branch
    %10 = sbr.rel (0) target = $region5
  $region4: #{_lambda_.20} parent=0 // pred_region
    _
  $region5: #{_lambda_.20} parent=0 // pred_fallthru
    _
  // Predicated region
  $region6: #{_lambda_.20} parent=0 // pred_check
    _
  $region7: #{_lambda_.20} parent=0 // pred_check_branch
    %12 = sbr.rel (0) target = $region9
  $region8: #{_lambda_.20} parent=0 // pred_region
    _
  $region9: #{_lambda_.20} parent=0 // pred_fallthru
    _
  // Predicated region
  $region10: #{_lambda_.20} parent=0 // pred_check
    _
  $region11: #{_lambda_.20} parent=0 // pred_check_branch
    %14 = sbr.rel (0) target = $region13
  $region12: #{_lambda_.20} parent=0 // pred_region
    _
  $region13: #{_lambda_.20} parent=0 // pred_fallthru
    _
  // Predicated region
  $region14: #{_lambda_.20} parent=0 // pred_check
    _
  $region15: #{_lambda_.20} parent=0 // pred_check_branch
    %16 = sbr.rel (0) target = $region17
  $region16: #{_lambda_.20} parent=0 // pred_region
    _
  $region17: #{_lambda_.20} parent=0 // pred_fallthru
    _
  %p18 = scmp.eq.s32.totalorder 0, 0
  // Predicated region
  $region18: #{_lambda_.20} parent=0 // pred_check
    %p19 = pneg %p18
  $region19: #{_lambda_.20} parent=0 // pred_check_branch
    %21 = sbr.rel (%p19) target = $region21
  $region20: #{_lambda_.20} parent=0 // pred_region
    %22 = vst [vmem:[#allocation2] sm:$0xff] 0.0
    %23 = vst [vmem:[#allocation2 + $0x8] sm:$0xff] 0.0
  $region21: #{_lambda_.20} parent=0 // pred_fallthru
    _
  %v24 = vld [vmem:[%s0] sm:$0xf]
  %v25 = vld [vmem:[%s0 + $0x4] sm:$0xf]
  %v26 = vld [vmem:[#allocation2] sm:$0xff]
  %v27 = vld [vmem:[#allocation2 + $0x8] sm:$0xff]
  %v28 = vld [vmem:[%s1] sm:$0xf]
  %v29 = vld [vmem:[%s1 + $0x4] sm:$0xf]
  %v30 = vld [vmem:[%s1 + $0x8] sm:$0xf]
  %v31 = vld [vmem:[%s1 + $0xc] sm:$0xf]
  %v32 = vld [vmem:[%s1 + $0x10] sm:$0xf]
  %v33 = vld [vmem:[%s1 + $0x14] sm:$0xf]
  %v34 = vld [vmem:[%s1 + $0x18] sm:$0xf]
  %v35 = vld [vmem:[%s1 + $0x1c] sm:$0xf]
  %v36 = vld [vmem:[%s1 + $0x20] sm:$0xf]
  %v37 = vld [vmem:[%s1 + $0x24] sm:$0xf]
  %v38 = vld [vmem:[%s1 + $0x28] sm:$0xf]
  %v39 = vld [vmem:[%s1 + $0x2c] sm:$0xf]
  %v40 = vld [vmem:[%s1 + $0x30] sm:$0xf]
  %v41 = vld [vmem:[%s1 + $0x34] sm:$0xf]
  %v42 = vld [vmem:[%s1 + $0x38] sm:$0xf]
  %v43 = vld [vmem:[%s1 + $0x3c] sm:$0xf]
  %v46 = vunpack.c.l.b16 %v24
  %v47 = vunpack.c.l.b16 %v25
  %v48 = vpack.c.b16 %v47, %v46
  %v66 = vunpack.c.l.b16 %v28
  %v67 = vunpack.c.l.b16 %v29
  %v68 = vunpack.c.l.b16 %v30
  %v69 = vunpack.c.l.b16 %v31
  %v70 = vunpack.c.l.b16 %v32
  %v71 = vunpack.c.l.b16 %v33
  %v72 = vunpack.c.l.b16 %v34
  %v73 = vunpack.c.l.b16 %v35
  %v74 = vunpack.c.l.b16 %v36
  %v75 = vunpack.c.l.b16 %v37
  %v76 = vunpack.c.l.b16 %v38
  %v77 = vunpack.c.l.b16 %v39
  %v78 = vunpack.c.l.b16 %v40
  %v79 = vunpack.c.l.b16 %v41
  %v80 = vunpack.c.l.b16 %v42
  %v81 = vunpack.c.l.b16 %v43
  %v82 = vpack.c.b16 %v67, %v66
  %v83 = vpack.c.b16 %v69, %v68
  %v84 = vpack.c.b16 %v71, %v70
  %v85 = vpack.c.b16 %v73, %v72
  %v86 = vpack.c.b16 %v75, %v74
  %v87 = vpack.c.b16 %v77, %v76
  %v88 = vpack.c.b16 %v79, %v78
  %v89 = vpack.c.b16 %v81, %v80
  %98 = vmatprep.subr.bf16.mxu0 0
  %99 = vmatpush1.bf16.msra.mxu0 %v82
  %100 = vmatprep.subr.bf16.mxu0 0
  %101 = vmatpush1.bf16.msra.mxu0 %v83
  %102 = vmatprep.subr.bf16.mxu0 0
  %103 = vmatpush1.bf16.msra.mxu0 %v84
  %104 = vmatprep.subr.bf16.mxu0 0
  %105 = vmatpush1.bf16.msra.mxu0 %v85
  %106 = vmatprep.subr.bf16.mxu0 0
  %107 = vmatpush1.bf16.msra.mxu0 %v86
  %108 = vmatprep.subr.bf16.mxu0 0
  %109 = vmatpush1.bf16.msra.mxu0 %v87
  %110 = vmatprep.subr.bf16.mxu0 0
  %111 = vmatpush1.bf16.msra.mxu0 %v88
  %112 = vmatprep.subr.bf16.mxu0 0
  %113 = vmatpush1.bf16.msra.mxu0 %v89
  %114 = vmatprep.subr.bf16.mxu0 0
  %115 = vmatpush1.bf16.msra.mxu0 0
  %116 = vmatprep.subr.bf16.mxu0 0
  %117 = vmatpush1.bf16.msra.mxu0 0
  %118 = vmatprep.subr.bf16.mxu0 0
  %119 = vmatpush1.bf16.msra.mxu0 0
  %120 = vmatprep.subr.bf16.mxu0 0
  %121 = vmatpush1.bf16.msra.mxu0 0
  %122 = vmatprep.subr.bf16.mxu0 0
  %123 = vmatpush1.bf16.msra.mxu0 0
  %124 = vmatprep.subr.bf16.mxu0 0
  %125 = vmatpush1.bf16.msra.mxu0 0
  %126 = vmatprep.subr.bf16.mxu0 0
  %127 = vmatpush1.bf16.msra.mxu0 0
  %128 = vmatprep.subr.bf16.mxu0 0
  %129 = vmatpush1.bf16.msra.mxu0 0
  %130 = vmatprep.mubr.bf16.mxu0 0
  %131 = vmatmul.mubr.bf16.gmra.mrb[0].mxu0 %v48
  %v132 = vpop.f32.mrb[0].mxu0
  %v133 = vadd.f32 0.0, %v132
  %v134 = vpop.f32.mrb[0].mxu0
  %v135 = vpop.f32.mrb[0].mxu0
  %v136 = vadd.f32 0.0, %v135
  %v137 = vpop.f32.mrb[0].mxu0
  %138 = vdwg.mxu0
  %v139 = vadd.f32 %v26, %v133
  %v140 = vadd.f32 %v27, %v136
  %141 = vst [vmem:[#allocation2] sm:$0xff] %v139
  %142 = vst [vmem:[#allocation2 + $0x8] sm:$0xff] %v140
  // Predicated region
  $region22: #{_lambda_.20} parent=0 // pred_check
    %p143 = pneg %p18
  $region23: #{_lambda_.20} parent=0 // pred_check_branch
    %145 = sbr.rel (%p143) target = $region25
  $region24: #{_lambda_.20} parent=0 // pred_region
    %v146 = vld [vmem:[#allocation2] sm:$0xff]
    %v147 = vld [vmem:[#allocation2 + $0x8] sm:$0xff]
    %v148 = vld [vmem:[%s2] sm:$0x1]
    %v150 = vlaneseq
    %v151 = vshrl.u32 %v150, 7
    %v152 = vsub.s32 0, %v151
    %v153 = vrot.slane %v148, %v152
    %v155 = vadd.f32 %v146, %v153
    %v156 = vadd.f32 %v147, %v153
    %v157 = vld [vmem:[%s3] sm:$0xf]
    %v158 = vld [vmem:[%s3 + $0x4] sm:$0xf]
    %v159 = vunpack.c.l.bf16 %v157
    %v160 = vunpack.c.l.bf16 %v158
    %v161 = vadd.f32 %v155, %v159
    %v162 = vadd.f32 %v156, %v160
    %v163 = vpack.c.bf16 %v162, %v161
    %v165 = vunpack.c.l.b16 %v163
    %v166 = vunpack.c.h.b16 %v163
    %v167 = vpack.c.b16 %v165, %v165
    %v168 = vpack.c.b16 %v166, %v166
    %171 = vst [vmem:[%s4] sm:$0xf] %v167
    %172 = vst [vmem:[%s4 + $0x4] sm:$0xf] %v168
  $region25: #{_lambda_.20} parent=0 // pred_fallthru
    _
  // Predicated region
  $region26: #{_lambda_.20} parent=0 // pred_check
    _
  $region27: #{_lambda_.20} parent=0 // pred_check_branch
    %174 = sbr.rel (0) target = $region29
  $region28: #{_lambda_.20} parent=0 // pred_region
    _
  $region29: #{_lambda_.20} parent=0 // pred_fallthru
    _
  // Predicated region
  $region30: #{_lambda_.20} parent=0 // pred_check
    _
  $region31: #{_lambda_.20} parent=0 // pred_check_branch
    %176 = sbr.rel (0) target = $region33
  $region32: #{_lambda_.20} parent=0 // pred_region
    _
  $region33: #{_lambda_.20} parent=0 // pred_fallthru
    _

// kernel: _lambda_.19
$region0: #{_lambda_.19}
  #allocation0 [shape = 'u32[]', space=smem, size = 0x4, offset = 0x4, fixed_abs, tag = 'smem constant byte address 0x4 - core index']
  #allocation1 [shape = 'u32[144,128]{1,0:T(1,128)}', space=vmem, size = 0x12000, scoped, tag = 'internal scratch']
  #allocation2 [shape = 'f32[8,128]{1,0:T(8,128)}', space=vmem, size = 0x1000, scoped, tag = 'scratch operand']
  %s0 = inlined_call_operand.vmem [shape: bf16[2,8,384], index: 0, kind: input, shape index: {}, may-alias: {0,1,2}]
  %s1 = inlined_call_operand.vmem [shape: bf16[2,8,384], index: 1, kind: input, shape index: {}, may-alias: {0,1,2}]
  %s2 = inlined_call_operand.vmem [shape: bf16[2,8,384], index: 2, kind: input, shape index: {}, may-alias: {0,1,2}]
  %s3 = inlined_call_operand.vmem [shape: bf16[2,8,128], index: 3, kind: output, shape index: {}]
  %s4 = sld [smem:[#allocation0]]
  $region45: #{_lambda_.19} parent=0
    _
  %s6 = ssub.s32 1, %s4
  %s7 = scalar_select 0, %s6, %s4
  loop: start=0, step=1, limit=4
  $region2: #{_lambda_.19} parent=0 // loop_pre_header
    _
  $region3: #{_lambda_.19} parent=0 // loop_header
    %s9 = sphi 0, %s13
    %p10 = scmp.ge.s32.totalorder %s9, 4
    %s16 = sphi 0, %s28
    %s17 = sphi 0, %s24
    %s18 = sphi 0, %s16
    %s19 = sphi 0, %s17
    %s20 = sphi 0, %s18
    %s21 = sphi 0, %s19
    %s33 = sphi 0, %s35
    %s36 = sphi 0, %s33
    %s37 = sphi 0, %s36
    %s53 = sphi 0, %s37
    %s59 = sphi 0, %s61
    %s62 = sphi 0, %s59
    %s63 = sphi 0, %s62
    %s79 = sphi 0, %s63
    %s85 = sphi 0, %s87
    %s88 = sphi 0, %s85
    %s89 = sphi 0, %s88
    %s105 = sphi 0, %s89
    %s113 = sphi 0, %s115
    %s116 = sphi 0, %s113
    %s117 = sphi 0, %s116
    %s133 = sphi 0, %s117
  $region4: #{_lambda_.19} parent=0 // loop_header_branch
    %12 = sbr.rel (%p10) target = $region8
  $region5: #{_lambda_.19} parent=0 // loop_body
    %s14 = ssub.s32 %s9, 1
    %s15 = ssub.s32 %s9, 2
    %s22 = sadd.s32 1, %s17
    %p23 = scmp.ge.s32.totalorder %s22, 1
    %s24 = scalar_select %p23, 0, %s22
    %s25 = sadd.s32 1, %s16
    %s26 = scalar_select %p23, %s25, %s16
    %p27 = scmp.ge.s32.totalorder %s26, 2
    %s28 = scalar_select %p27, 0, %s26
    %s29 = ssub.s32 %s16, %s28
    %s30 = ssub.s32 %s17, %s24
    %s31 = sor.u32 %s29, %s30
    %p32 = scmp.eq.s32.totalorder %s31, 0
    %s34 = sadd.s32 %s33, 1
    %s35 = scalar_select %p32, %s33, %s34
    %p38 = pneg %p32
    %p39 = scmp.eq.s32.totalorder %s9, 1
    %p40 = por %p38, %p39
    %p41 = scmp.ne.s32.totalorder %s33, %s36
    %p42 = scmp.eq.s32.totalorder %s9, 0
    %p43 = por %p41, %p42
    %p44 = scmp.ne.s32.totalorder %s33, %s36
    %p45 = scmp.eq.s32.totalorder %s14, 1
    %p46 = por %p44, %p45
    %p47 = scmp.ne.s32.totalorder %s36, %s37
    %p48 = scmp.eq.s32.totalorder %s14, 0
    %p49 = por %p47, %p48
    %p50 = scmp.ne.s32.totalorder %s36, %s37
    %p51 = scmp.eq.s32.totalorder %s15, 1
    %p52 = por %p50, %p51
    %p54 = scmp.ne.s32.totalorder %s37, %s53
    %p55 = scmp.eq.s32.totalorder %s15, 0
    %p56 = por %p54, %p55
    %s57 = ssub.s32 %s16, %s28
    %p58 = scmp.eq.s32.totalorder %s57, 0
    %s60 = sadd.s32 %s59, 1
    %s61 = scalar_select %p58, %s59, %s60
    %p64 = pneg %p58
    %p65 = scmp.eq.s32.totalorder %s9, 1
    %p66 = por %p64, %p65
    %p67 = scmp.ne.s32.totalorder %s59, %s62
    %p68 = scmp.eq.s32.totalorder %s9, 0
    %p69 = por %p67, %p68
    %p70 = scmp.ne.s32.totalorder %s59, %s62
    %p71 = scmp.eq.s32.totalorder %s14, 1
    %p72 = por %p70, %p71
    %p73 = scmp.ne.s32.totalorder %s62, %s63
    %p74 = scmp.eq.s32.totalorder %s14, 0
    %p75 = por %p73, %p74
    %p76 = scmp.ne.s32.totalorder %s62, %s63
    %p77 = scmp.eq.s32.totalorder %s15, 1
    %p78 = por %p76, %p77
    %p80 = scmp.ne.s32.totalorder %s63, %s79
    %p81 = scmp.eq.s32.totalorder %s15, 0
    %p82 = por %p80, %p81
    %s83 = ssub.s32 %s16, %s28
    %p84 = scmp.eq.s32.totalorder %s83, 0
    %s86 = sadd.s32 %s85, 1
    %s87 = scalar_select %p84, %s85, %s86
    %p90 = pneg %p84
    %p91 = scmp.eq.s32.totalorder %s9, 1
    %p92 = por %p90, %p91
    %p93 = scmp.ne.s32.totalorder %s85, %s88
    %p94 = scmp.eq.s32.totalorder %s9, 0
    %p95 = por %p93, %p94
    %p96 = scmp.ne.s32.totalorder %s85, %s88
    %p97 = scmp.eq.s32.totalorder %s14, 1
    %p98 = por %p96, %p97
    %p99 = scmp.ne.s32.totalorder %s88, %s89
    %p100 = scmp.eq.s32.totalorder %s14, 0
    %p101 = por %p99, %p100
    %p102 = scmp.ne.s32.totalorder %s88, %s89
    %p103 = scmp.eq.s32.totalorder %s15, 1
    %p104 = por %p102, %p103
    %p106 = scmp.ne.s32.totalorder %s89, %s105
    %p107 = scmp.eq.s32.totalorder %s15, 0
    %p108 = por %p106, %p107
    %s109 = ssub.s32 %s16, %s28
    %s110 = ssub.s32 %s17, %s24
    %s111 = sor.u32 %s109, %s110
    %p112 = scmp.eq.s32.totalorder %s111, 0
    %s114 = sadd.s32 %s113, 1
    %s115 = scalar_select %p112, %s113, %s114
    %p118 = pneg %p112
    %p119 = scmp.eq.s32.totalorder %s9, 1
    %p120 = por %p118, %p119
    %p121 = scmp.ne.s32.totalorder %s113, %s116
    %p122 = scmp.eq.s32.totalorder %s9, 0
    %p123 = por %p121, %p122
    %p124 = scmp.ne.s32.totalorder %s113, %s116
    %p125 = scmp.eq.s32.totalorder %s14, 1
    %p126 = por %p124, %p125
    %p127 = scmp.ne.s32.totalorder %s116, %s117
    %p128 = scmp.eq.s32.totalorder %s14, 0
    %p129 = por %p127, %p128
    %p130 = scmp.ne.s32.totalorder %s116, %s117
    %p131 = scmp.eq.s32.totalorder %s15, 1
    %p132 = por %p130, %p131
    %p134 = scmp.ne.s32.totalorder %s117, %s133
    %p135 = scmp.eq.s32.totalorder %s15, 0
    %p136 = por %p134, %p135
    %p137 = scmp.le.s32.totalorder 1, %s9
    %p138 = scmp.lt.s32.totalorder %s9, 3
    %p139 = pnand %p137, %p138
    %p140 = pneg %p139
    // Predicated region
    $region9: #{_lambda_.19} parent=5 // pred_check
      _
    $region10: #{_lambda_.19} parent=5 // pred_check_branch
      %142 = sbr.rel (%p139) target = $region12
    $region11: #{_lambda_.19} parent=5 // pred_region
      %s143 = ssub.s32 %s9, 1
    $region12: #{_lambda_.19} parent=5 // pred_fallthru
      _
    %p144 = scmp.lt.s32.totalorder %s9, 2
    // Predicated region
    $region13: #{_lambda_.19} parent=5 // pred_check
      %p145 = pneg %p144
    $region14: #{_lambda_.19} parent=5 // pred_check_branch
      %147 = sbr.rel (%p145) target = $region16
    $region15: #{_lambda_.19} parent=5 // pred_region
      // Predicated region
      $region17: #{_lambda_.19} parent=15 // pred_check
        %p148 = pneg %p43
      $region18: #{_lambda_.19} parent=15 // pred_check_branch
        %150 = sbr.rel (%p148) target = $region20
      $region19: #{_lambda_.19} parent=15 // pred_region
        %p151 = scmp.lt.s32.totalorder %s16, 1
        %s152 = scalar_select %p151, %s16, 1
        %p153 = scmp.lt.s32.totalorder %s17, 0
        %s154 = scalar_select %p153, %s17, 0
        %s155 = smul.addr %s154, 3
        %s156 = smul.addr %s152, 3
        %s157 = sadd.s32 %s155, %s156
        %s158 = smul.addr %s157, 4
        %s159 = scalar_lea.vmem %s0, %s158
      $region20: #{_lambda_.19} parent=15 // pred_fallthru
        _
      // Predicated region
      $region21: #{_lambda_.19} parent=15 // pred_check
        %p160 = pneg %p69
      $region22: #{_lambda_.19} parent=15 // pred_check_branch
        %162 = sbr.rel (%p160) target = $region24
      $region23: #{_lambda_.19} parent=15 // pred_region
        %p163 = scmp.lt.s32.totalorder %s16, 1
        %s164 = scalar_select %p163, %s16, 1
        %s165 = smul.addr %s164, 3
        %s166 = sadd.s32 1, %s165
        %s167 = smul.addr %s166, 4
        %s168 = scalar_lea.vmem %s1, %s167
      $region24: #{_lambda_.19} parent=15 // pred_fallthru
        _
      // Predicated region
      $region25: #{_lambda_.19} parent=15 // pred_check
        %p169 = pneg %p95
      $region26: #{_lambda_.19} parent=15 // pred_check_branch
        %171 = sbr.rel (%p169) target = $region28
      $region27: #{_lambda_.19} parent=15 // pred_region
        %p172 = scmp.lt.s32.totalorder %s16, 1
        %s173 = scalar_select %p172, %s16, 1
        %s174 = smul.addr %s173, 3
        %s175 = sadd.s32 2, %s174
        %s176 = smul.addr %s175, 4
        %s177 = scalar_lea.vmem %s2, %s176
      $region28: #{_lambda_.19} parent=15 // pred_fallthru
        _
    $region16: #{_lambda_.19} parent=5 // pred_fallthru
      _
    %p178 = scmp.le.s32.totalorder 1, %s9
    %p179 = scmp.lt.s32.totalorder %s9, 3
    %p180 = pnand %p178, %p179
    %p181 = pneg %p180
    // Predicated region
    $region29: #{_lambda_.19} parent=5 // pred_check
      _
    $region30: #{_lambda_.19} parent=5 // pred_check_branch
      %183 = sbr.rel (%p180) target = $region32
    $region31: #{_lambda_.19} parent=5 // pred_region
      %s184 = ssub.s32 %s9, 1
      %p185 = scmp.lt.s32.totalorder %s18, 1
      %s186 = scalar_select %p185, %s18, 1
      %p187 = scmp.lt.s32.totalorder %s19, 0
      %s188 = scalar_select %p187, %s19, 0
      %s189 = smul.addr %s188, 3
      %s190 = smul.addr %s186, 3
      %s191 = sadd.s32 %s189, %s190
      %s192 = smul.addr %s191, 4
      %s193 = scalar_lea.vmem %s0, %s192
      %p194 = pneg %p49
      %p195 = pneg %p46
      %p196 = scmp.lt.s32.totalorder %s18, 1
      %s197 = scalar_select %p196, %s18, 1
      %s198 = smul.addr %s197, 3
      %s199 = sadd.s32 1, %s198
      %s200 = smul.addr %s199, 4
      %s201 = scalar_lea.vmem %s1, %s200
      %p202 = pneg %p75
      %p203 = pneg %p72
      %p204 = scmp.lt.s32.totalorder %s18, 1
      %s205 = scalar_select %p204, %s18, 1
      %s206 = smul.addr %s205, 3
      %s207 = sadd.s32 2, %s206
      %s208 = smul.addr %s207, 4
      %s209 = scalar_lea.vmem %s2, %s208
      %p210 = pneg %p101
      %p211 = pneg %p98
      %p212 = pneg %p129
      %p213 = pneg %p126
      %p214 = scmp.lt.s32.totalorder %s18, 1
      %s215 = scalar_select %p214, %s18, 1
      %p216 = scmp.lt.s32.totalorder %s19, 0
      %s217 = scalar_select %p216, %s19, 0
      %s218 = sadd.s32 %s217, %s215
      %s219 = smul.addr %s218, 4
      %s220 = scalar_lea.vmem %s3, %s219
      %p221 = scmp.lt.s32.totalorder %s18, 1
      %s222 = scalar_select %p221, %s18, 1
      %p223 = scmp.lt.s32.totalorder %s19, 0
      %s224 = scalar_select %p223, %s19, 0
      %s225 = smul.addr %s224, 3
      %s226 = smul.addr %s222, 3
      %s227 = sadd.s32 %s225, %s226
      %s228 = smul.addr %s227, 4
      %s229 = scalar_lea.vmem %s0, %s228
      %p230 = scmp.lt.s32.totalorder %s18, 1
      %s231 = scalar_select %p230, %s18, 1
      %s232 = smul.addr %s231, 3
      %s233 = sadd.s32 1, %s232
      %s234 = smul.addr %s233, 4
      %s235 = scalar_lea.vmem %s1, %s234
      %p236 = scmp.lt.s32.totalorder %s18, 1
      %s237 = scalar_select %p236, %s18, 1
      %s238 = smul.addr %s237, 3
      %s239 = sadd.s32 2, %s238
      %s240 = smul.addr %s239, 4
      %s241 = scalar_lea.vmem %s2, %s240
      %p242 = scmp.lt.s32.totalorder %s18, 1
      %s243 = scalar_select %p242, %s18, 1
      %p244 = scmp.lt.s32.totalorder %s19, 0
      %s245 = scalar_select %p244, %s19, 0
      %s246 = sadd.s32 %s245, %s243
      %s247 = smul.addr %s246, 4
      %s248 = scalar_lea.vmem %s3, %s247
      %v251 = vld [vmem:[%s229] sm:$0xf]
      %v252 = vmul.bf16 %v251, 1040203264
      %v253 = vld [vmem:[%s235] sm:$0xf]
      %v254 = vld [vmem:[%s241] sm:$0xf]
      %vm255 = vcmask 523264
      %v257 = vsel %vm255, %v252, 0
      %v260 = vsel %vm255, %v253, 0
      %262 = vmatprep.subr.bf16.mxu0 0
      %263 = vmatpush1.bf16.xpose.msra.mxu0 %v260
      %264 = vmatprep.subr.bf16.mxu0 0
      %265 = vmatpush1.bf16.xpose.msra.mxu0 0
      %266 = vmatprep.subr.bf16.mxu0 0
      %267 = vmatpush1.bf16.xpose.msra.mxu0 0
      %268 = vmatprep.subr.bf16.mxu0 0
      %269 = vmatpush1.bf16.xpose.msra.mxu0 0
      %270 = vmatprep.subr.bf16.mxu0 0
      %271 = vmatpush1.bf16.xpose.msra.mxu0 0
      %272 = vmatprep.subr.bf16.mxu0 0
      %273 = vmatpush1.bf16.xpose.msra.mxu0 0
      %274 = vmatprep.subr.bf16.mxu0 0
      %275 = vmatpush1.bf16.xpose.msra.mxu0 0
      %276 = vmatprep.subr.bf16.mxu0 0
      %277 = vmatpush1.bf16.xpose.msra.mxu0 0
      %278 = vmatprep.subr.bf16.mxu0 0
      %279 = vmatpush1.bf16.xpose.msra.mxu0 0
      %280 = vmatprep.subr.bf16.mxu0 0
      %281 = vmatpush1.bf16.xpose.msra.mxu0 0
      %282 = vmatprep.subr.bf16.mxu0 0
      %283 = vmatpush1.bf16.xpose.msra.mxu0 0
      %284 = vmatprep.subr.bf16.mxu0 0
      %285 = vmatpush1.bf16.xpose.msra.mxu0 0
      %286 = vmatprep.subr.bf16.mxu0 0
      %287 = vmatpush1.bf16.xpose.msra.mxu0 0
      %288 = vmatprep.subr.bf16.mxu0 0
      %289 = vmatpush1.bf16.xpose.msra.mxu0 0
      %290 = vmatprep.subr.bf16.mxu0 0
      %291 = vmatpush1.bf16.xpose.msra.mxu0 0
      %292 = vmatprep.subr.bf16.mxu0 0
      %293 = vmatpush1.bf16.xpose.msra.mxu0 0
      %294 = vmatprep.mubr.bf16.mxu0 0
      %295 = vmatmul.mubr.bf16.gmra.mrb[0].mxu0 %v257
      %v296 = vpop.f32.mrb[0].mxu0
      %v297 = vadd.f32 0.0, %v296
      %v298 = vpop.f32.mrb[0].mxu0
      %v299 = vpop.f32.mrb[0].mxu0
      %v300 = vpop.f32.mrb[0].mxu0
      %301 = vdwg.mxu0
      %vm302 = vcmask 64512
      %v303 = vsel %vm302, %v297, -inf
      %304 = vmax.xlane.f32.xlu0 %v303
      %v305 = vpop.xlane.xlu0 %304
      %v306 = vsub.f32 %v297, %v305
      %v307 = vmul.f32 %v306, 1.442695
      %v308 = vpow.pop %v307
      %v309 = vsel %vm302, %v308, 0.0
      %310 = vadd.xlane.f32.xlu0 %v309
      %v311 = vpop.xlane.xlu0 %310
      %v312 = vrcp.pop %v311
      %v313 = vmul.f32 %v308, %v312
      %v314 = vpack.c.bf16 %v313, %v313
      %v316 = vsel %vm302, %v314, 0
      %vm318 = vcmask 1043456
      %v320 = vsel %vm318, %v254, 0
      %322 = vmatprep.subr.bf16.mxu0 0
      %323 = vmatpush1.bf16.msra.mxu0 %v320
      %324 = vmatprep.subr.bf16.mxu0 0
      %325 = vmatpush1.bf16.msra.mxu0 0
      %326 = vmatprep.subr.bf16.mxu0 0
      %327 = vmatpush1.bf16.msra.mxu0 0
      %328 = vmatprep.subr.bf16.mxu0 0
      %329 = vmatpush1.bf16.msra.mxu0 0
      %330 = vmatprep.subr.bf16.mxu0 0
      %331 = vmatpush1.bf16.msra.mxu0 0
      %332 = vmatprep.subr.bf16.mxu0 0
      %333 = vmatpush1.bf16.msra.mxu0 0
      %334 = vmatprep.subr.bf16.mxu0 0
      %335 = vmatpush1.bf16.msra.mxu0 0
      %336 = vmatprep.subr.bf16.mxu0 0
      %337 = vmatpush1.bf16.msra.mxu0 0
      %338 = vmatprep.subr.bf16.mxu0 0
      %339 = vmatpush1.bf16.msra.mxu0 0
      %340 = vmatprep.subr.bf16.mxu0 0
      %341 = vmatpush1.bf16.msra.mxu0 0
      %342 = vmatprep.subr.bf16.mxu0 0
      %343 = vmatpush1.bf16.msra.mxu0 0
      %344 = vmatprep.subr.bf16.mxu0 0
      %345 = vmatpush1.bf16.msra.mxu0 0
      %346 = vmatprep.subr.bf16.mxu0 0
      %347 = vmatpush1.bf16.msra.mxu0 0
      %348 = vmatprep.subr.bf16.mxu0 0
      %349 = vmatpush1.bf16.msra.mxu0 0
      %350 = vmatprep.subr.bf16.mxu0 0
      %351 = vmatpush1.bf16.msra.mxu0 0
      %352 = vmatprep.subr.bf16.mxu0 0
      %353 = vmatpush1.bf16.msra.mxu0 0
      %354 = vmatprep.mubr.bf16.mxu0 0
      %355 = vmatmul.mubr.bf16.gmra.mrb[0].mxu0 %v316
      %v356 = vpop.f32.mrb[0].mxu0
      %v357 = vadd.f32 0.0, %v356
      %v358 = vpop.f32.mrb[0].mxu0
      %v359 = vpop.f32.mrb[0].mxu0
      %v360 = vpop.f32.mrb[0].mxu0
      %361 = vdwg.mxu0
      %362 = vst.msk [vmem:[#allocation2] sm:$0xff] %vm255, %v357
      %v364 = vunpack.c.l.b16 %v252
      %v365 = vpack.c.b16 %v364, %v364
      %366 = vrot.lane.b32.xlu0 %v365, 64
      %v367 = vpop.permute.xlu0 %366
      %v369 = vunpack.c.l.b16 %v253
      %v370 = vpack.c.b16 %v369, %v369
      %371 = vrot.lane.b32.xlu0 %v370, 64
      %v372 = vpop.permute.xlu0 %371
      %v374 = vsel %vm255, %v367, 0
      %v377 = vsel %vm255, %v372, 0
      %379 = vmatprep.subr.bf16.mxu0 0
      %380 = vmatpush1.bf16.xpose.msra.mxu0 %v377
      %381 = vmatprep.subr.bf16.mxu0 0
      %382 = vmatpush1.bf16.xpose.msra.mxu0 0
      %383 = vmatprep.subr.bf16.mxu0 0
      %384 = vmatpush1.bf16.xpose.msra.mxu0 0
      %385 = vmatprep.subr.bf16.mxu0 0
      %386 = vmatpush1.bf16.xpose.msra.mxu0 0
      %387 = vmatprep.subr.bf16.mxu0 0
      %388 = vmatpush1.bf16.xpose.msra.mxu0 0
      %389 = vmatprep.subr.bf16.mxu0 0
      %390 = vmatpush1.bf16.xpose.msra.mxu0 0
      %391 = vmatprep.subr.bf16.mxu0 0
      %392 = vmatpush1.bf16.xpose.msra.mxu0 0
      %393 = vmatprep.subr.bf16.mxu0 0
      %394 = vmatpush1.bf16.xpose.msra.mxu0 0
      %395 = vmatprep.subr.bf16.mxu0 0
      %396 = vmatpush1.bf16.xpose.msra.mxu0 0
      %397 = vmatprep.subr.bf16.mxu0 0
      %398 = vmatpush1.bf16.xpose.msra.mxu0 0
      %399 = vmatprep.subr.bf16.mxu0 0
      %400 = vmatpush1.bf16.xpose.msra.mxu0 0
      %401 = vmatprep.subr.bf16.mxu0 0
      %402 = vmatpush1.bf16.xpose.msra.mxu0 0
      %403 = vmatprep.subr.bf16.mxu0 0
      %404 = vmatpush1.bf16.xpose.msra.mxu0 0
      %405 = vmatprep.subr.bf16.mxu0 0
      %406 = vmatpush1.bf16.xpose.msra.mxu0 0
      %407 = vmatprep.subr.bf16.mxu0 0
      %408 = vmatpush1.bf16.xpose.msra.mxu0 0
      %409 = vmatprep.subr.bf16.mxu0 0
      %410 = vmatpush1.bf16.xpose.msra.mxu0 0
      %411 = vmatprep.mubr.bf16.mxu0 0
      %412 = vmatmul.mubr.bf16.gmra.mrb[0].mxu0 %v374
      %v413 = vpop.f32.mrb[0].mxu0
      %v414 = vadd.f32 0.0, %v413
      %v415 = vpop.f32.mrb[0].mxu0
      %v416 = vpop.f32.mrb[0].mxu0
      %v417 = vpop.f32.mrb[0].mxu0
      %418 = vdwg.mxu0
      %v419 = vsel %vm302, %v414, -inf
      %420 = vmax.xlane.f32.xlu0 %v419
      %v421 = vpop.xlane.xlu0 %420
      %v422 = vsub.f32 %v414, %v421
      %v423 = vmul.f32 %v422, 1.442695
      %v424 = vpow.pop %v423
      %v425 = vsel %vm302, %v424, 0.0
      %426 = vadd.xlane.f32.xlu0 %v425
      %v427 = vpop.xlane.xlu0 %426
      %v428 = vrcp.pop %v427
      %v429 = vmul.f32 %v424, %v428
      %v430 = vpack.c.bf16 %v429, %v429
      %v432 = vunpack.c.l.b16 %v254
      %v433 = vpack.c.b16 %v432, %v432
      %434 = vrot.lane.b32.xlu0 %v433, 64
      %v435 = vpop.permute.xlu0 %434
      %v437 = vsel %vm302, %v430, 0
      %v440 = vsel %vm318, %v435, 0
      %442 = vmatprep.subr.bf16.mxu0 0
      %443 = vmatpush1.bf16.msra.mxu0 %v440
      %444 = vmatprep.subr.bf16.mxu0 0
      %445 = vmatpush1.bf16.msra.mxu0 0
      %446 = vmatprep.subr.bf16.mxu0 0
      %447 = vmatpush1.bf16.msra.mxu0 0
      %448 = vmatprep.subr.bf16.mxu0 0
      %449 = vmatpush1.bf16.msra.mxu0 0
      %450 = vmatprep.subr.bf16.mxu0 0
      %451 = vmatpush1.bf16.msra.mxu0 0
      %452 = vmatprep.subr.bf16.mxu0 0
      %453 = vmatpush1.bf16.msra.mxu0 0
      %454 = vmatprep.subr.bf16.mxu0 0
      %455 = vmatpush1.bf16.msra.mxu0 0
      %456 = vmatprep.subr.bf16.mxu0 0
      %457 = vmatpush1.bf16.msra.mxu0 0
      %458 = vmatprep.subr.bf16.mxu0 0
      %459 = vmatpush1.bf16.msra.mxu0 0
      %460 = vmatprep.subr.bf16.mxu0 0
      %461 = vmatpush1.bf16.msra.mxu0 0
      %462 = vmatprep.subr.bf16.mxu0 0
      %463 = vmatpush1.bf16.msra.mxu0 0
      %464 = vmatprep.subr.bf16.mxu0 0
      %465 = vmatpush1.bf16.msra.mxu0 0
      %466 = vmatprep.subr.bf16.mxu0 0
      %467 = vmatpush1.bf16.msra.mxu0 0
      %468 = vmatprep.subr.bf16.mxu0 0
      %469 = vmatpush1.bf16.msra.mxu0 0
      %470 = vmatprep.subr.bf16.mxu0 0
      %471 = vmatpush1.bf16.msra.mxu0 0
      %472 = vmatprep.subr.bf16.mxu0 0
      %473 = vmatpush1.bf16.msra.mxu0 0
      %474 = vmatprep.mubr.bf16.mxu0 0
      %475 = vmatmul.mubr.bf16.gmra.mrb[0].mxu0 %v437
      %v476 = vpop.f32.mrb[0].mxu0
      %v477 = vadd.f32 0.0, %v476
      %v478 = vpop.f32.mrb[0].mxu0
      %v479 = vpop.f32.mrb[0].mxu0
      %v480 = vpop.f32.mrb[0].mxu0
      %481 = vdwg.mxu0
      %483 = vrot.lane.b32.xlu0 %v477, 64
      %v484 = vpop.permute.xlu0 %483
      %vm486 = vcmask 1048064
      %487 = vst.msk [vmem:[#allocation2] sm:$0xff] %vm486, %v484
      %v488 = vld [vmem:[#allocation2] sm:$0xff]
      %v489 = vpack.c.bf16 %v488, %v488
      %490 = vst [vmem:[%s248] sm:$0xf] %v489
      %p491 = scmp.lt.s32.totalorder %s18, 1
      %s492 = scalar_select %p491, %s18, 1
      %p493 = scmp.lt.s32.totalorder %s19, 0
      %s494 = scalar_select %p493, %s19, 0
      %s495 = sadd.s32 %s494, %s492
      %s496 = smul.addr %s495, 4
      %s497 = scalar_lea.vmem %s3, %s496
      // Predicated region
      $region33: #{_lambda_.19} parent=31 // pred_check
        %p498 = pneg %p126
      $region34: #{_lambda_.19} parent=31 // pred_check_branch
        %500 = sbr.rel (%p498) target = $region36
      $region35: #{_lambda_.19} parent=31 // pred_region
        _
      $region36: #{_lambda_.19} parent=31 // pred_fallthru
        _
    $region32: #{_lambda_.19} parent=5 // pred_fallthru
      _
    %p501 = scmp.le.s32.totalorder 2, %s9
    // Predicated region
    $region37: #{_lambda_.19} parent=5 // pred_check
      %p502 = pneg %p501
    $region38: #{_lambda_.19} parent=5 // pred_check_branch
      %504 = sbr.rel (%p502) target = $region40
    $region39: #{_lambda_.19} parent=5 // pred_region
      %s505 = ssub.s32 %s9, 2
      // Predicated region
      $region41: #{_lambda_.19} parent=39 // pred_check
        %p506 = pneg %p132
      $region42: #{_lambda_.19} parent=39 // pred_check_branch
        %508 = sbr.rel (%p506) target = $region44
      $region43: #{_lambda_.19} parent=39 // pred_region
        %p509 = scmp.lt.s32.totalorder %s20, 1
        %s510 = scalar_select %p509, %s20, 1
        %p511 = scmp.lt.s32.totalorder %s21, 0
        %s512 = scalar_select %p511, %s21, 0
        %s513 = sadd.s32 %s512, %s510
        %s514 = smul.addr %s513, 4
        %s515 = scalar_lea.vmem %s3, %s514
      $region44: #{_lambda_.19} parent=39 // pred_fallthru
        _
    $region40: #{_lambda_.19} parent=5 // pred_fallthru
      _
  $region6: #{_lambda_.19} parent=0 // loop_footer
    %s13 = sadd.s32 1, %s9
  $region7: #{_lambda_.19} parent=0 // loop_footer_branch
    %8 = sbr.rel target = $region3
  $region8: #{_lambda_.19} parent=0 // loop_exit
    _

// kernel: _lambda_.28
$region0: #{_lambda_.28}
  #allocation0 [shape = 'u32[]', space=smem, size = 0x4, offset = 0x4, fixed_abs, tag = 'smem constant byte address 0x4 - core index']
  #allocation1 [shape = 'u32[144,128]{1,0:T(1,128)}', space=vmem, size = 0x12000, scoped, tag = 'internal scratch']
  #allocation2 [shape = 'f32[16,128]{1,0:T(8,128)}', space=vmem, size = 0x2000, scoped, tag = 'scratch operand']
  %s0 = inlined_call_operand.vmem [shape: bf16[16,128], index: 0, kind: input, shape index: {}]
  %s1 = inlined_call_operand.vmem [shape: bf16[128,128], index: 1, kind: input, shape index: {}]
  %s2 = inlined_call_operand.vmem [shape: f32[1,128], index: 2, kind: input, shape index: {}]
  %s3 = inlined_call_operand.vmem [shape: bf16[16,128], index: 3, kind: output, shape index: {}]
  %s4 = sld [smem:[#allocation0]]
  $region30: #{_lambda_.28} parent=0
    _
  %s6 = ssub.s32 1, %s4
  %s7 = scalar_select 0, %s6, %s4
  // Predicated region
  $region2: #{_lambda_.28} parent=0 // pred_check
    _
  $region3: #{_lambda_.28} parent=0 // pred_check_branch
    %9 = sbr.rel (0) target = $region5
  $region4: #{_lambda_.28} parent=0 // pred_region
    _
  $region5: #{_lambda_.28} parent=0 // pred_fallthru
    _
  // Predicated region
  $region6: #{_lambda_.28} parent=0 // pred_check
    _
  $region7: #{_lambda_.28} parent=0 // pred_check_branch
    %11 = sbr.rel (0) target = $region9
  $region8: #{_lambda_.28} parent=0 // pred_region
    _
  $region9: #{_lambda_.28} parent=0 // pred_fallthru
    _
  // Predicated region
  $region10: #{_lambda_.28} parent=0 // pred_check
    _
  $region11: #{_lambda_.28} parent=0 // pred_check_branch
    %13 = sbr.rel (0) target = $region13
  $region12: #{_lambda_.28} parent=0 // pred_region
    _
  $region13: #{_lambda_.28} parent=0 // pred_fallthru
    _
  %p15 = scmp.eq.s32.totalorder 0, 0
  // Predicated region
  $region14: #{_lambda_.28} parent=0 // pred_check
    %p16 = pneg %p15
  $region15: #{_lambda_.28} parent=0 // pred_check_branch
    %18 = sbr.rel (%p16) target = $region17
  $region16: #{_lambda_.28} parent=0 // pred_region
    %19 = vst [vmem:[#allocation2] sm:$0xff] 0.0
    %20 = vst [vmem:[#allocation2 + $0x8] sm:$0xff] 0.0
  $region17: #{_lambda_.28} parent=0 // pred_fallthru
    _
  %v21 = vld [vmem:[%s0] sm:$0xf]
  %v22 = vld [vmem:[%s0 + $0x4] sm:$0xf]
  %v23 = vld [vmem:[#allocation2] sm:$0xff]
  %v24 = vld [vmem:[#allocation2 + $0x8] sm:$0xff]
  %v25 = vld [vmem:[%s1] sm:$0xf]
  %v26 = vld [vmem:[%s1 + $0x4] sm:$0xf]
  %v27 = vld [vmem:[%s1 + $0x8] sm:$0xf]
  %v28 = vld [vmem:[%s1 + $0xc] sm:$0xf]
  %v29 = vld [vmem:[%s1 + $0x10] sm:$0xf]
  %v30 = vld [vmem:[%s1 + $0x14] sm:$0xf]
  %v31 = vld [vmem:[%s1 + $0x18] sm:$0xf]
  %v32 = vld [vmem:[%s1 + $0x1c] sm:$0xf]
  %v33 = vld [vmem:[%s1 + $0x20] sm:$0xf]
  %v34 = vld [vmem:[%s1 + $0x24] sm:$0xf]
  %v35 = vld [vmem:[%s1 + $0x28] sm:$0xf]
  %v36 = vld [vmem:[%s1 + $0x2c] sm:$0xf]
  %v37 = vld [vmem:[%s1 + $0x30] sm:$0xf]
  %v38 = vld [vmem:[%s1 + $0x34] sm:$0xf]
  %v39 = vld [vmem:[%s1 + $0x38] sm:$0xf]
  %v40 = vld [vmem:[%s1 + $0x3c] sm:$0xf]
  %v43 = vunpack.c.l.b16 %v21
  %v44 = vunpack.c.l.b16 %v22
  %v45 = vpack.c.b16 %v44, %v43
  %v63 = vunpack.c.l.b16 %v25
  %v64 = vunpack.c.l.b16 %v26
  %v65 = vunpack.c.l.b16 %v27
  %v66 = vunpack.c.l.b16 %v28
  %v67 = vunpack.c.l.b16 %v29
  %v68 = vunpack.c.l.b16 %v30
  %v69 = vunpack.c.l.b16 %v31
  %v70 = vunpack.c.l.b16 %v32
  %v71 = vunpack.c.l.b16 %v33
  %v72 = vunpack.c.l.b16 %v34
  %v73 = vunpack.c.l.b16 %v35
  %v74 = vunpack.c.l.b16 %v36
  %v75 = vunpack.c.l.b16 %v37
  %v76 = vunpack.c.l.b16 %v38
  %v77 = vunpack.c.l.b16 %v39
  %v78 = vunpack.c.l.b16 %v40
  %v79 = vpack.c.b16 %v64, %v63
  %v80 = vpack.c.b16 %v66, %v65
  %v81 = vpack.c.b16 %v68, %v67
  %v82 = vpack.c.b16 %v70, %v69
  %v83 = vpack.c.b16 %v72, %v71
  %v84 = vpack.c.b16 %v74, %v73
  %v85 = vpack.c.b16 %v76, %v75
  %v86 = vpack.c.b16 %v78, %v77
  %95 = vmatprep.subr.bf16.mxu0 0
  %96 = vmatpush1.bf16.msra.mxu0 %v79
  %97 = vmatprep.subr.bf16.mxu0 0
  %98 = vmatpush1.bf16.msra.mxu0 %v80
  %99 = vmatprep.subr.bf16.mxu0 0
  %100 = vmatpush1.bf16.msra.mxu0 %v81
  %101 = vmatprep.subr.bf16.mxu0 0
  %102 = vmatpush1.bf16.msra.mxu0 %v82
  %103 = vmatprep.subr.bf16.mxu0 0
  %104 = vmatpush1.bf16.msra.mxu0 %v83
  %105 = vmatprep.subr.bf16.mxu0 0
  %106 = vmatpush1.bf16.msra.mxu0 %v84
  %107 = vmatprep.subr.bf16.mxu0 0
  %108 = vmatpush1.bf16.msra.mxu0 %v85
  %109 = vmatprep.subr.bf16.mxu0 0
  %110 = vmatpush1.bf16.msra.mxu0 %v86
  %111 = vmatprep.subr.bf16.mxu0 0
  %112 = vmatpush1.bf16.msra.mxu0 0
  %113 = vmatprep.subr.bf16.mxu0 0
  %114 = vmatpush1.bf16.msra.mxu0 0
  %115 = vmatprep.subr.bf16.mxu0 0
  %116 = vmatpush1.bf16.msra.mxu0 0
  %117 = vmatprep.subr.bf16.mxu0 0
  %118 = vmatpush1.bf16.msra.mxu0 0
  %119 = vmatprep.subr.bf16.mxu0 0
  %120 = vmatpush1.bf16.msra.mxu0 0
  %121 = vmatprep.subr.bf16.mxu0 0
  %122 = vmatpush1.bf16.msra.mxu0 0
  %123 = vmatprep.subr.bf16.mxu0 0
  %124 = vmatpush1.bf16.msra.mxu0 0
  %125 = vmatprep.subr.bf16.mxu0 0
  %126 = vmatpush1.bf16.msra.mxu0 0
  %127 = vmatprep.mubr.bf16.mxu0 0
  %128 = vmatmul.mubr.bf16.gmra.mrb[0].mxu0 %v45
  %v129 = vpop.f32.mrb[0].mxu0
  %v130 = vadd.f32 0.0, %v129
  %v131 = vpop.f32.mrb[0].mxu0
  %v132 = vpop.f32.mrb[0].mxu0
  %v133 = vadd.f32 0.0, %v132
  %v134 = vpop.f32.mrb[0].mxu0
  %135 = vdwg.mxu0
  %v136 = vadd.f32 %v23, %v130
  %v137 = vadd.f32 %v24, %v133
  %138 = vst [vmem:[#allocation2] sm:$0xff] %v136
  %139 = vst [vmem:[#allocation2 + $0x8] sm:$0xff] %v137
  // Predicated region
  $region18: #{_lambda_.28} parent=0 // pred_check
    %p140 = pneg %p15
  $region19: #{_lambda_.28} parent=0 // pred_check_branch
    %142 = sbr.rel (%p140) target = $region21
  $region20: #{_lambda_.28} parent=0 // pred_region
    %v143 = vld [vmem:[#allocation2] sm:$0xff]
    %v144 = vld [vmem:[#allocation2 + $0x8] sm:$0xff]
    %v145 = vld [vmem:[%s2] sm:$0x1]
    %v147 = vlaneseq
    %v148 = vshrl.u32 %v147, 7
    %v149 = vsub.s32 0, %v148
    %v150 = vrot.slane %v145, %v149
    %v152 = vadd.f32 %v143, %v150
    %v153 = vadd.f32 %v144, %v150
    %v154 = vpack.c.bf16 %v153, %v152
    %v156 = vunpack.c.l.b16 %v154
    %v157 = vunpack.c.h.b16 %v154
    %v158 = vpack.c.b16 %v156, %v156
    %v159 = vpack.c.b16 %v157, %v157
    %162 = vst [vmem:[%s3] sm:$0xf] %v158
    %163 = vst [vmem:[%s3 + $0x4] sm:$0xf] %v159
  $region21: #{_lambda_.28} parent=0 // pred_fallthru
    _
  // Predicated region
  $region22: #{_lambda_.28} parent=0 // pred_check
    _
  $region23: #{_lambda_.28} parent=0 // pred_check_branch
    %165 = sbr.rel (0) target = $region25
  $region24: #{_lambda_.28} parent=0 // pred_region
    _
  $region25: #{_lambda_.28} parent=0 // pred_fallthru
    _
  // Predicated region
  $region26: #{_lambda_.28} parent=0 // pred_check
    _
  $region27: #{_lambda_.28} parent=0 // pred_check_branch
    %167 = sbr.rel (0) target = $region29
  $region28: #{_lambda_.28} parent=0 // pred_region
    _
  $region29: #{_lambda_.28} parent=0 // pred_fallthru
    _

// kernel: _lambda_.29
$region0: #{_lambda_.29}
  #allocation0 [shape = 'u32[]', space=smem, size = 0x4, offset = 0x4, fixed_abs, tag = 'smem constant byte address 0x4 - core index']
  #allocation1 [shape = 'u32[144,128]{1,0:T(1,128)}', space=vmem, size = 0x12000, scoped, tag = 'internal scratch']
  %s0 = inlined_call_operand.vmem [shape: bf16[2,8,128], index: 0, kind: input, shape index: {}]
  %s1 = inlined_call_operand.vmem [shape: bf16[128,128], index: 1, kind: input, shape index: {}]
  %s2 = inlined_call_operand.hbm [shape: bf16[2,8,128], index: 2, kind: output, shape index: {0}]
  %s3 = inlined_call_operand.hbm [shape: f32[2,8,128], index: 3, kind: output, shape index: {1}]
  %4 = xla_tuple %s2, %s3
  %s5 = sld [smem:[#allocation0]]
  $region49: #{_lambda_.29} parent=0
    _
  %s7 = ssub.s32 1, %s5
  %s8 = scalar_select 0, %s7, %s5
  $region1: #{_lambda_.29} parent=0
    #allocation2 [shape = 'u8[4096]{0}', space=vmem, size = 0x1000, scoped, tag = 'output window, operand 0']
    #allocation3 [shape = 's32[2]{0}', space=sflag, size = 0x8, scoped, tag = 'scoped memory for _lambda_.29']
    #allocation4 [shape = 'u8[8192]{0}', space=vmem, size = 0x2000, scoped, tag = 'output window, operand 1']
    #allocation5 [shape = 's32[2]{0}', space=sflag, size = 0x8, scoped, tag = 'scoped memory for _lambda_.29']
    %9 = vsyncpa [#allocation3], 0
    %s10 = scalar_lea.sflag [#allocation3], 1
    %11 = vsyncpa %s10, 0
    %12 = vsyncpa [#allocation5], 0
    %s13 = scalar_lea.sflag [#allocation5], 1
    %14 = vsyncpa %s13, 0
    loop: start=0, step=1, limit=4
    $region2: #{_lambda_.29} parent=1 // loop_pre_header
      _
    $region3: #{_lambda_.29} parent=1 // loop_header
      %s16 = sphi 0, %s20
      %p17 = scmp.ge.s32.totalorder %s16, 4
      %s23 = sphi 0, %s35
      %s24 = sphi 0, %s31
      %s25 = sphi 0, %s23
      %s26 = sphi 0, %s24
      %s27 = sphi 0, %s25
      %s28 = sphi 0, %s26
      %s38 = sphi 0, %s40
      %s41 = sphi 0, %s38
      %s42 = sphi 0, %s41
      %s58 = sphi 0, %s42
      %s64 = sphi 0, %s66
      %s67 = sphi 0, %s64
      %s68 = sphi 0, %s67
      %s84 = sphi 0, %s68
      %s92 = sphi 0, %s94
      %s95 = sphi 0, %s92
      %s96 = sphi 0, %s95
      %s112 = sphi 0, %s96
      %s120 = sphi 0, %s122
      %s123 = sphi 0, %s120
      %s124 = sphi 0, %s123
      %s140 = sphi 0, %s124
    $region4: #{_lambda_.29} parent=1 // loop_header_branch
      %19 = sbr.rel (%p17) target = $region8
    $region5: #{_lambda_.29} parent=1 // loop_body
      %s21 = ssub.s32 %s16, 1
      %s22 = ssub.s32 %s16, 2
      %s29 = sadd.s32 1, %s24
      %p30 = scmp.ge.s32.totalorder %s29, 1
      %s31 = scalar_select %p30, 0, %s29
      %s32 = sadd.s32 1, %s23
      %s33 = scalar_select %p30, %s32, %s23
      %p34 = scmp.ge.s32.totalorder %s33, 2
      %s35 = scalar_select %p34, 0, %s33
      %s36 = ssub.s32 %s23, %s35
      %p37 = scmp.eq.s32.totalorder %s36, 0
      %s39 = sadd.s32 %s38, 1
      %s40 = scalar_select %p37, %s38, %s39
      %p43 = pneg %p37
      %p44 = scmp.eq.s32.totalorder %s16, 1
      %p45 = por %p43, %p44
      %p46 = scmp.ne.s32.totalorder %s38, %s41
      %p47 = scmp.eq.s32.totalorder %s16, 0
      %p48 = por %p46, %p47
      %p49 = scmp.ne.s32.totalorder %s38, %s41
      %p50 = scmp.eq.s32.totalorder %s21, 1
      %p51 = por %p49, %p50
      %p52 = scmp.ne.s32.totalorder %s41, %s42
      %p53 = scmp.eq.s32.totalorder %s21, 0
      %p54 = por %p52, %p53
      %p55 = scmp.ne.s32.totalorder %s41, %s42
      %p56 = scmp.eq.s32.totalorder %s22, 1
      %p57 = por %p55, %p56
      %p59 = scmp.ne.s32.totalorder %s42, %s58
      %p60 = scmp.eq.s32.totalorder %s22, 0
      %p61 = por %p59, %p60
      %s62 = ssub.s32 %s24, %s31
      %p63 = scmp.eq.s32.totalorder %s62, 0
      %s65 = sadd.s32 %s64, 1
      %s66 = scalar_select %p63, %s64, %s65
      %p69 = pneg %p63
      %p70 = scmp.eq.s32.totalorder %s16, 1
      %p71 = por %p69, %p70
      %p72 = scmp.ne.s32.totalorder %s64, %s67
      %p73 = scmp.eq.s32.totalorder %s16, 0
      %p74 = por %p72, %p73
      %p75 = scmp.ne.s32.totalorder %s64, %s67
      %p76 = scmp.eq.s32.totalorder %s21, 1
      %p77 = por %p75, %p76
      %p78 = scmp.ne.s32.totalorder %s67, %s68
      %p79 = scmp.eq.s32.totalorder %s21, 0
      %p80 = por %p78, %p79
      %p81 = scmp.ne.s32.totalorder %s67, %s68
      %p82 = scmp.eq.s32.totalorder %s22, 1
      %p83 = por %p81, %p82
      %p85 = scmp.ne.s32.totalorder %s68, %s84
      %p86 = scmp.eq.s32.totalorder %s22, 0
      %p87 = por %p85, %p86
      %s88 = ssub.s32 %s23, %s35
      %s89 = ssub.s32 %s24, %s31
      %s90 = sor.u32 %s88, %s89
      %p91 = scmp.eq.s32.totalorder %s90, 0
      %s93 = sadd.s32 %s92, 1
      %s94 = scalar_select %p91, %s92, %s93
      %p97 = pneg %p91
      %p98 = scmp.eq.s32.totalorder %s16, 1
      %p99 = por %p97, %p98
      %p100 = scmp.ne.s32.totalorder %s92, %s95
      %p101 = scmp.eq.s32.totalorder %s16, 0
      %p102 = por %p100, %p101
      %p103 = scmp.ne.s32.totalorder %s92, %s95
      %p104 = scmp.eq.s32.totalorder %s21, 1
      %p105 = por %p103, %p104
      %p106 = scmp.ne.s32.totalorder %s95, %s96
      %p107 = scmp.eq.s32.totalorder %s21, 0
      %p108 = por %p106, %p107
      %p109 = scmp.ne.s32.totalorder %s95, %s96
      %p110 = scmp.eq.s32.totalorder %s22, 1
      %p111 = por %p109, %p110
      %p113 = scmp.ne.s32.totalorder %s96, %s112
      %p114 = scmp.eq.s32.totalorder %s22, 0
      %p115 = por %p113, %p114
      %s116 = ssub.s32 %s23, %s35
      %s117 = ssub.s32 %s24, %s31
      %s118 = sor.u32 %s116, %s117
      %p119 = scmp.eq.s32.totalorder %s118, 0
      %s121 = sadd.s32 %s120, 1
      %s122 = scalar_select %p119, %s120, %s121
      %p125 = pneg %p119
      %p126 = scmp.eq.s32.totalorder %s16, 1
      %p127 = por %p125, %p126
      %p128 = scmp.ne.s32.totalorder %s120, %s123
      %p129 = scmp.eq.s32.totalorder %s16, 0
      %p130 = por %p128, %p129
      %p131 = scmp.ne.s32.totalorder %s120, %s123
      %p132 = scmp.eq.s32.totalorder %s21, 1
      %p133 = por %p131, %p132
      %p134 = scmp.ne.s32.totalorder %s123, %s124
      %p135 = scmp.eq.s32.totalorder %s21, 0
      %p136 = por %p134, %p135
      %p137 = scmp.ne.s32.totalorder %s123, %s124
      %p138 = scmp.eq.s32.totalorder %s22, 1
      %p139 = por %p137, %p138
      %p141 = scmp.ne.s32.totalorder %s124, %s140
      %p142 = scmp.eq.s32.totalorder %s22, 0
      %p143 = por %p141, %p142
      %p144 = scmp.le.s32.totalorder 1, %s16
      %p145 = scmp.lt.s32.totalorder %s16, 3
      %p146 = pnand %p144, %p145
      %p147 = pneg %p146
      // Predicated region
      $region9: #{_lambda_.29} parent=5 // pred_check
        _
      $region10: #{_lambda_.29} parent=5 // pred_check_branch
        %149 = sbr.rel (%p146) target = $region12
      $region11: #{_lambda_.29} parent=5 // pred_region
        %s150 = ssub.s32 %s16, 1
        // Predicated region
        $region13: #{_lambda_.29} parent=11 // pred_check
          %p151 = pneg %p80
        $region14: #{_lambda_.29} parent=11 // pred_check_branch
          %153 = sbr.rel (%p151) target = $region16
        $region15: #{_lambda_.29} parent=11 // pred_region
          %p154 = scmp.lt.s32.totalorder %s26, 0
          %s155 = scalar_select %p154, %s26, 0
          %s156 = smul.addr %s155, 4
          %s157 = scalar_lea.vmem %s1, %s156
        $region16: #{_lambda_.29} parent=11 // pred_fallthru
          _
      $region12: #{_lambda_.29} parent=5 // pred_fallthru
        _
      %p158 = scmp.lt.s32.totalorder %s16, 2
      // Predicated region
      $region17: #{_lambda_.29} parent=5 // pred_check
        %p159 = pneg %p158
      $region18: #{_lambda_.29} parent=5 // pred_check_branch
        %161 = sbr.rel (%p159) target = $region20
      $region19: #{_lambda_.29} parent=5 // pred_region
        // Predicated region
        $region21: #{_lambda_.29} parent=19 // pred_check
          %p162 = pneg %p48
        $region22: #{_lambda_.29} parent=19 // pred_check_branch
          %164 = sbr.rel (%p162) target = $region24
        $region23: #{_lambda_.29} parent=19 // pred_region
          %p165 = scmp.lt.s32.totalorder %s23, 1
          %s166 = scalar_select %p165, %s23, 1
          %s167 = smul.addr %s166, 4
          %s168 = scalar_lea.vmem %s0, %s167
        $region24: #{_lambda_.29} parent=19 // pred_fallthru
          _
      $region20: #{_lambda_.29} parent=5 // pred_fallthru
        _
      %p169 = scmp.le.s32.totalorder 1, %s16
      %p170 = scmp.lt.s32.totalorder %s16, 3
      %p171 = pnand %p169, %p170
      %p172 = pneg %p171
      // Predicated region
      $region25: #{_lambda_.29} parent=5 // pred_check
        _
      $region26: #{_lambda_.29} parent=5 // pred_check_branch
        %174 = sbr.rel (%p171) target = $region28
      $region27: #{_lambda_.29} parent=5 // pred_region
        %s175 = ssub.s32 %s16, 1
        %p176 = scmp.lt.s32.totalorder %s25, 1
        %s177 = scalar_select %p176, %s25, 1
        %s178 = smul.addr %s177, 4
        %s179 = scalar_lea.vmem %s0, %s178
        %p180 = pneg %p54
        %p181 = pneg %p51
        %p182 = scmp.lt.s32.totalorder %s26, 0
        %s183 = scalar_select %p182, %s26, 0
        %s184 = smul.addr %s183, 4
        %s185 = scalar_lea.vmem %s1, %s184
        %p186 = pneg %p80
        %p187 = pneg %p77
        %p188 = pneg %p108
        %p189 = pneg %p105
        %s190 = sand.u32 %s95, 1
        %s191 = scalar_lea.sflag [#allocation3], %s190
        %s192 = sand.u32 %s95, 1
        %s193 = smul.addr %s192, 4
        %s194 = scalar_lea.vmem [#allocation2], %s193
        %p195 = pneg %p136
        %p196 = pneg %p133
        %s197 = sand.u32 %s123, 1
        %s198 = scalar_lea.sflag [#allocation5], %s197
        %s199 = sand.u32 %s123, 1
        %s200 = smul.addr %s199, 8
        %s201 = scalar_lea.vmem [#allocation4], %s200
        %p202 = scmp.lt.s32.totalorder %s25, 1
        %s203 = scalar_select %p202, %s25, 1
        %s204 = smul.addr %s203, 4
        %s205 = scalar_lea.vmem %s0, %s204
        %p206 = scmp.lt.s32.totalorder %s26, 0
        %s207 = scalar_select %p206, %s26, 0
        %s208 = smul.addr %s207, 4
        %s209 = scalar_lea.vmem %s1, %s208
        %v211 = vld [vmem:[%s205] sm:$0xf]
        %v212 = vunpack.c.l.bf16 %v211
        %v213 = vmul.f32 %v212, %v212
        %v214 = vrot.slane %v213, 4
        %v215 = vadd.f32 %v213, %v214
        %v216 = vrot.slane %v215, 2
        %v217 = vadd.f32 %v215, %v216
        %v218 = vrot.slane %v217, 1
        %v219 = vadd.f32 %v217, %v218
        %v220 = vrsqrt.pop %v219
        %v221 = vmul.f32 %v219, %v220
        %vm222 = vcmp.eq.f32.partialorder %v219, inf
        %v223 = vsel %vm222, %v219, %v221
        %vm224 = vcmp.eq.f32.partialorder %v219, 0.0
        %v225 = vand.u32 %v219, 2147483648
        %v226 = vsel %vm224, %v225, %v223
        %v227 = vmax.f32 %v226, 1e-12
        %v228 = vrcp.pop %v227
        %v229 = vmul.f32 %v212, %v228
        %v230 = vpack.c.bf16 %v229, %v229
        %v231 = vld [vmem:[%s209] sm:$0xf]
        %v232 = vld [vmem:[%s209 + $0x4] sm:$0xf]
        %v233 = vld [vmem:[%s209 + $0x8] sm:$0xf]
        %v234 = vld [vmem:[%s209 + $0xc] sm:$0xf]
        %v235 = vld [vmem:[%s209 + $0x10] sm:$0xf]
        %v236 = vld [vmem:[%s209 + $0x14] sm:$0xf]
        %v237 = vld [vmem:[%s209 + $0x18] sm:$0xf]
        %v238 = vld [vmem:[%s209 + $0x1c] sm:$0xf]
        %v239 = vld [vmem:[%s209 + $0x20] sm:$0xf]
        %v240 = vld [vmem:[%s209 + $0x24] sm:$0xf]
        %v241 = vld [vmem:[%s209 + $0x28] sm:$0xf]
        %v242 = vld [vmem:[%s209 + $0x2c] sm:$0xf]
        %v243 = vld [vmem:[%s209 + $0x30] sm:$0xf]
        %v244 = vld [vmem:[%s209 + $0x34] sm:$0xf]
        %v245 = vld [vmem:[%s209 + $0x38] sm:$0xf]
        %v246 = vld [vmem:[%s209 + $0x3c] sm:$0xf]
        %v263 = vunpack.c.l.b16 %v231
        %v264 = vunpack.c.l.b16 %v232
        %v265 = vunpack.c.l.b16 %v233
        %v266 = vunpack.c.l.b16 %v234
        %v267 = vunpack.c.l.b16 %v235
        %v268 = vunpack.c.l.b16 %v236
        %v269 = vunpack.c.l.b16 %v237
        %v270 = vunpack.c.l.b16 %v238
        %v271 = vunpack.c.l.b16 %v239
        %v272 = vunpack.c.l.b16 %v240
        %v273 = vunpack.c.l.b16 %v241
        %v274 = vunpack.c.l.b16 %v242
        %v275 = vunpack.c.l.b16 %v243
        %v276 = vunpack.c.l.b16 %v244
        %v277 = vunpack.c.l.b16 %v245
        %v278 = vunpack.c.l.b16 %v246
        %v279 = vpack.c.b16 %v264, %v263
        %v280 = vpack.c.b16 %v266, %v265
        %v281 = vpack.c.b16 %v268, %v267
        %v282 = vpack.c.b16 %v270, %v269
        %v283 = vpack.c.b16 %v272, %v271
        %v284 = vpack.c.b16 %v274, %v273
        %v285 = vpack.c.b16 %v276, %v275
        %v286 = vpack.c.b16 %v278, %v277
        %295 = vmatprep.subr.bf16.mxu0 0
        %296 = vmatpush1.bf16.msra.mxu0 %v279
        %297 = vmatprep.subr.bf16.mxu0 0
        %298 = vmatpush1.bf16.msra.mxu0 %v280
        %299 = vmatprep.subr.bf16.mxu0 0
        %300 = vmatpush1.bf16.msra.mxu0 %v281
        %301 = vmatprep.subr.bf16.mxu0 0
        %302 = vmatpush1.bf16.msra.mxu0 %v282
        %303 = vmatprep.subr.bf16.mxu0 0
        %304 = vmatpush1.bf16.msra.mxu0 %v283
        %305 = vmatprep.subr.bf16.mxu0 0
        %306 = vmatpush1.bf16.msra.mxu0 %v284
        %307 = vmatprep.subr.bf16.mxu0 0
        %308 = vmatpush1.bf16.msra.mxu0 %v285
        %309 = vmatprep.subr.bf16.mxu0 0
        %310 = vmatpush1.bf16.msra.mxu0 %v286
        %311 = vmatprep.subr.bf16.mxu0 0
        %312 = vmatpush1.bf16.msra.mxu0 0
        %313 = vmatprep.subr.bf16.mxu0 0
        %314 = vmatpush1.bf16.msra.mxu0 0
        %315 = vmatprep.subr.bf16.mxu0 0
        %316 = vmatpush1.bf16.msra.mxu0 0
        %317 = vmatprep.subr.bf16.mxu0 0
        %318 = vmatpush1.bf16.msra.mxu0 0
        %319 = vmatprep.subr.bf16.mxu0 0
        %320 = vmatpush1.bf16.msra.mxu0 0
        %321 = vmatprep.subr.bf16.mxu0 0
        %322 = vmatpush1.bf16.msra.mxu0 0
        %323 = vmatprep.subr.bf16.mxu0 0
        %324 = vmatpush1.bf16.msra.mxu0 0
        %325 = vmatprep.subr.bf16.mxu0 0
        %326 = vmatpush1.bf16.msra.mxu0 0
        %327 = vmatprep.mubr.bf16.mxu0 0
        %328 = vmatmul.mubr.bf16.gmra.mrb[0].mxu0 %v230
        %v329 = vpop.f32.mrb[0].mxu0
        %v330 = vadd.f32 0.0, %v329
        %v331 = vpop.f32.mrb[0].mxu0
        %v332 = vpop.f32.mrb[0].mxu0
        %v333 = vpop.f32.mrb[0].mxu0
        %334 = vdwg.mxu0
        %v335 = vpack.c.bf16 %v330, %v330
        %336 = vst [vmem:[%s194] sm:$0xf] %v335
        %v337 = vmul.f32 %v330, 10.0
        %v338 = vrot.slane %v337, 4
        %v339 = vmax.f32 %v337, %v338
        %v340 = vrot.slane %v339, 2
        %v341 = vmax.f32 %v339, %v340
        %v342 = vrot.slane %v341, 1
        %v343 = vmax.f32 %v341, %v342
        %v344 = vsub.f32 %v337, %v343
        %v345 = vmul.f32 %v344, 1.442695
        %v346 = vpow.pop %v345
        %v347 = vrot.slane %v346, 4
        %v348 = vadd.f32 %v346, %v347
        %v349 = vrot.slane %v348, 2
        %v350 = vadd.f32 %v348, %v349
        %v351 = vrot.slane %v350, 1
        %v352 = vadd.f32 %v350, %v351
        %v353 = vrcp.pop %v352
        %v354 = vmul.f32 %v346, %v353
        %355 = vst [vmem:[%s201] sm:$0xff] %v354
        %s356 = sand.u32 %s95, 1
        %s357 = scalar_lea.sflag [#allocation3], %s356
        %s358 = sand.u32 %s95, 1
        %s359 = smul.addr %s358, 4
        %s360 = scalar_lea.vmem [#allocation2], %s359
        %s361 = sand.u32 %s123, 1
        %s362 = scalar_lea.sflag [#allocation5], %s361
        %s363 = sand.u32 %s123, 1
        %s364 = smul.addr %s363, 8
        %s365 = scalar_lea.vmem [#allocation4], %s364
        // Predicated region
        $region29: #{_lambda_.29} parent=27 // pred_check
          %p366 = pneg %p105
        $region30: #{_lambda_.29} parent=27 // pred_check_branch
          %368 = sbr.rel (%p366) target = $region32
        $region31: #{_lambda_.29} parent=27 // pred_region
          %s370 = ssub.s32 64, 64
          %371 = vsyncadd %s357, %s370
          %s372 = sadd.s32 %s26, %s25
          %s373 = smul.addr %s372, 64
          %s374 = scalar_lea.hbm %s2, %s373
          %s376 = sshll.u32 %s360, 4
          %s377 = int_to_ptr.vmem [resolvable:$true] %s376
          %379 = dma.vmem_to_hbm [thread:$0]  %s377, 64, %s374, %s357
        $region32: #{_lambda_.29} parent=27 // pred_fallthru
          _
        // Predicated region
        $region33: #{_lambda_.29} parent=27 // pred_check
          %p380 = pneg %p133
        $region34: #{_lambda_.29} parent=27 // pred_check_branch
          %382 = sbr.rel (%p380) target = $region36
        $region35: #{_lambda_.29} parent=27 // pred_region
          %s384 = ssub.s32 128, 128
          %385 = vsyncadd %s362, %s384
          %s386 = sadd.s32 %s26, %s25
          %s387 = smul.addr %s386, 128
          %s388 = scalar_lea.hbm %s3, %s387
          %s390 = sshll.u32 %s365, 4
          %s391 = int_to_ptr.vmem [resolvable:$true] %s390
          %393 = dma.vmem_to_hbm [thread:$0]  %s391, 128, %s388, %s362
        $region36: #{_lambda_.29} parent=27 // pred_fallthru
          _
      $region28: #{_lambda_.29} parent=5 // pred_fallthru
        _
      %p394 = scmp.le.s32.totalorder 2, %s16
      // Predicated region
      $region37: #{_lambda_.29} parent=5 // pred_check
        %p395 = pneg %p394
      $region38: #{_lambda_.29} parent=5 // pred_check_branch
        %397 = sbr.rel (%p395) target = $region40
      $region39: #{_lambda_.29} parent=5 // pred_region
        %s398 = ssub.s32 %s16, 2
        // Predicated region
        $region41: #{_lambda_.29} parent=39 // pred_check
          %p399 = pneg %p111
        $region42: #{_lambda_.29} parent=39 // pred_check_branch
          %401 = sbr.rel (%p399) target = $region44
        $region43: #{_lambda_.29} parent=39 // pred_region
          %s402 = sand.u32 %s96, 1
          %s403 = scalar_lea.sflag [#allocation3], %s402
          %s404 = sand.u32 %s96, 1
          %s405 = smul.addr %s404, 4
          %s406 = scalar_lea.vmem [#allocation2], %s405
          %407 = dma.done %s403, 64
        $region44: #{_lambda_.29} parent=39 // pred_fallthru
          _
        // Predicated region
        $region45: #{_lambda_.29} parent=39 // pred_check
          %p408 = pneg %p139
        $region46: #{_lambda_.29} parent=39 // pred_check_branch
          %410 = sbr.rel (%p408) target = $region48
        $region47: #{_lambda_.29} parent=39 // pred_region
          %s411 = sand.u32 %s124, 1
          %s412 = scalar_lea.sflag [#allocation5], %s411
          %s413 = sand.u32 %s124, 1
          %s414 = smul.addr %s413, 8
          %s415 = scalar_lea.vmem [#allocation4], %s414
          %416 = dma.done %s412, 128
        $region48: #{_lambda_.29} parent=39 // pred_fallthru
          _
      $region40: #{_lambda_.29} parent=5 // pred_fallthru
        _
    $region6: #{_lambda_.29} parent=1 // loop_footer
      %s20 = sadd.s32 1, %s16
    $region7: #{_lambda_.29} parent=1 // loop_footer_branch
      %15 = sbr.rel target = $region3
    $region8: #{_lambda_.29} parent=1 // loop_exit
      _
    %417 = vsyncpa [#allocation3], 1
    %s418 = scalar_lea.sflag [#allocation3], 1
    %419 = vsyncpa %s418, 1
    %420 = vsyncpa [#allocation5], 1
    %s421 = scalar_lea.sflag [#allocation5], 1
    %422 = vsyncpa %s421, 1

</llo_original>
